<compile_context>
chip_gen: v7x
topology: tpu7x:2x2x1
jax: 0.10.0
libtpu: 0.0.40
codegen_flags: <defaults>
</compile_context>

<pallas_src>
import functools
import math

import jax
import jax.numpy as jnp
from jax.experimental import pallas as pl
from jax.experimental.pallas import tpu as pltpu

LN_EPS = 1e-5          # torch nn.LayerNorm default
BN_EPS = 1e-5          # torch nn.BatchNorm1d default
_INV_SQRT2 = 1.0 / math.sqrt(2.0)
LANE_PAD = 128         # lane-dense padding for the tiny classifier output
_NEG_BIG = -1e30       # additive mask for padded key slots


def _vmem():
    return pl.BlockSpec(memory_space=pltpu.MemorySpace.VMEM)


def _bf16(x):
    return x.astype(jnp.bfloat16)


def _layernorm(x, w, b):
    mu = jnp.mean(x, axis=-1, keepdims=True)
    var = jnp.mean((x - mu) ** 2, axis=-1, keepdims=True)
    return (x - mu) * jax.lax.rsqrt(var + LN_EPS) * w + b


def _token_layout(n_patches):
    """EHR token at 0, patch slab sublane-aligned at offset 8, padded tail."""
    pstart = 8
    n_pad = pstart + ((n_patches + 7) // 8) * 8
    return pstart, n_pad


def _padded_vmem_bytes(shape, dtype):
    """VMEM footprint estimate with (sublane, lane) tile padding."""
    shape = tuple(int(d) for d in shape)
    if not shape:
        return jnp.dtype(dtype).itemsize
    dims = list(shape)
    dims[-1] = ((dims[-1] + 127) // 128) * 128
    if len(dims) >= 2:
        sub = 8 if jnp.dtype(dtype).itemsize >= 4 else 16
        dims[-2] = ((dims[-2] + sub - 1) // sub) * sub
    n = 1
    for d in dims:
        n *= d
    return n * jnp.dtype(dtype).itemsize


def _clamp_vmem(nbytes):
    # stay within v7x's 64 MiB per-core VMEM; 32 MiB floor is safe everywhere.
    return int(min(max(nbytes, 32 * 1024 * 1024), 64 * 1024 * 1024))


# ----------------------------------------------------------------------------
# Kernel 1: patch embedding (Conv3d with kernel==stride==patch == matmul over
# flattened patches) + EHR projection + aligned token assembly + pos embedding.
# grid = (B,) "parallel"; weights stay resident, patch tiles are pipelined.
# ----------------------------------------------------------------------------
def _embed_kernel(patches_ref, clin_ref, wp_ref, bp_ref, we_ref, be_ref,
                  pos_ref, out_ref, *, pstart):
    P = patches_ref.shape[1]
    n_pad, H = out_ref.shape[1], out_ref.shape[2]
    pe = jnp.dot(patches_ref[0], wp_ref[...],
                 preferred_element_type=jnp.float32) + bp_ref[...]      # (P, H)
    ct = jnp.dot(clin_ref[0], we_ref[...],
                 preferred_element_type=jnp.float32) + be_ref[...]      # (1, H)
    # EHR / clinical token first (matches torch.cat([clin, patches], dim=1)).
    out_ref[:, 0:1, :] = (ct + pos_ref[0:1, :]).reshape(1, 1, H)
    if pstart > 1:
        out_ref[:, 1:pstart, :] = jnp.zeros((1, pstart - 1, H), jnp.float32)
    # Patch slab at a sublane-aligned offset (unmasked stores).
    out_ref[:, pstart:pstart + P, :] = (
        pe + pos_ref[pstart:pstart + P, :]).reshape(1, P, H)
    if pstart + P < n_pad:
        out_ref[:, pstart + P:, :] = jnp.zeros(
            (1, n_pad - pstart - P, H), jnp.float32)


def embed_tokens(patches, clin3, wp, bp, we, be, pos):
    B, P, pd = patches.shape
    n_pad, H = pos.shape
    pstart, n_pad_chk = _token_layout(P)
    assert n_pad_chk == n_pad
    n_clin = clin3.shape[-1]

    in_specs = [
        pl.BlockSpec((1, P, pd), lambda b: (b, 0, 0)),
        pl.BlockSpec((1, 1, n_clin), lambda b: (b, 0, 0)),
        pl.BlockSpec(wp.shape, lambda b: (0, 0)),
        pl.BlockSpec(bp.shape, lambda b: (0, 0)),
        pl.BlockSpec(we.shape, lambda b: (0, 0)),
        pl.BlockSpec(be.shape, lambda b: (0, 0)),
        pl.BlockSpec(pos.shape, lambda b: (0, 0)),
    ]
    out_specs = pl.BlockSpec((1, n_pad, H), lambda b: (b, 0, 0))

    vmem = (2 * _padded_vmem_bytes((1, P, pd), patches.dtype)
            + 2 * _padded_vmem_bytes((1, n_pad, H), jnp.float32)
            + _padded_vmem_bytes(wp.shape, wp.dtype)
            + _padded_vmem_bytes(we.shape, we.dtype)
            + _padded_vmem_bytes(pos.shape, pos.dtype)
            + (8 << 20))

    return pl.pallas_call(
        functools.partial(_embed_kernel, pstart=pstart),
        out_shape=jax.ShapeDtypeStruct((B, n_pad, H), jnp.float32),
        grid=(B,),
        in_specs=in_specs,
        out_specs=out_specs,
        compiler_params=pltpu.CompilerParams(
            dimension_semantics=("parallel",),
            vmem_limit_bytes=_clamp_vmem(vmem)),
    )(patches, clin3, wp, bp, we, be, pos)


# ----------------------------------------------------------------------------
# Kernel 2: fused 12-layer transformer stack (MONAI TransformerBlock):
#   x = x + SelfAttention(LayerNorm(x));  x = x + MLP(LayerNorm(x))
# Batch folded into the block; grid = (num_layer_blocks,), activations resident
# in VMEM across the (arbitrary) layer axis; layers within a block run in a
# fori_loop.  Attention uses heads-batched einsums (no per-head loop).
# ----------------------------------------------------------------------------
def _stack_kernel(x_ref, ln1w_ref, ln1b_ref, wq_ref, wk_ref, wv_ref, wo_ref,
                  bo_ref, ln2w_ref, ln2b_ref, w1_ref, b1_ref, w2_ref, b2_ref,
                  out_ref, *, num_heads, layers_per_step, pstart, n_patches):
    B, N, H = out_ref.shape
    BN = B * N
    hd = H // num_heads
    Z = num_heads * B
    scale = 1.0 / math.sqrt(hd)

    @pl.when(pl.program_id(0) == 0)
    def _():
        out_ref[...] = x_ref[...]

    # Additive key mask for the padded token slots (hoisted out of the loop).
    kidx = jax.lax.broadcasted_iota(jnp.int32, (1, 1, N), 2)
    kvalid = (kidx == 0) | ((kidx >= pstart) & (kidx < pstart + n_patches))
    kbias = jnp.where(kvalid, 0.0, _NEG_BIG).astype(jnp.float32)

    def layer(l, carry):
        xb = out_ref[...].reshape(BN, H)                          # f32, resident

        # --- self-attention (MONAI SABlock: qkv has no bias) -----------------
        xn = _bf16(_layernorm(xb, ln1w_ref[l], ln1b_ref[l]))
        lhs = jnp.broadcast_to(xn[None], (num_heads, BN, H))      # leading bcast
        q = jnp.einsum('hbe,hed->hbd', lhs, wq_ref[l],
                       preferred_element_type=jnp.float32)        # (heads,BN,hd)
        k = jnp.einsum('hbe,hed->hbd', lhs, wk_ref[l],
                       preferred_element_type=jnp.float32)
        v = jnp.einsum('hbe,hed->hbd', lhs, wv_ref[l],
                       preferred_element_type=jnp.float32)
        # (heads, B*N, hd) -> (heads*B, N, hd): leading/sublane regroup only.
        qz = _bf16(q.reshape(Z, N, hd))
        kz = _bf16(k.reshape(Z, N, hd))
        vz = _bf16(v.reshape(Z, N, hd))
        s = jnp.einsum('znd,zmd->znm', qz, kz,
                       preferred_element_type=jnp.float32) * scale + kbias
        s = s - jnp.max(s, axis=-1, keepdims=True)
        pr = jnp.exp(s)
        pr = pr * pl.reciprocal(jnp.sum(pr, axis=-1, keepdims=True), approx=True)
        o = jnp.einsum('znm,zmd->znd', _bf16(pr), vz,
                       preferred_element_type=jnp.float32)        # (Z, N, hd)
        oh = _bf16(o.reshape(num_heads, BN, hd))
        # concat-heads + out-projection fused:  sum_h  o_h @ Wo_h
        proj = jnp.einsum('hbd,hdf->hbf', oh, wo_ref[l],
                          preferred_element_type=jnp.float32)     # (heads,BN,H)
        xb = xb + jnp.sum(proj, axis=0) + bo_ref[l]

        # --- MLP: Linear -> GELU(exact erf) -> Linear (dropout = 0) ----------
        xn2 = _bf16(_layernorm(xb, ln2w_ref[l], ln2b_ref[l]))
        hmid = jnp.dot(xn2, w1_ref[l],
                       preferred_element_type=jnp.float32) + b1_ref[l]
        hmid = 0.5 * hmid * (1.0 + jax.lax.erf(hmid * _INV_SQRT2))
        mlp = jnp.dot(_bf16(hmid), w2_ref[l],
                      preferred_element_type=jnp.float32) + b2_ref[l]
        out_ref[...] = (xb + mlp).reshape(B, N, H)
        return carry

    jax.lax.fori_loop(0, layers_per_step, layer, 0)


def transformer_stack(x, p, *, num_heads, n_patches):
    B, N, H = x.shape
    L = p["wq"].shape[0]
    hd = H // num_heads
    M = p["w1"].shape[-1]
    pstart, n_pad = _token_layout(n_patches)
    assert n_pad == N

    weight_keys = ("ln1_w", "ln1_b", "wq", "wk", "wv", "wo", "bo",
                   "ln2_w", "ln2_b", "w1", "b1", "w2", "b2")
    weights = [p[k] for k in weight_keys]

    per_layer_bytes = sum(_padded_vmem_bytes(a.shape[1:], a.dtype)
                          for a in weights)
    # Whole stack resident (single grid step) when it fits comfortably,
    # otherwise stream one layer's weights per pipelined grid step.
    lps = L if L * per_layer_bytes <= (12 << 20) else 1
    n_steps = L // lps

    def wspec(a):
        rest = (0,) * (a.ndim - 1)
        return pl.BlockSpec((lps,) + tuple(a.shape[1:]),
                            lambda g, rest=rest: (g,) + rest)

    x_spec = pl.BlockSpec((B, N, H), lambda g: (0, 0, 0))
    out_spec = pl.BlockSpec((B, N, H), lambda g: (0, 0, 0))
    in_specs = [x_spec] + [wspec(a) for a in weights]

    act_bytes = _padded_vmem_bytes((B, N, H), jnp.float32)
    vmem = 2 * lps * per_layer_bytes + 4 * act_bytes + (8 << 20)

    BN = B * N
    flops_per_layer = (2 * BN * H * (3 * H) + 4 * B * N * N * H
                       + 2 * BN * H * H + 4 * BN * H * M)
    flops = L * flops_per_layer
    transcendentals = L * (num_heads * B * N * N + BN * M)
    bytes_accessed = int(sum(int(a.size) * a.dtype.itemsize for a in weights)
                         + 2 * int(x.size) * x.dtype.itemsize)

    kernel = functools.partial(_stack_kernel, num_heads=num_heads,
                               layers_per_step=lps, pstart=pstart,
                               n_patches=n_patches)
    return pl.pallas_call(
        kernel,
        out_shape=jax.ShapeDtypeStruct((B, N, H), jnp.float32),
        grid=(n_steps,),
        in_specs=in_specs,
        out_specs=out_spec,
        compiler_params=pltpu.CompilerParams(
            dimension_semantics=("arbitrary",),
            vmem_limit_bytes=_clamp_vmem(vmem)),
        cost_estimate=pl.CostEstimate(flops=flops,
                                      transcendentals=transcendentals,
                                      bytes_accessed=bytes_accessed),
    )(x, *weights)


# ----------------------------------------------------------------------------
# Kernel 3: final LayerNorm, masked mean over real tokens, fc head
# (Linear -> BatchNorm1d(eval) -> ReLU -> [Dropout=id] -> Linear, lane-padded).
# ----------------------------------------------------------------------------
def _head_kernel(x_ref, lnw_ref, lnb_ref, w1_ref, b1_ref,
                 bng_ref, bnb_ref, bnm_ref, bnv_ref, w2_ref, b2_ref,
                 out_ref, *, pstart, n_patches):
    xn = _layernorm(x_ref[...], lnw_ref[...], lnb_ref[...])       # (B, N, H)
    tok0 = xn[:, 0:1, :]
    toks = xn[:, pstart:pstart + n_patches, :]
    pooled = (jnp.sum(tok0, axis=1) + jnp.sum(toks, axis=1)) \
        * (1.0 / float(n_patches + 1))                            # (B, H)
    h1 = jnp.dot(_bf16(pooled), w1_ref[...],
                 preferred_element_type=jnp.float32) + b1_ref[...]
    h1 = (h1 - bnm_ref[...]) * jax.lax.rsqrt(bnv_ref[...] + BN_EPS) \
        * bng_ref[...] + bnb_ref[...]
    h1 = jnp.maximum(h1, 0.0)
    out_ref[...] = jnp.dot(_bf16(h1), w2_ref[...],
                           preferred_element_type=jnp.float32) + b2_ref[...]


def head(x, p, *, n_patches):
    B = x.shape[0]
    pstart, _ = _token_layout(n_patches)
    nc_pad = p["fc2_w"].shape[1]        # lane-dense padded class dim (128)
    args = (x, p["ln_w"], p["ln_b"], p["fc1_w"], p["fc1_b"],
            p["bn_g"], p["bn_b"], p["bn_m"], p["bn_v"],
            p["fc2_w"], p["fc2_b"])
    vmem = sum(_padded_vmem_bytes(a.shape, a.dtype) for a in args) \
        + _padded_vmem_bytes((B, nc_pad), jnp.float32) + (4 << 20)
    return pl.pallas_call(
        functools.partial(_head_kernel, pstart=pstart, n_patches=n_patches),
        out_shape=jax.ShapeDtypeStruct((B, nc_pad), jnp.float32),
        in_specs=[_vmem()] * len(args),
        out_specs=_vmem(),
        compiler_params=pltpu.CompilerParams(
            vmem_limit_bytes=_clamp_vmem(vmem)),
    )(*args)


# ----------------------------------------------------------------------------
# Glue
# ----------------------------------------------------------------------------
def patchify(img, p):
    """NCDHW image -> (B, P, C*p^3) non-overlapping patches.

    Patch order is (d, h, w) row-major, feature order is (C, pd, ph, pw),
    matching Conv3d(kernel=stride=p) followed by flatten(2).transpose(-1, -2).
    """
    B, C, D, H, W = img.shape
    nd, nh, nw = D // p, H // p, W // p
    x = img.reshape(B, C, nd, p, nh, p, nw, p)
    x = x.transpose(0, 2, 4, 6, 1, 3, 5, 7)
    return x.reshape(B, nd * nh * nw, C * p * p * p)


def tmss_forward(img, clin, params, *, patch, num_heads, num_classes):
    patches = patchify(img, patch).astype(jnp.bfloat16)   # bf16 in the wrapper
    B, P, _ = patches.shape
    clin3 = clin.reshape(B, 1, -1).astype(jnp.bfloat16)
    x = embed_tokens(patches, clin3, params["w_patch"], params["b_patch"],
                     params["w_ehr"], params["b_ehr"], params["pos"])
    x = transformer_stack(x, params, num_heads=num_heads, n_patches=P)
    logits = head(x, params, n_patches=P)
    return logits[:, :num_classes]


def init_params(key, *, in_channels, img_size, patch, hidden, mlp_dim,
                num_layers, num_heads, n_clin, num_classes):
    patch_dim = in_channels * patch ** 3
    n_patches = (img_size // patch) ** 3
    pstart, n_pad = _token_layout(n_patches)
    hd = hidden // num_heads
    bf = jnp.bfloat16
    ks = jax.random.split(key, 11)

    def w(k, shape, std=0.02):
        return jax.random.normal(k, shape, jnp.float32) * std

    def zeros(shape):
        return jnp.zeros(shape, jnp.float32)

    def ones(shape):
        return jnp.ones(shape, jnp.float32)

    # positional embeddings, stored directly in the padded/aligned token layout
    pos_real = w(ks[2], (n_patches + 1, hidden))
    pos = jnp.zeros((n_pad, hidden), jnp.float32)
    pos = pos.at[0].set(pos_real[0])
    pos = pos.at[pstart:pstart + n_patches].set(pos_real[1:])

    fc2_full = w(ks[4], (256, num_classes))
    fc2_w = jnp.zeros((256, LANE_PAD), jnp.float32).at[:, :num_classes].set(fc2_full)

    params = dict(
        # patch / EHR embedding (weights stored lane-dense, bf16 for the MXU)
        w_patch=w(ks[0], (patch_dim, hidden)).astype(bf),
        b_patch=zeros((1, hidden)),
        w_ehr=w(ks[1], (n_clin, hidden)).astype(bf),
        b_ehr=zeros((1, hidden)),
        pos=pos,
        # final ViT LayerNorm + classification head
        ln_w=ones((1, hidden)), ln_b=zeros((1, hidden)),
        fc1_w=w(ks[3], (hidden, 256)).astype(bf),
        fc1_b=zeros((1, 256)),
        bn_g=ones((1, 256)), bn_b=zeros((1, 256)),
        bn_m=zeros((1, 256)), bn_v=ones((1, 256)),   # BN running stats (eval)
        fc2_w=fc2_w.astype(bf),                      # lane-padded to 128 classes
        fc2_b=zeros((1, LANE_PAD)),
        # transformer layers, stacked on a leading layer axis.  q/k/v/out-proj
        # weights pre-permuted to a heads-batched layout so the kernel never
        # slices or concatenates along the 128-lane axis.
        ln1_w=ones((num_layers, 1, hidden)), ln1_b=zeros((num_layers, 1, hidden)),
        wq=w(ks[5], (num_layers, num_heads, hidden, hd)).astype(bf),
        wk=w(ks[6], (num_layers, num_heads, hidden, hd)).astype(bf),
        wv=w(ks[7], (num_layers, num_heads, hidden, hd)).astype(bf),
        wo=w(ks[8], (num_layers, num_heads, hd, hidden)).astype(bf),
        bo=zeros((num_layers, 1, hidden)),
        ln2_w=ones((num_layers, 1, hidden)), ln2_b=zeros((num_layers, 1, hidden)),
        w1=w(ks[9], (num_layers, hidden, mlp_dim)).astype(bf),
        b1=zeros((num_layers, 1, mlp_dim)),
        w2=w(ks[10], (num_layers, mlp_dim, hidden)).astype(bf),
        b2=zeros((num_layers, 1, hidden)),
    )
    return params


if __name__ == "__main__":
    # Small, self-consistent, lane-dense configuration:
    B, C, IMG, PATCH = 2, 1, 16, 8          # -> 2x2x2 = 8 patches (+1 EHR token)
    HIDDEN, MLP, HEADS, LAYERS = 128, 256, 4, 12
    NUM_CLASSES, N_CLIN = 2, 27

    key = jax.random.PRNGKey(0)
    k_img, k_clin, k_param = jax.random.split(key, 3)
    img = jax.random.normal(k_img, (B, C, IMG, IMG, IMG), jnp.float32)
    clin = jax.random.normal(k_clin, (B, N_CLIN), jnp.float32)

    params = init_params(k_param, in_channels=C, img_size=IMG, patch=PATCH,
                         hidden=HIDDEN, mlp_dim=MLP, num_layers=LAYERS,
                         num_heads=HEADS, n_clin=N_CLIN,
                         num_classes=NUM_CLASSES)

    fwd = jax.jit(functools.partial(tmss_forward, patch=PATCH,
                                    num_heads=HEADS, num_classes=NUM_CLASSES))
    out = fwd(img, clin, params)
    jax.block_until_ready(out)
    assert out.shape == (B, NUM_CLASSES) and out.dtype == jnp.float32
    assert bool(jnp.all(jnp.isfinite(out)))
    print("KERNEL_OK")
</pallas_src>

<mosaic_0001>
module attributes {stable_mosaic.version = 11 : i64} {
  func.func @_embed_kernel(%arg0: i32, %arg1: memref<1x8x512xbf16, #tpu.memory_space<vmem>>, %arg2: memref<1x1x27xbf16, #tpu.memory_space<vmem>>, %arg3: memref<512x128xbf16, #tpu.memory_space<vmem>>, %arg4: memref<1x128xf32, #tpu.memory_space<vmem>>, %arg5: memref<27x128xbf16, #tpu.memory_space<vmem>>, %arg6: memref<1x128xf32, #tpu.memory_space<vmem>>, %arg7: memref<16x128xf32, #tpu.memory_space<vmem>>, %arg8: memref<1x16x128xf32, #tpu.memory_space<vmem>>) attributes {dimension_semantics = [#tpu.dimension_semantics<parallel>], iteration_bounds = array<i64: 2>, scalar_prefetch = 0 : i64, scratch_operands = 0 : i64, tpu.core_type = #tpu.core_type<tc>, window_params = [{transform_indices = @transform_0, window_bounds = array<i64: 1, 8, 512>}, {transform_indices = @transform_1, window_bounds = array<i64: 1, 1, 27>}, {pipeline_mode = #tpu.pipeline_mode<synchronous>, transform_indices = @transform_2, window_bounds = array<i64: 512, 128>}, {pipeline_mode = #tpu.pipeline_mode<synchronous>, transform_indices = @transform_3, window_bounds = array<i64: 1, 128>}, {pipeline_mode = #tpu.pipeline_mode<synchronous>, transform_indices = @transform_4, window_bounds = array<i64: 27, 128>}, {pipeline_mode = #tpu.pipeline_mode<synchronous>, transform_indices = @transform_5, window_bounds = array<i64: 1, 128>}, {pipeline_mode = #tpu.pipeline_mode<synchronous>, transform_indices = @transform_6, window_bounds = array<i64: 16, 128>}, {transform_indices = @transform_7, window_bounds = array<i64: 1, 16, 128>}]} {
    %c0 = arith.constant 0 : index
    %c0_0 = arith.constant 0 : index
    %c0_1 = arith.constant 0 : index
    %0 = vector.load %arg1[%c0, %c0_0, %c0_1] : memref<1x8x512xbf16, #tpu.memory_space<vmem>>, vector<1x8x512xbf16>
    %1 = vector.shape_cast %0 : vector<1x8x512xbf16> to vector<8x512xbf16>
    %c0_2 = arith.constant 0 : index
    %c0_3 = arith.constant 0 : index
    %2 = vector.load %arg3[%c0_2, %c0_3] : memref<512x128xbf16, #tpu.memory_space<vmem>>, vector<512x128xbf16>
    %cst = arith.constant dense<0.000000e+00> : vector<8x128xf32>
    %3 = tpu.matmul %1, %2, %cst {dimension_numbers = #tpu.dot_dimension_numbers<[1], [0], [0], [1], [0, 0, 1, 1], [], []>} : vector<8x512xbf16>, vector<512x128xbf16>, vector<8x128xf32> -> vector<8x128xf32>
    %c0_4 = arith.constant 0 : index
    %c0_5 = arith.constant 0 : index
    %4 = vector.load %arg4[%c0_4, %c0_5] : memref<1x128xf32, #tpu.memory_space<vmem>>, vector<1x128xf32>
    %5 = vector.broadcast %4 : vector<1x128xf32> to vector<8x128xf32>
    %6 = arith.addf %3, %5 : vector<8x128xf32>
    %c0_6 = arith.constant 0 : index
    %c0_7 = arith.constant 0 : index
    %c0_8 = arith.constant 0 : index
    %7 = vector.load %arg2[%c0_6, %c0_7, %c0_8] : memref<1x1x27xbf16, #tpu.memory_space<vmem>>, vector<1x1x27xbf16>
    %8 = vector.shape_cast %7 : vector<1x1x27xbf16> to vector<1x27xbf16>
    %c0_9 = arith.constant 0 : index
    %c0_10 = arith.constant 0 : index
    %9 = vector.load %arg5[%c0_9, %c0_10] : memref<27x128xbf16, #tpu.memory_space<vmem>>, vector<27x128xbf16>
    %cst_11 = arith.constant dense<0.000000e+00> : vector<1x128xf32>
    %10 = tpu.matmul %8, %9, %cst_11 {dimension_numbers = #tpu.dot_dimension_numbers<[1], [0], [0], [1], [0, 0, 1, 1], [], []>} : vector<1x27xbf16>, vector<27x128xbf16>, vector<1x128xf32> -> vector<1x128xf32>
    %c0_12 = arith.constant 0 : index
    %c0_13 = arith.constant 0 : index
    %11 = vector.load %arg6[%c0_12, %c0_13] : memref<1x128xf32, #tpu.memory_space<vmem>>, vector<1x128xf32>
    %12 = arith.addf %10, %11 : vector<1x128xf32>
    %c0_14 = arith.constant 0 : index
    %c0_15 = arith.constant 0 : index
    %13 = vector.load %arg7[%c0_14, %c0_15] : memref<16x128xf32, #tpu.memory_space<vmem>>, vector<1x128xf32>
    %14 = arith.addf %12, %13 : vector<1x128xf32>
    %15 = vector.shape_cast %14 : vector<1x128xf32> to vector<1x1x128xf32>
    %c0_16 = arith.constant 0 : index
    %c0_17 = arith.constant 0 : index
    %c0_18 = arith.constant 0 : index
    %16 = vector.load %arg8[%c0_16, %c0_17, %c0_18] : memref<1x16x128xf32, #tpu.memory_space<vmem>>, vector<1x1x128xf32>
    tpu.vector_store %arg8[%c0_16, %c0_17, %c0_18], %15 {strides = array<i32>} : memref<1x16x128xf32, #tpu.memory_space<vmem>>, vector<1x1x128xf32>,
    %cst_19 = arith.constant 0.000000e+00 : f32
    %17 = vector.broadcast %cst_19 : f32 to vector<1x7x128xf32>
    %c0_20 = arith.constant 0 : index
    %c1 = arith.constant 1 : index
    %c0_21 = arith.constant 0 : index
    %18 = vector.load %arg8[%c0_20, %c1, %c0_21] : memref<1x16x128xf32, #tpu.memory_space<vmem>>, vector<1x7x128xf32>
    tpu.vector_store %arg8[%c0_20, %c1, %c0_21], %17 {strides = array<i32>} : memref<1x16x128xf32, #tpu.memory_space<vmem>>, vector<1x7x128xf32>,
    %c8 = arith.constant 8 : index
    %c0_22 = arith.constant 0 : index
    %19 = vector.load %arg7[%c8, %c0_22] : memref<16x128xf32, #tpu.memory_space<vmem>>, vector<8x128xf32>
    %20 = arith.addf %6, %19 : vector<8x128xf32>
    %21 = vector.shape_cast %20 : vector<8x128xf32> to vector<1x8x128xf32>
    %c0_23 = arith.constant 0 : index
    %c8_24 = arith.constant 8 : index
    %c0_25 = arith.constant 0 : index
    %22 = vector.load %arg8[%c0_23, %c8_24, %c0_25] : memref<1x16x128xf32, #tpu.memory_space<vmem>>, vector<1x8x128xf32>
    tpu.vector_store %arg8[%c0_23, %c8_24, %c0_25], %21 {strides = array<i32>} : memref<1x16x128xf32, #tpu.memory_space<vmem>>, vector<1x8x128xf32>,
    return
  }
  func.func @transform_0(%arg0: i32) -> (i32, i32, i32) {
    %c0_i32 = arith.constant 0 : i32
    %c0_i32_0 = arith.constant 0 : i32
    %c0_i32_1 = arith.constant 0 : i32
    return %arg0, %c0_i32, %c0_i32_0 : i32, i32, i32
  }
  func.func @transform_1(%arg0: i32) -> (i32, i32, i32) {
    %c0_i32 = arith.constant 0 : i32
    %c0_i32_0 = arith.constant 0 : i32
    %c0_i32_1 = arith.constant 0 : i32
    return %arg0, %c0_i32, %c0_i32_0 : i32, i32, i32
  }
  func.func @transform_2(%arg0: i32) -> (i32, i32) {
    %c0_i32 = arith.constant 0 : i32
    %c0_i32_0 = arith.constant 0 : i32
    %c0_i32_1 = arith.constant 0 : i32
    return %c0_i32, %c0_i32_0 : i32, i32
  }
  func.func @transform_3(%arg0: i32) -> (i32, i32) {
    %c0_i32 = arith.constant 0 : i32
    %c0_i32_0 = arith.constant 0 : i32
    %c0_i32_1 = arith.constant 0 : i32
    return %c0_i32, %c0_i32_0 : i32, i32
  }
  func.func @transform_4(%arg0: i32) -> (i32, i32) {
    %c0_i32 = arith.constant 0 : i32
    %c0_i32_0 = arith.constant 0 : i32
    %c0_i32_1 = arith.constant 0 : i32
    return %c0_i32, %c0_i32_0 : i32, i32
  }
  func.func @transform_5(%arg0: i32) -> (i32, i32) {
    %c0_i32 = arith.constant 0 : i32
    %c0_i32_0 = arith.constant 0 : i32
    %c0_i32_1 = arith.constant 0 : i32
    return %c0_i32, %c0_i32_0 : i32, i32
  }
  func.func @transform_6(%arg0: i32) -> (i32, i32) {
    %c0_i32 = arith.constant 0 : i32
    %c0_i32_0 = arith.constant 0 : i32
    %c0_i32_1 = arith.constant 0 : i32
    return %c0_i32, %c0_i32_0 : i32, i32
  }
  func.func @transform_7(%arg0: i32) -> (i32, i32, i32) {
    %c0_i32 = arith.constant 0 : i32
    %c0_i32_0 = arith.constant 0 : i32
    %c0_i32_1 = arith.constant 0 : i32
    return %arg0, %c0_i32, %c0_i32_0 : i32, i32, i32
  }
}

module attributes {stable_mosaic.version = 11 : i64} {
  func.func @_stack_kernel(%arg0: i32, %arg1: memref<2x16x128xf32, #tpu.memory_space<vmem>>, %arg2: memref<12x1x128xf32, #tpu.memory_space<vmem>>, %arg3: memref<12x1x128xf32, #tpu.memory_space<vmem>>, %arg4: memref<12x4x128x32xbf16, #tpu.memory_space<vmem>>, %arg5: memref<12x4x128x32xbf16, #tpu.memory_space<vmem>>, %arg6: memref<12x4x128x32xbf16, #tpu.memory_space<vmem>>, %arg7: memref<12x4x32x128xbf16, #tpu.memory_space<vmem>>, %arg8: memref<12x1x128xf32, #tpu.memory_space<vmem>>, %arg9: memref<12x1x128xf32, #tpu.memory_space<vmem>>, %arg10: memref<12x1x128xf32, #tpu.memory_space<vmem>>, %arg11: memref<12x128x256xbf16, #tpu.memory_space<vmem>>, %arg12: memref<12x1x256xf32, #tpu.memory_space<vmem>>, %arg13: memref<12x256x128xbf16, #tpu.memory_space<vmem>>, %arg14: memref<12x1x128xf32, #tpu.memory_space<vmem>>, %arg15: memref<2x16x128xf32, #tpu.memory_space<vmem>>) attributes {dimension_semantics = [#tpu.dimension_semantics<arbitrary>], iteration_bounds = array<i64: 1>, scalar_prefetch = 0 : i64, scratch_operands = 0 : i64, tpu.core_type = #tpu.core_type<tc>, window_params = [{pipeline_mode = #tpu.pipeline_mode<synchronous>, transform_indices = @transform_0, window_bounds = array<i64: 2, 16, 128>}, {transform_indices = @transform_1, window_bounds = array<i64: 12, 1, 128>}, {transform_indices = @transform_2, window_bounds = array<i64: 12, 1, 128>}, {transform_indices = @transform_3, window_bounds = array<i64: 12, 4, 128, 32>}, {transform_indices = @transform_4, window_bounds = array<i64: 12, 4, 128, 32>}, {transform_indices = @transform_5, window_bounds = array<i64: 12, 4, 128, 32>}, {transform_indices = @transform_6, window_bounds = array<i64: 12, 4, 32, 128>}, {transform_indices = @transform_7, window_bounds = array<i64: 12, 1, 128>}, {transform_indices = @transform_8, window_bounds = array<i64: 12, 1, 128>}, {transform_indices = @transform_9, window_bounds = array<i64: 12, 1, 128>}, {transform_indices = @transform_10, window_bounds = array<i64: 12, 128, 256>}, {transform_indices = @transform_11, window_bounds = array<i64: 12, 1, 256>}, {transform_indices = @transform_12, window_bounds = array<i64: 12, 256, 128>}, {transform_indices = @transform_13, window_bounds = array<i64: 12, 1, 128>}, {pipeline_mode = #tpu.pipeline_mode<synchronous>, transform_indices = @transform_14, window_bounds = array<i64: 2, 16, 128>}]} {
    %c0_i32 = arith.constant 0 : i32
    %0 = arith.cmpi eq, %arg0, %c0_i32 : i32
    %1 = arith.extui %0 : i1 to i32
    %c0_i32_0 = arith.constant 0 : i32
    %2 = arith.cmpi ne, %1, %c0_i32_0 : i32
    scf.if %2 {
      %c0 = arith.constant 0 : index
      %c0_5 = arith.constant 0 : index
      %c0_6 = arith.constant 0 : index
      %16 = vector.load %arg1[%c0, %c0_5, %c0_6] : memref<2x16x128xf32, #tpu.memory_space<vmem>>, vector<2x16x128xf32>
      %c0_7 = arith.constant 0 : index
      %c0_8 = arith.constant 0 : index
      %c0_9 = arith.constant 0 : index
      %17 = vector.load %arg15[%c0_7, %c0_8, %c0_9] : memref<2x16x128xf32, #tpu.memory_space<vmem>>, vector<2x16x128xf32>
      tpu.vector_store %arg15[%c0_7, %c0_8, %c0_9], %16 {strides = array<i32>} : memref<2x16x128xf32, #tpu.memory_space<vmem>>, vector<2x16x128xf32>,
    } else {
    }
    %3 = tpu.iota {dimensions = array<i32: 2>} : vector<1x1x16xi32>
    %c0_i32_1 = arith.constant 0 : i32
    %4 = vector.broadcast %c0_i32_1 : i32 to vector<1x1x16xi32>
    %5 = arith.cmpi eq, %3, %4 : vector<1x1x16xi32>
    %c8_i32 = arith.constant 8 : i32
    %6 = vector.broadcast %c8_i32 : i32 to vector<1x1x16xi32>
    %7 = arith.cmpi sge, %3, %6 : vector<1x1x16xi32>
    %c16_i32 = arith.constant 16 : i32
    %8 = vector.broadcast %c16_i32 : i32 to vector<1x1x16xi32>
    %9 = arith.cmpi slt, %3, %8 : vector<1x1x16xi32>
    %10 = arith.andi %7, %9 : vector<1x1x16xi1>
    %11 = arith.ori %5, %10 : vector<1x1x16xi1>
    %cst = arith.constant 0.000000e+00 : f32
    %cst_2 = arith.constant -1.000000e+30 : f32
    %12 = vector.broadcast %cst : f32 to vector<1x1x16xf32>
    %13 = vector.broadcast %cst_2 : f32 to vector<1x1x16xf32>
    %14 = arith.select %11, %12, %13 : vector<1x1x16xi1>, vector<1x1x16xf32>
    %c0_i32_3 = arith.constant 0 : i32
    %c12_i32 = arith.constant 12 : i32
    %15 = arith.addi %c0_i32_3, %c12_i32 : i32
    %c1_i32 = arith.constant 1 : i32
    scf.for %arg16 = %c0_i32_3 to %15 step %c1_i32  : i32 {
      %c0 = arith.constant 0 : index
      %c0_5 = arith.constant 0 : index
      %c0_6 = arith.constant 0 : index
      %16 = vector.load %arg15[%c0, %c0_5, %c0_6] : memref<2x16x128xf32, #tpu.memory_space<vmem>>, vector<2x16x128xf32>
      %17 = vector.shape_cast %16 : vector<2x16x128xf32> to vector<32x128xf32>
      %18 = arith.index_cast %arg16 : i32 to index
      %c0_7 = arith.constant 0 : index
      %c0_8 = arith.constant 0 : index
      %19 = vector.load %arg2[%18, %c0_7, %c0_8] : memref<12x1x128xf32, #tpu.memory_space<vmem>>, vector<1x1x128xf32>
      %20 = vector.shape_cast %19 : vector<1x1x128xf32> to vector<1x128xf32>
      %21 = arith.index_cast %arg16 : i32 to index
      %c0_9 = arith.constant 0 : index
      %c0_10 = arith.constant 0 : index
      %22 = vector.load %arg3[%21, %c0_9, %c0_10] : memref<12x1x128xf32, #tpu.memory_space<vmem>>, vector<1x1x128xf32>
      %23 = vector.shape_cast %22 : vector<1x1x128xf32> to vector<1x128xf32>
      %cst_11 = arith.constant dense<0.000000e+00> : vector<32xf32>
      %24 = vector.multi_reduction <add>, %17, %cst_11 [1] : vector<32x128xf32> to vector<32xf32>
      %25 = vector.shape_cast %24 : vector<32xf32> to vector<32x1xf32>
      %cst_12 = arith.constant 1.280000e+02 : f32
      %26 = vector.broadcast %cst_12 : f32 to vector<32x1xf32>
      %27 = arith.divf %25, %26 : vector<32x1xf32>
      %28 = vector.broadcast %27 : vector<32x1xf32> to vector<32x128xf32>
      %29 = arith.subf %17, %28 : vector<32x128xf32>
      %30 = arith.mulf %29, %29 : vector<32x128xf32>
      %cst_13 = arith.constant dense<0.000000e+00> : vector<32xf32>
      %31 = vector.multi_reduction <add>, %30, %cst_13 [1] : vector<32x128xf32> to vector<32xf32>
      %32 = vector.shape_cast %31 : vector<32xf32> to vector<32x1xf32>
      %cst_14 = arith.constant 1.280000e+02 : f32
      %33 = vector.broadcast %cst_14 : f32 to vector<32x1xf32>
      %34 = arith.divf %32, %33 : vector<32x1xf32>
      %35 = vector.broadcast %27 : vector<32x1xf32> to vector<32x128xf32>
      %36 = arith.subf %17, %35 : vector<32x128xf32>
      %cst_15 = arith.constant 9.99999974E-6 : f32
      %37 = vector.broadcast %cst_15 : f32 to vector<32x1xf32>
      %38 = arith.addf %34, %37 : vector<32x1xf32>
      %39 = math.rsqrt %38 : vector<32x1xf32>
      %40 = vector.broadcast %39 : vector<32x1xf32> to vector<32x128xf32>
      %41 = arith.mulf %36, %40 : vector<32x128xf32>
      %42 = vector.broadcast %20 : vector<1x128xf32> to vector<32x128xf32>
      %43 = arith.mulf %41, %42 : vector<32x128xf32>
      %44 = vector.broadcast %23 : vector<1x128xf32> to vector<32x128xf32>
      %45 = arith.addf %43, %44 : vector<32x128xf32>
      %46 = arith.truncf %45 : vector<32x128xf32> to vector<32x128xbf16>
      %47 = vector.shape_cast %46 : vector<32x128xbf16> to vector<1x32x128xbf16>
      %48 = vector.shape_cast %47 : vector<1x32x128xbf16> to vector<1x32x128xbf16>
      %49 = vector.broadcast %48 : vector<1x32x128xbf16> to vector<4x32x128xbf16>
      %50 = arith.index_cast %arg16 : i32 to index
      %c0_16 = arith.constant 0 : index
      %c0_17 = arith.constant 0 : index
      %c0_18 = arith.constant 0 : index
      %51 = vector.load %arg4[%50, %c0_16, %c0_17, %c0_18] : memref<12x4x128x32xbf16, #tpu.memory_space<vmem>>, vector<1x4x128x32xbf16>
      %52 = vector.shape_cast %51 : vector<1x4x128x32xbf16> to vector<4x128x32xbf16>
      "tpu.trace_start"() <{level = 10 : i32, message = "hbe,hed->hbd"}> : () -> ()
      %cst_19 = arith.constant dense<0.000000e+00> : vector<4x32x32xf32>
      %53 = tpu.matmul %49, %52, %cst_19 {dimension_numbers = #tpu.dot_dimension_numbers<[2], [1], [1], [2], [0, 0, 0, 1, 1, 2], [0], [0]>} : vector<4x32x128xbf16>, vector<4x128x32xbf16>, vector<4x32x32xf32> -> vector<4x32x32xf32>
      "tpu.trace_stop"() : () -> ()
      %54 = arith.index_cast %arg16 : i32 to index
      %c0_20 = arith.constant 0 : index
      %c0_21 = arith.constant 0 : index
      %c0_22 = arith.constant 0 : index
      %55 = vector.load %arg5[%54, %c0_20, %c0_21, %c0_22] : memref<12x4x128x32xbf16, #tpu.memory_space<vmem>>, vector<1x4x128x32xbf16>
      %56 = vector.shape_cast %55 : vector<1x4x128x32xbf16> to vector<4x128x32xbf16>
      "tpu.trace_start"() <{level = 10 : i32, message = "hbe,hed->hbd"}> : () -> ()
      %cst_23 = arith.constant dense<0.000000e+00> : vector<4x32x32xf32>
      %57 = tpu.matmul %49, %56, %cst_23 {dimension_numbers = #tpu.dot_dimension_numbers<[2], [1], [1], [2], [0, 0, 0, 1, 1, 2], [0], [0]>} : vector<4x32x128xbf16>, vector<4x128x32xbf16>, vector<4x32x32xf32> -> vector<4x32x32xf32>
      "tpu.trace_stop"() : () -> ()
      %58 = arith.index_cast %arg16 : i32 to index
      %c0_24 = arith.constant 0 : index
      %c0_25 = arith.constant 0 : index
      %c0_26 = arith.constant 0 : index
      %59 = vector.load %arg6[%58, %c0_24, %c0_25, %c0_26] : memref<12x4x128x32xbf16, #tpu.memory_space<vmem>>, vector<1x4x128x32xbf16>
      %60 = vector.shape_cast %59 : vector<1x4x128x32xbf16> to vector<4x128x32xbf16>
      "tpu.trace_start"() <{level = 10 : i32, message = "hbe,hed->hbd"}> : () -> ()
      %cst_27 = arith.constant dense<0.000000e+00> : vector<4x32x32xf32>
      %61 = tpu.matmul %49, %60, %cst_27 {dimension_numbers = #tpu.dot_dimension_numbers<[2], [1], [1], [2], [0, 0, 0, 1, 1, 2], [0], [0]>} : vector<4x32x128xbf16>, vector<4x128x32xbf16>, vector<4x32x32xf32> -> vector<4x32x32xf32>
      "tpu.trace_stop"() : () -> ()
      %62 = vector.shape_cast %53 : vector<4x32x32xf32> to vector<8x16x32xf32>
      %63 = arith.truncf %62 : vector<8x16x32xf32> to vector<8x16x32xbf16>
      %64 = vector.shape_cast %57 : vector<4x32x32xf32> to vector<8x16x32xf32>
      %65 = arith.truncf %64 : vector<8x16x32xf32> to vector<8x16x32xbf16>
      %66 = vector.shape_cast %61 : vector<4x32x32xf32> to vector<8x16x32xf32>
      %67 = arith.truncf %66 : vector<8x16x32xf32> to vector<8x16x32xbf16>
      "tpu.trace_start"() <{level = 10 : i32, message = "znd,zmd->znm"}> : () -> ()
      %cst_28 = arith.constant dense<0.000000e+00> : vector<8x16x16xf32>
      %68 = tpu.matmul %63, %65, %cst_28 {dimension_numbers = #tpu.dot_dimension_numbers<[2], [2], [1], [1], [0, 0, 0, 1, 1, 1], [0], [0]>} : vector<8x16x32xbf16>, vector<8x16x32xbf16>, vector<8x16x16xf32> -> vector<8x16x16xf32>
      "tpu.trace_stop"() : () -> ()
      %cst_29 = arith.constant 0.176776692 : f32
      %69 = vector.broadcast %cst_29 : f32 to vector<8x16x16xf32>
      %70 = arith.mulf %68, %69 : vector<8x16x16xf32>
      %71 = vector.broadcast %14 : vector<1x1x16xf32> to vector<8x16x16xf32>
      %72 = arith.addf %70, %71 : vector<8x16x16xf32>
      %cst_30 = arith.constant dense<0xFF800000> : vector<8x16xf32>
      %73 = vector.multi_reduction <maximumf>, %72, %cst_30 [2] : vector<8x16x16xf32> to vector<8x16xf32>
      %74 = vector.shape_cast %73 : vector<8x16xf32> to vector<8x16x1xf32>
      %75 = vector.broadcast %74 : vector<8x16x1xf32> to vector<8x16x16xf32>
      %76 = arith.subf %72, %75 : vector<8x16x16xf32>
      %77 = math.exp %76 : vector<8x16x16xf32>
      %cst_31 = arith.constant dense<0.000000e+00> : vector<8x16xf32>
      %78 = vector.multi_reduction <add>, %77, %cst_31 [2] : vector<8x16x16xf32> to vector<8x16xf32>
      %79 = vector.shape_cast %78 : vector<8x16xf32> to vector<8x16x1xf32>
      %80 = tpu.reciprocal %79 {approx = true} : vector<8x16x1xf32> -> vector<8x16x1xf32>
      %81 = vector.broadcast %80 : vector<8x16x1xf32> to vector<8x16x16xf32>
      %82 = arith.mulf %77, %81 : vector<8x16x16xf32>
      %83 = arith.truncf %82 : vector<8x16x16xf32> to vector<8x16x16xbf16>
      "tpu.trace_start"() <{level = 10 : i32, message = "znm,zmd->znd"}> : () -> ()
      %cst_32 = arith.constant dense<0.000000e+00> : vector<8x16x32xf32>
      %84 = tpu.matmul %83, %67, %cst_32 {dimension_numbers = #tpu.dot_dimension_numbers<[2], [1], [1], [2], [0, 0, 0, 1, 1, 2], [0], [0]>} : vector<8x16x16xbf16>, vector<8x16x32xbf16>, vector<8x16x32xf32> -> vector<8x16x32xf32>
      "tpu.trace_stop"() : () -> ()
      %85 = vector.shape_cast %84 : vector<8x16x32xf32> to vector<4x32x32xf32>
      %86 = arith.truncf %85 : vector<4x32x32xf32> to vector<4x32x32xbf16>
      %87 = arith.index_cast %arg16 : i32 to index
      %c0_33 = arith.constant 0 : index
      %c0_34 = arith.constant 0 : index
      %c0_35 = arith.constant 0 : index
      %88 = vector.load %arg7[%87, %c0_33, %c0_34, %c0_35] : memref<12x4x32x128xbf16, #tpu.memory_space<vmem>>, vector<1x4x32x128xbf16>
      %89 = vector.shape_cast %88 : vector<1x4x32x128xbf16> to vector<4x32x128xbf16>
      "tpu.trace_start"() <{level = 10 : i32, message = "hbd,hdf->hbf"}> : () -> ()
      %cst_36 = arith.constant dense<0.000000e+00> : vector<4x32x128xf32>
      %90 = tpu.matmul %86, %89, %cst_36 {dimension_numbers = #tpu.dot_dimension_numbers<[2], [1], [1], [2], [0, 0, 0, 1, 1, 2], [0], [0]>} : vector<4x32x32xbf16>, vector<4x32x128xbf16>, vector<4x32x128xf32> -> vector<4x32x128xf32>
      "tpu.trace_stop"() : () -> ()
      %cst_37 = arith.constant dense<0.000000e+00> : vector<32x128xf32>
      %91 = vector.multi_reduction <add>, %90, %cst_37 [0] : vector<4x32x128xf32> to vector<32x128xf32>
      %92 = arith.addf %17, %91 : vector<32x128xf32>
      %93 = arith.index_cast %arg16 : i32 to index
      %c0_38 = arith.constant 0 : index
      %c0_39 = arith.constant 0 : index
      %94 = vector.load %arg8[%93, %c0_38, %c0_39] : memref<12x1x128xf32, #tpu.memory_space<vmem>>, vector<1x1x128xf32>
      %95 = vector.shape_cast %94 : vector<1x1x128xf32> to vector<1x128xf32>
      %96 = vector.broadcast %95 : vector<1x128xf32> to vector<32x128xf32>
      %97 = arith.addf %92, %96 : vector<32x128xf32>
      %98 = arith.index_cast %arg16 : i32 to index
      %c0_40 = arith.constant 0 : index
      %c0_41 = arith.constant 0 : index
      %99 = vector.load %arg9[%98, %c0_40, %c0_41] : memref<12x1x128xf32, #tpu.memory_space<vmem>>, vector<1x1x128xf32>
      %100 = vector.shape_cast %99 : vector<1x1x128xf32> to vector<1x128xf32>
      %101 = arith.index_cast %arg16 : i32 to index
      %c0_42 = arith.constant 0 : index
      %c0_43 = arith.constant 0 : index
      %102 = vector.load %arg10[%101, %c0_42, %c0_43] : memref<12x1x128xf32, #tpu.memory_space<vmem>>, vector<1x1x128xf32>
      %103 = vector.shape_cast %102 : vector<1x1x128xf32> to vector<1x128xf32>
      %cst_44 = arith.constant dense<0.000000e+00> : vector<32xf32>
      %104 = vector.multi_reduction <add>, %97, %cst_44 [1] : vector<32x128xf32> to vector<32xf32>
      %105 = vector.shape_cast %104 : vector<32xf32> to vector<32x1xf32>
      %cst_45 = arith.constant 1.280000e+02 : f32
      %106 = vector.broadcast %cst_45 : f32 to vector<32x1xf32>
      %107 = arith.divf %105, %106 : vector<32x1xf32>
      %108 = vector.broadcast %107 : vector<32x1xf32> to vector<32x128xf32>
      %109 = arith.subf %97, %108 : vector<32x128xf32>
      %110 = arith.mulf %109, %109 : vector<32x128xf32>
      %cst_46 = arith.constant dense<0.000000e+00> : vector<32xf32>
      %111 = vector.multi_reduction <add>, %110, %cst_46 [1] : vector<32x128xf32> to vector<32xf32>
      %112 = vector.shape_cast %111 : vector<32xf32> to vector<32x1xf32>
      %cst_47 = arith.constant 1.280000e+02 : f32
      %113 = vector.broadcast %cst_47 : f32 to vector<32x1xf32>
      %114 = arith.divf %112, %113 : vector<32x1xf32>
      %115 = vector.broadcast %107 : vector<32x1xf32> to vector<32x128xf32>
      %116 = arith.subf %97, %115 : vector<32x128xf32>
      %cst_48 = arith.constant 9.99999974E-6 : f32
      %117 = vector.broadcast %cst_48 : f32 to vector<32x1xf32>
      %118 = arith.addf %114, %117 : vector<32x1xf32>
      %119 = math.rsqrt %118 : vector<32x1xf32>
      %120 = vector.broadcast %119 : vector<32x1xf32> to vector<32x128xf32>
      %121 = arith.mulf %116, %120 : vector<32x128xf32>
      %122 = vector.broadcast %100 : vector<1x128xf32> to vector<32x128xf32>
      %123 = arith.mulf %121, %122 : vector<32x128xf32>
      %124 = vector.broadcast %103 : vector<1x128xf32> to vector<32x128xf32>
      %125 = arith.addf %123, %124 : vector<32x128xf32>
      %126 = arith.truncf %125 : vector<32x128xf32> to vector<32x128xbf16>
      %127 = arith.index_cast %arg16 : i32 to index
      %c0_49 = arith.constant 0 : index
      %c0_50 = arith.constant 0 : index
      %128 = vector.load %arg11[%127, %c0_49, %c0_50] : memref<12x128x256xbf16, #tpu.memory_space<vmem>>, vector<1x128x256xbf16>
      %129 = vector.shape_cast %128 : vector<1x128x256xbf16> to vector<128x256xbf16>
      %cst_51 = arith.constant dense<0.000000e+00> : vector<32x256xf32>
      %130 = tpu.matmul %126, %129, %cst_51 {dimension_numbers = #tpu.dot_dimension_numbers<[1], [0], [0], [1], [0, 0, 1, 1], [], []>} : vector<32x128xbf16>, vector<128x256xbf16>, vector<32x256xf32> -> vector<32x256xf32>
      %131 = arith.index_cast %arg16 : i32 to index
      %c0_52 = arith.constant 0 : index
      %c0_53 = arith.constant 0 : index
      %132 = vector.load %arg12[%131, %c0_52, %c0_53] : memref<12x1x256xf32, #tpu.memory_space<vmem>>, vector<1x1x256xf32>
      %133 = vector.shape_cast %132 : vector<1x1x256xf32> to vector<1x256xf32>
      %134 = vector.broadcast %133 : vector<1x256xf32> to vector<32x256xf32>
      %135 = arith.addf %130, %134 : vector<32x256xf32>
      %cst_54 = arith.constant 5.000000e-01 : f32
      %136 = vector.broadcast %cst_54 : f32 to vector<32x256xf32>
      %137 = arith.mulf %136, %135 : vector<32x256xf32>
      %cst_55 = arith.constant 0.707106769 : f32
      %138 = vector.broadcast %cst_55 : f32 to vector<32x256xf32>
      %139 = arith.mulf %135, %138 : vector<32x256xf32>
      %140 = math.erf %139 : vector<32x256xf32>
      %cst_56 = arith.constant 1.000000e+00 : f32
      %141 = vector.broadcast %cst_56 : f32 to vector<32x256xf32>
      %142 = arith.addf %141, %140 : vector<32x256xf32>
      %143 = arith.mulf %137, %142 : vector<32x256xf32>
      %144 = arith.truncf %143 : vector<32x256xf32> to vector<32x256xbf16>
      %145 = arith.index_cast %arg16 : i32 to index
      %c0_57 = arith.constant 0 : index
      %c0_58 = arith.constant 0 : index
      %146 = vector.load %arg13[%145, %c0_57, %c0_58] : memref<12x256x128xbf16, #tpu.memory_space<vmem>>, vector<1x256x128xbf16>
      %147 = vector.shape_cast %146 : vector<1x256x128xbf16> to vector<256x128xbf16>
      %cst_59 = arith.constant dense<0.000000e+00> : vector<32x128xf32>
      %148 = tpu.matmul %144, %147, %cst_59 {dimension_numbers = #tpu.dot_dimension_numbers<[1], [0], [0], [1], [0, 0, 1, 1], [], []>} : vector<32x256xbf16>, vector<256x128xbf16>, vector<32x128xf32> -> vector<32x128xf32>
      %149 = arith.index_cast %arg16 : i32 to index
      %c0_60 = arith.constant 0 : index
      %c0_61 = arith.constant 0 : index
      %150 = vector.load %arg14[%149, %c0_60, %c0_61] : memref<12x1x128xf32, #tpu.memory_space<vmem>>, vector<1x1x128xf32>
      %151 = vector.shape_cast %150 : vector<1x1x128xf32> to vector<1x128xf32>
      %152 = vector.broadcast %151 : vector<1x128xf32> to vector<32x128xf32>
      %153 = arith.addf %148, %152 : vector<32x128xf32>
      %154 = arith.addf %97, %153 : vector<32x128xf32>
      %155 = vector.shape_cast %154 : vector<32x128xf32> to vector<2x16x128xf32>
      %c0_62 = arith.constant 0 : index
      %c0_63 = arith.constant 0 : index
      %c0_64 = arith.constant 0 : index
      %156 = vector.load %arg15[%c0_62, %c0_63, %c0_64] : memref<2x16x128xf32, #tpu.memory_space<vmem>>, vector<2x16x128xf32>
      tpu.vector_store %arg15[%c0_62, %c0_63, %c0_64], %155 {strides = array<i32>} : memref<2x16x128xf32, #tpu.memory_space<vmem>>, vector<2x16x128xf32>,
    }
    %c12_i32_4 = arith.constant 12 : i32
    return
  }
  func.func @transform_0(%arg0: i32) -> (i32, i32, i32) {
    %c0_i32 = arith.constant 0 : i32
    %c0_i32_0 = arith.constant 0 : i32
    %c0_i32_1 = arith.constant 0 : i32
    %c0_i32_2 = arith.constant 0 : i32
    return %c0_i32, %c0_i32_0, %c0_i32_1 : i32, i32, i32
  }
  func.func @transform_1(%arg0: i32) -> (i32, i32, i32) {
    %c0_i32 = arith.constant 0 : i32
    %c0_i32_0 = arith.constant 0 : i32
    %c0_i32_1 = arith.constant 0 : i32
    return %arg0, %c0_i32, %c0_i32_0 : i32, i32, i32
  }
  func.func @transform_2(%arg0: i32) -> (i32, i32, i32) {
    %c0_i32 = arith.constant 0 : i32
    %c0_i32_0 = arith.constant 0 : i32
    %c0_i32_1 = arith.constant 0 : i32
    return %arg0, %c0_i32, %c0_i32_0 : i32, i32, i32
  }
  func.func @transform_3(%arg0: i32) -> (i32, i32, i32, i32) {
    %c0_i32 = arith.constant 0 : i32
    %c0_i32_0 = arith.constant 0 : i32
    %c0_i32_1 = arith.constant 0 : i32
    %c0_i32_2 = arith.constant 0 : i32
    return %arg0, %c0_i32, %c0_i32_0, %c0_i32_1 : i32, i32, i32, i32
  }
  func.func @transform_4(%arg0: i32) -> (i32, i32, i32, i32) {
    %c0_i32 = arith.constant 0 : i32
    %c0_i32_0 = arith.constant 0 : i32
    %c0_i32_1 = arith.constant 0 : i32
    %c0_i32_2 = arith.constant 0 : i32
    return %arg0, %c0_i32, %c0_i32_0, %c0_i32_1 : i32, i32, i32, i32
  }
  func.func @transform_5(%arg0: i32) -> (i32, i32, i32, i32) {
    %c0_i32 = arith.constant 0 : i32
    %c0_i32_0 = arith.constant 0 : i32
    %c0_i32_1 = arith.constant 0 : i32
    %c0_i32_2 = arith.constant 0 : i32
    return %arg0, %c0_i32, %c0_i32_0, %c0_i32_1 : i32, i32, i32, i32
  }
  func.func @transform_6(%arg0: i32) -> (i32, i32, i32, i32) {
    %c0_i32 = arith.constant 0 : i32
    %c0_i32_0 = arith.constant 0 : i32
    %c0_i32_1 = arith.constant 0 : i32
    %c0_i32_2 = arith.constant 0 : i32
    return %arg0, %c0_i32, %c0_i32_0, %c0_i32_1 : i32, i32, i32, i32
  }
  func.func @transform_7(%arg0: i32) -> (i32, i32, i32) {
    %c0_i32 = arith.constant 0 : i32
    %c0_i32_0 = arith.constant 0 : i32
    %c0_i32_1 = arith.constant 0 : i32
    return %arg0, %c0_i32, %c0_i32_0 : i32, i32, i32
  }
  func.func @transform_8(%arg0: i32) -> (i32, i32, i32) {
    %c0_i32 = arith.constant 0 : i32
    %c0_i32_0 = arith.constant 0 : i32
    %c0_i32_1 = arith.constant 0 : i32
    return %arg0, %c0_i32, %c0_i32_0 : i32, i32, i32
  }
  func.func @transform_9(%arg0: i32) -> (i32, i32, i32) {
    %c0_i32 = arith.constant 0 : i32
    %c0_i32_0 = arith.constant 0 : i32
    %c0_i32_1 = arith.constant 0 : i32
    return %arg0, %c0_i32, %c0_i32_0 : i32, i32, i32
  }
  func.func @transform_10(%arg0: i32) -> (i32, i32, i32) {
    %c0_i32 = arith.constant 0 : i32
    %c0_i32_0 = arith.constant 0 : i32
    %c0_i32_1 = arith.constant 0 : i32
    return %arg0, %c0_i32, %c0_i32_0 : i32, i32, i32
  }
  func.func @transform_11(%arg0: i32) -> (i32, i32, i32) {
    %c0_i32 = arith.constant 0 : i32
    %c0_i32_0 = arith.constant 0 : i32
    %c0_i32_1 = arith.constant 0 : i32
    return %arg0, %c0_i32, %c0_i32_0 : i32, i32, i32
  }
  func.func @transform_12(%arg0: i32) -> (i32, i32, i32) {
    %c0_i32 = arith.constant 0 : i32
    %c0_i32_0 = arith.constant 0 : i32
    %c0_i32_1 = arith.constant 0 : i32
    return %arg0, %c0_i32, %c0_i32_0 : i32, i32, i32
  }
  func.func @transform_13(%arg0: i32) -> (i32, i32, i32) {
    %c0_i32 = arith.constant 0 : i32
    %c0_i32_0 = arith.constant 0 : i32
    %c0_i32_1 = arith.constant 0 : i32
    return %arg0, %c0_i32, %c0_i32_0 : i32, i32, i32
  }
  func.func @transform_14(%arg0: i32) -> (i32, i32, i32) {
    %c0_i32 = arith.constant 0 : i32
    %c0_i32_0 = arith.constant 0 : i32
    %c0_i32_1 = arith.constant 0 : i32
    %c0_i32_2 = arith.constant 0 : i32
    return %c0_i32, %c0_i32_0, %c0_i32_1 : i32, i32, i32
  }
}

module attributes {stable_mosaic.version = 11 : i64} {
  func.func @_head_kernel(%arg0: memref<2x16x128xf32, #tpu.memory_space<vmem>>, %arg1: memref<1x128xf32, #tpu.memory_space<vmem>>, %arg2: memref<1x128xf32, #tpu.memory_space<vmem>>, %arg3: memref<128x256xbf16, #tpu.memory_space<vmem>>, %arg4: memref<1x256xf32, #tpu.memory_space<vmem>>, %arg5: memref<1x256xf32, #tpu.memory_space<vmem>>, %arg6: memref<1x256xf32, #tpu.memory_space<vmem>>, %arg7: memref<1x256xf32, #tpu.memory_space<vmem>>, %arg8: memref<1x256xf32, #tpu.memory_space<vmem>>, %arg9: memref<256x128xbf16, #tpu.memory_space<vmem>>, %arg10: memref<1x128xf32, #tpu.memory_space<vmem>>, %arg11: memref<2x128xf32, #tpu.memory_space<vmem>>) attributes {dimension_semantics = [], scalar_prefetch = 0 : i64, scratch_operands = 0 : i64, tpu.core_type = #tpu.core_type<tc>} {
    %c0 = arith.constant 0 : index
    %c0_0 = arith.constant 0 : index
    %c0_1 = arith.constant 0 : index
    %0 = vector.load %arg0[%c0, %c0_0, %c0_1] : memref<2x16x128xf32, #tpu.memory_space<vmem>>, vector<2x16x128xf32>
    %c0_2 = arith.constant 0 : index
    %c0_3 = arith.constant 0 : index
    %1 = vector.load %arg1[%c0_2, %c0_3] : memref<1x128xf32, #tpu.memory_space<vmem>>, vector<1x128xf32>
    %c0_4 = arith.constant 0 : index
    %c0_5 = arith.constant 0 : index
    %2 = vector.load %arg2[%c0_4, %c0_5] : memref<1x128xf32, #tpu.memory_space<vmem>>, vector<1x128xf32>
    %cst = arith.constant dense<0.000000e+00> : vector<2x16xf32>
    %3 = vector.multi_reduction <add>, %0, %cst [2] : vector<2x16x128xf32> to vector<2x16xf32>
    %4 = vector.shape_cast %3 : vector<2x16xf32> to vector<2x16x1xf32>
    %cst_6 = arith.constant 1.280000e+02 : f32
    %5 = vector.broadcast %cst_6 : f32 to vector<2x16x1xf32>
    %6 = arith.divf %4, %5 : vector<2x16x1xf32>
    %7 = vector.broadcast %6 : vector<2x16x1xf32> to vector<2x16x128xf32>
    %8 = arith.subf %0, %7 : vector<2x16x128xf32>
    %9 = arith.mulf %8, %8 : vector<2x16x128xf32>
    %cst_7 = arith.constant dense<0.000000e+00> : vector<2x16xf32>
    %10 = vector.multi_reduction <add>, %9, %cst_7 [2] : vector<2x16x128xf32> to vector<2x16xf32>
    %11 = vector.shape_cast %10 : vector<2x16xf32> to vector<2x16x1xf32>
    %cst_8 = arith.constant 1.280000e+02 : f32
    %12 = vector.broadcast %cst_8 : f32 to vector<2x16x1xf32>
    %13 = arith.divf %11, %12 : vector<2x16x1xf32>
    %14 = vector.broadcast %6 : vector<2x16x1xf32> to vector<2x16x128xf32>
    %15 = arith.subf %0, %14 : vector<2x16x128xf32>
    %cst_9 = arith.constant 9.99999974E-6 : f32
    %16 = vector.broadcast %cst_9 : f32 to vector<2x16x1xf32>
    %17 = arith.addf %13, %16 : vector<2x16x1xf32>
    %18 = math.rsqrt %17 : vector<2x16x1xf32>
    %19 = vector.broadcast %18 : vector<2x16x1xf32> to vector<2x16x128xf32>
    %20 = arith.mulf %15, %19 : vector<2x16x128xf32>
    %21 = vector.shape_cast %1 : vector<1x128xf32> to vector<1x1x128xf32>
    %22 = vector.broadcast %21 : vector<1x1x128xf32> to vector<2x16x128xf32>
    %23 = arith.mulf %20, %22 : vector<2x16x128xf32>
    %24 = vector.shape_cast %2 : vector<1x128xf32> to vector<1x1x128xf32>
    %25 = vector.broadcast %24 : vector<1x1x128xf32> to vector<2x16x128xf32>
    %26 = arith.addf %23, %25 : vector<2x16x128xf32>
    %27 = vector.extract_strided_slice %26 {offsets = [0, 0, 0], sizes = [2, 1, 128], strides = [1, 1, 1]} : vector<2x16x128xf32> to vector<2x1x128xf32>
    %28 = vector.extract_strided_slice %26 {offsets = [0, 8, 0], sizes = [2, 8, 128], strides = [1, 1, 1]} : vector<2x16x128xf32> to vector<2x8x128xf32>
    %cst_10 = arith.constant dense<0.000000e+00> : vector<2x128xf32>
    %29 = vector.multi_reduction <add>, %27, %cst_10 [1] : vector<2x1x128xf32> to vector<2x128xf32>
    %cst_11 = arith.constant dense<0.000000e+00> : vector<2x128xf32>
    %30 = vector.multi_reduction <add>, %28, %cst_11 [1] : vector<2x8x128xf32> to vector<2x128xf32>
    %31 = arith.addf %29, %30 : vector<2x128xf32>
    %cst_12 = arith.constant 0.111111112 : f32
    %32 = vector.broadcast %cst_12 : f32 to vector<2x128xf32>
    %33 = arith.mulf %31, %32 : vector<2x128xf32>
    %34 = arith.truncf %33 : vector<2x128xf32> to vector<2x128xbf16>
    %c0_13 = arith.constant 0 : index
    %c0_14 = arith.constant 0 : index
    %35 = vector.load %arg3[%c0_13, %c0_14] : memref<128x256xbf16, #tpu.memory_space<vmem>>, vector<128x256xbf16>
    %cst_15 = arith.constant dense<0.000000e+00> : vector<2x256xf32>
    %36 = tpu.matmul %34, %35, %cst_15 {dimension_numbers = #tpu.dot_dimension_numbers<[1], [0], [0], [1], [0, 0, 1, 1], [], []>} : vector<2x128xbf16>, vector<128x256xbf16>, vector<2x256xf32> -> vector<2x256xf32>
    %c0_16 = arith.constant 0 : index
    %c0_17 = arith.constant 0 : index
    %37 = vector.load %arg4[%c0_16, %c0_17] : memref<1x256xf32, #tpu.memory_space<vmem>>, vector<1x256xf32>
    %38 = vector.broadcast %37 : vector<1x256xf32> to vector<2x256xf32>
    %39 = arith.addf %36, %38 : vector<2x256xf32>
    %c0_18 = arith.constant 0 : index
    %c0_19 = arith.constant 0 : index
    %40 = vector.load %arg7[%c0_18, %c0_19] : memref<1x256xf32, #tpu.memory_space<vmem>>, vector<1x256xf32>
    %41 = vector.broadcast %40 : vector<1x256xf32> to vector<2x256xf32>
    %42 = arith.subf %39, %41 : vector<2x256xf32>
    %c0_20 = arith.constant 0 : index
    %c0_21 = arith.constant 0 : index
    %43 = vector.load %arg8[%c0_20, %c0_21] : memref<1x256xf32, #tpu.memory_space<vmem>>, vector<1x256xf32>
    %cst_22 = arith.constant 9.99999974E-6 : f32
    %44 = vector.broadcast %cst_22 : f32 to vector<1x256xf32>
    %45 = arith.addf %43, %44 : vector<1x256xf32>
    %46 = math.rsqrt %45 : vector<1x256xf32>
    %47 = vector.broadcast %46 : vector<1x256xf32> to vector<2x256xf32>
    %48 = arith.mulf %42, %47 : vector<2x256xf32>
    %c0_23 = arith.constant 0 : index
    %c0_24 = arith.constant 0 : index
    %49 = vector.load %arg5[%c0_23, %c0_24] : memref<1x256xf32, #tpu.memory_space<vmem>>, vector<1x256xf32>
    %50 = vector.broadcast %49 : vector<1x256xf32> to vector<2x256xf32>
    %51 = arith.mulf %48, %50 : vector<2x256xf32>
    %c0_25 = arith.constant 0 : index
    %c0_26 = arith.constant 0 : index
    %52 = vector.load %arg6[%c0_25, %c0_26] : memref<1x256xf32, #tpu.memory_space<vmem>>, vector<1x256xf32>
    %53 = vector.broadcast %52 : vector<1x256xf32> to vector<2x256xf32>
    %54 = arith.addf %51, %53 : vector<2x256xf32>
    %cst_27 = arith.constant 0.000000e+00 : f32
    %55 = vector.broadcast %cst_27 : f32 to vector<2x256xf32>
    %56 = arith.maximumf %54, %55 : vector<2x256xf32>
    %57 = arith.truncf %56 : vector<2x256xf32> to vector<2x256xbf16>
    %c0_28 = arith.constant 0 : index
    %c0_29 = arith.constant 0 : index
    %58 = vector.load %arg9[%c0_28, %c0_29] : memref<256x128xbf16, #tpu.memory_space<vmem>>, vector<256x128xbf16>
    %cst_30 = arith.constant dense<0.000000e+00> : vector<2x128xf32>
    %59 = tpu.matmul %57, %58, %cst_30 {dimension_numbers = #tpu.dot_dimension_numbers<[1], [0], [0], [1], [0, 0, 1, 1], [], []>} : vector<2x256xbf16>, vector<256x128xbf16>, vector<2x128xf32> -> vector<2x128xf32>
    %c0_31 = arith.constant 0 : index
    %c0_32 = arith.constant 0 : index
    %60 = vector.load %arg10[%c0_31, %c0_32] : memref<1x128xf32, #tpu.memory_space<vmem>>, vector<1x128xf32>
    %61 = vector.broadcast %60 : vector<1x128xf32> to vector<2x128xf32>
    %62 = arith.addf %59, %61 : vector<2x128xf32>
    %c0_33 = arith.constant 0 : index
    %c0_34 = arith.constant 0 : index
    %63 = vector.load %arg11[%c0_33, %c0_34] : memref<2x128xf32, #tpu.memory_space<vmem>>, vector<2x128xf32>
    tpu.vector_store %arg11[%c0_33, %c0_34], %62 {strides = array<i32>} : memref<2x128xf32, #tpu.memory_space<vmem>>, vector<2x128xf32>,
    return
  }
}

</mosaic_0001>

<llo_original>
// kernel: tmss_forward.3
$region0: #{tmss_forward.3}
  #allocation0 [shape = 'u32[]', space=smem, size = 0x4, offset = 0x4, fixed_abs, tag = 'smem constant byte address 0x4 - core index']
  #allocation1 [shape = 'u32[144,128]{1,0:T(1,128)}', space=vmem, size = 0x12000, scoped, tag = 'internal scratch']
  %s0 = inlined_call_operand.vmem [shape: bf16[2,8,512], index: 0, kind: input, shape index: {}]
  %s1 = inlined_call_operand.vmem [shape: bf16[2,1,27], index: 1, kind: input, shape index: {}]
  %s2 = inlined_call_operand.vmem [shape: bf16[512,128], index: 2, kind: input, shape index: {}]
  %s3 = inlined_call_operand.vmem [shape: f32[1,128], index: 3, kind: input, shape index: {}]
  %s4 = inlined_call_operand.vmem [shape: bf16[27,128], index: 4, kind: input, shape index: {}]
  %s5 = inlined_call_operand.vmem [shape: f32[1,128], index: 5, kind: input, shape index: {}]
  %s6 = inlined_call_operand.vmem [shape: f32[16,128], index: 6, kind: input, shape index: {}]
  %s7 = inlined_call_operand.vmem [shape: f32[2,16,128], index: 7, kind: output, shape index: {}]
  %s8 = sld [smem:[#allocation0]]
  $region61: #{tmss_forward.3} parent=0
    _
  %s10 = ssub.s32 1, %s8
  %s11 = scalar_select 0, %s10, %s8
  loop: start=0, step=1, limit=4
  $region2: #{tmss_forward.3} parent=0 // loop_pre_header
    _
  $region3: #{tmss_forward.3} parent=0 // loop_header
    %s13 = sphi 0, %s17
    %p14 = scmp.ge.s32.totalorder %s13, 4
    %s23 = sphi 0, %s25
    %s26 = sphi 0, %s23
    %s27 = sphi 0, %s26
    %s43 = sphi 0, %s27
    %s49 = sphi 0, %s51
    %s52 = sphi 0, %s49
    %s53 = sphi 0, %s52
    %s69 = sphi 0, %s53
    %s73 = sphi 0, %s73
    %s75 = sphi 0, %s73
    %s76 = sphi 0, %s75
    %s90 = sphi 0, %s76
    %s94 = sphi 0, %s94
    %s96 = sphi 0, %s94
    %s97 = sphi 0, %s96
    %s111 = sphi 0, %s97
    %s115 = sphi 0, %s115
    %s117 = sphi 0, %s115
    %s118 = sphi 0, %s117
    %s132 = sphi 0, %s118
    %s136 = sphi 0, %s136
    %s138 = sphi 0, %s136
    %s139 = sphi 0, %s138
    %s153 = sphi 0, %s139
    %s157 = sphi 0, %s157
    %s159 = sphi 0, %s157
    %s160 = sphi 0, %s159
    %s174 = sphi 0, %s160
    %s180 = sphi 0, %s182
    %s183 = sphi 0, %s180
    %s184 = sphi 0, %s183
    %s200 = sphi 0, %s184
  $region4: #{tmss_forward.3} parent=0 // loop_header_branch
    %16 = sbr.rel (%p14) target = $region8
  $region5: #{tmss_forward.3} parent=0 // loop_body
    %s18 = ssub.s32 %s13, 1
    %s19 = ssub.s32 %s13, 2
    %s20 = sadd.s32 %s13, 1
    %s21 = ssub.s32 %s13, %s20
    %p22 = scmp.eq.s32.totalorder %s21, 0
    %s24 = sadd.s32 %s23, 1
    %s25 = scalar_select %p22, %s23, %s24
    %p28 = pneg %p22
    %p29 = scmp.eq.s32.totalorder %s13, 1
    %p30 = por %p28, %p29
    %p31 = scmp.ne.s32.totalorder %s23, %s26
    %p32 = scmp.eq.s32.totalorder %s13, 0
    %p33 = por %p31, %p32
    %p34 = scmp.ne.s32.totalorder %s23, %s26
    %p35 = scmp.eq.s32.totalorder %s18, 1
    %p36 = por %p34, %p35
    %p37 = scmp.ne.s32.totalorder %s26, %s27
    %p38 = scmp.eq.s32.totalorder %s18, 0
    %p39 = por %p37, %p38
    %p40 = scmp.ne.s32.totalorder %s26, %s27
    %p41 = scmp.eq.s32.totalorder %s19, 1
    %p42 = por %p40, %p41
    %p44 = scmp.ne.s32.totalorder %s27, %s43
    %p45 = scmp.eq.s32.totalorder %s19, 0
    %p46 = por %p44, %p45
    %s47 = ssub.s32 %s13, %s20
    %p48 = scmp.eq.s32.totalorder %s47, 0
    %s50 = sadd.s32 %s49, 1
    %s51 = scalar_select %p48, %s49, %s50
    %p54 = pneg %p48
    %p55 = scmp.eq.s32.totalorder %s13, 1
    %p56 = por %p54, %p55
    %p57 = scmp.ne.s32.totalorder %s49, %s52
    %p58 = scmp.eq.s32.totalorder %s13, 0
    %p59 = por %p57, %p58
    %p60 = scmp.ne.s32.totalorder %s49, %s52
    %p61 = scmp.eq.s32.totalorder %s18, 1
    %p62 = por %p60, %p61
    %p63 = scmp.ne.s32.totalorder %s52, %s53
    %p64 = scmp.eq.s32.totalorder %s18, 0
    %p65 = por %p63, %p64
    %p66 = scmp.ne.s32.totalorder %s52, %s53
    %p67 = scmp.eq.s32.totalorder %s19, 1
    %p68 = por %p66, %p67
    %p70 = scmp.ne.s32.totalorder %s53, %s69
    %p71 = scmp.eq.s32.totalorder %s19, 0
    %p72 = por %p70, %p71
    %s74 = sadd.s32 %s73, 1
    %p77 = scmp.eq.s32.totalorder %s13, 1
    %p78 = scmp.ne.s32.totalorder %s73, %s75
    %p79 = scmp.eq.s32.totalorder %s13, 0
    %p80 = por %p78, %p79
    %p81 = scmp.ne.s32.totalorder %s73, %s75
    %p82 = scmp.eq.s32.totalorder %s18, 1
    %p83 = por %p81, %p82
    %p84 = scmp.ne.s32.totalorder %s75, %s76
    %p85 = scmp.eq.s32.totalorder %s18, 0
    %p86 = por %p84, %p85
    %p87 = scmp.ne.s32.totalorder %s75, %s76
    %p88 = scmp.eq.s32.totalorder %s19, 1
    %p89 = por %p87, %p88
    %p91 = scmp.ne.s32.totalorder %s76, %s90
    %p92 = scmp.eq.s32.totalorder %s19, 0
    %p93 = por %p91, %p92
    %s95 = sadd.s32 %s94, 1
    %p98 = scmp.eq.s32.totalorder %s13, 1
    %p99 = scmp.ne.s32.totalorder %s94, %s96
    %p100 = scmp.eq.s32.totalorder %s13, 0
    %p101 = por %p99, %p100
    %p102 = scmp.ne.s32.totalorder %s94, %s96
    %p103 = scmp.eq.s32.totalorder %s18, 1
    %p104 = por %p102, %p103
    %p105 = scmp.ne.s32.totalorder %s96, %s97
    %p106 = scmp.eq.s32.totalorder %s18, 0
    %p107 = por %p105, %p106
    %p108 = scmp.ne.s32.totalorder %s96, %s97
    %p109 = scmp.eq.s32.totalorder %s19, 1
    %p110 = por %p108, %p109
    %p112 = scmp.ne.s32.totalorder %s97, %s111
    %p113 = scmp.eq.s32.totalorder %s19, 0
    %p114 = por %p112, %p113
    %s116 = sadd.s32 %s115, 1
    %p119 = scmp.eq.s32.totalorder %s13, 1
    %p120 = scmp.ne.s32.totalorder %s115, %s117
    %p121 = scmp.eq.s32.totalorder %s13, 0
    %p122 = por %p120, %p121
    %p123 = scmp.ne.s32.totalorder %s115, %s117
    %p124 = scmp.eq.s32.totalorder %s18, 1
    %p125 = por %p123, %p124
    %p126 = scmp.ne.s32.totalorder %s117, %s118
    %p127 = scmp.eq.s32.totalorder %s18, 0
    %p128 = por %p126, %p127
    %p129 = scmp.ne.s32.totalorder %s117, %s118
    %p130 = scmp.eq.s32.totalorder %s19, 1
    %p131 = por %p129, %p130
    %p133 = scmp.ne.s32.totalorder %s118, %s132
    %p134 = scmp.eq.s32.totalorder %s19, 0
    %p135 = por %p133, %p134
    %s137 = sadd.s32 %s136, 1
    %p140 = scmp.eq.s32.totalorder %s13, 1
    %p141 = scmp.ne.s32.totalorder %s136, %s138
    %p142 = scmp.eq.s32.totalorder %s13, 0
    %p143 = por %p141, %p142
    %p144 = scmp.ne.s32.totalorder %s136, %s138
    %p145 = scmp.eq.s32.totalorder %s18, 1
    %p146 = por %p144, %p145
    %p147 = scmp.ne.s32.totalorder %s138, %s139
    %p148 = scmp.eq.s32.totalorder %s18, 0
    %p149 = por %p147, %p148
    %p150 = scmp.ne.s32.totalorder %s138, %s139
    %p151 = scmp.eq.s32.totalorder %s19, 1
    %p152 = por %p150, %p151
    %p154 = scmp.ne.s32.totalorder %s139, %s153
    %p155 = scmp.eq.s32.totalorder %s19, 0
    %p156 = por %p154, %p155
    %s158 = sadd.s32 %s157, 1
    %p161 = scmp.eq.s32.totalorder %s13, 1
    %p162 = scmp.ne.s32.totalorder %s157, %s159
    %p163 = scmp.eq.s32.totalorder %s13, 0
    %p164 = por %p162, %p163
    %p165 = scmp.ne.s32.totalorder %s157, %s159
    %p166 = scmp.eq.s32.totalorder %s18, 1
    %p167 = por %p165, %p166
    %p168 = scmp.ne.s32.totalorder %s159, %s160
    %p169 = scmp.eq.s32.totalorder %s18, 0
    %p170 = por %p168, %p169
    %p171 = scmp.ne.s32.totalorder %s159, %s160
    %p172 = scmp.eq.s32.totalorder %s19, 1
    %p173 = por %p171, %p172
    %p175 = scmp.ne.s32.totalorder %s160, %s174
    %p176 = scmp.eq.s32.totalorder %s19, 0
    %p177 = por %p175, %p176
    %s178 = ssub.s32 %s13, %s20
    %p179 = scmp.eq.s32.totalorder %s178, 0
    %s181 = sadd.s32 %s180, 1
    %s182 = scalar_select %p179, %s180, %s181
    %p185 = pneg %p179
    %p186 = scmp.eq.s32.totalorder %s13, 1
    %p187 = por %p185, %p186
    %p188 = scmp.ne.s32.totalorder %s180, %s183
    %p189 = scmp.eq.s32.totalorder %s13, 0
    %p190 = por %p188, %p189
    %p191 = scmp.ne.s32.totalorder %s180, %s183
    %p192 = scmp.eq.s32.totalorder %s18, 1
    %p193 = por %p191, %p192
    %p194 = scmp.ne.s32.totalorder %s183, %s184
    %p195 = scmp.eq.s32.totalorder %s18, 0
    %p196 = por %p194, %p195
    %p197 = scmp.ne.s32.totalorder %s183, %s184
    %p198 = scmp.eq.s32.totalorder %s19, 1
    %p199 = por %p197, %p198
    %p201 = scmp.ne.s32.totalorder %s184, %s200
    %p202 = scmp.eq.s32.totalorder %s19, 0
    %p203 = por %p201, %p202
    %p204 = scmp.le.s32.totalorder 1, %s13
    %p205 = scmp.lt.s32.totalorder %s13, 3
    %p206 = pnand %p204, %p205
    %p207 = pneg %p206
    // Predicated region
    $region9: #{tmss_forward.3} parent=5 // pred_check
      _
    $region10: #{tmss_forward.3} parent=5 // pred_check_branch
      %209 = sbr.rel (%p206) target = $region12
    $region11: #{tmss_forward.3} parent=5 // pred_region
      %s210 = ssub.s32 %s13, 1
      // Predicated region
      $region13: #{tmss_forward.3} parent=11 // pred_check
        %p211 = pneg %p86
      $region14: #{tmss_forward.3} parent=11 // pred_check_branch
        %213 = sbr.rel (%p211) target = $region16
      $region15: #{tmss_forward.3} parent=11 // pred_region
        _
      $region16: #{tmss_forward.3} parent=11 // pred_fallthru
        _
      // Predicated region
      $region17: #{tmss_forward.3} parent=11 // pred_check
        %p214 = pneg %p107
      $region18: #{tmss_forward.3} parent=11 // pred_check_branch
        %216 = sbr.rel (%p214) target = $region20
      $region19: #{tmss_forward.3} parent=11 // pred_region
        _
      $region20: #{tmss_forward.3} parent=11 // pred_fallthru
        _
      // Predicated region
      $region21: #{tmss_forward.3} parent=11 // pred_check
        %p217 = pneg %p128
      $region22: #{tmss_forward.3} parent=11 // pred_check_branch
        %219 = sbr.rel (%p217) target = $region24
      $region23: #{tmss_forward.3} parent=11 // pred_region
        _
      $region24: #{tmss_forward.3} parent=11 // pred_fallthru
        _
      // Predicated region
      $region25: #{tmss_forward.3} parent=11 // pred_check
        %p220 = pneg %p149
      $region26: #{tmss_forward.3} parent=11 // pred_check_branch
        %222 = sbr.rel (%p220) target = $region28
      $region27: #{tmss_forward.3} parent=11 // pred_region
        _
      $region28: #{tmss_forward.3} parent=11 // pred_fallthru
        _
      // Predicated region
      $region29: #{tmss_forward.3} parent=11 // pred_check
        %p223 = pneg %p170
      $region30: #{tmss_forward.3} parent=11 // pred_check_branch
        %225 = sbr.rel (%p223) target = $region32
      $region31: #{tmss_forward.3} parent=11 // pred_region
        _
      $region32: #{tmss_forward.3} parent=11 // pred_fallthru
        _
    $region12: #{tmss_forward.3} parent=5 // pred_fallthru
      _
    %p226 = scmp.lt.s32.totalorder %s13, 2
    // Predicated region
    $region33: #{tmss_forward.3} parent=5 // pred_check
      %p227 = pneg %p226
    $region34: #{tmss_forward.3} parent=5 // pred_check_branch
      %229 = sbr.rel (%p227) target = $region36
    $region35: #{tmss_forward.3} parent=5 // pred_region
      // Predicated region
      $region37: #{tmss_forward.3} parent=35 // pred_check
        %p230 = pneg %p33
      $region38: #{tmss_forward.3} parent=35 // pred_check_branch
        %232 = sbr.rel (%p230) target = $region40
      $region39: #{tmss_forward.3} parent=35 // pred_region
        %p233 = scmp.lt.s32.totalorder %s13, 1
        %s234 = scalar_select %p233, %s13, 1
        %s235 = smul.addr %s234, 4
        %s236 = smul.addr %s235, 4
        %s237 = scalar_lea.vmem %s0, %s236
      $region40: #{tmss_forward.3} parent=35 // pred_fallthru
        _
      // Predicated region
      $region41: #{tmss_forward.3} parent=35 // pred_check
        %p238 = pneg %p59
      $region42: #{tmss_forward.3} parent=35 // pred_check_branch
        %240 = sbr.rel (%p238) target = $region44
      $region43: #{tmss_forward.3} parent=35 // pred_region
        %p241 = scmp.lt.s32.totalorder %s13, 1
        %s242 = scalar_select %p241, %s13, 1
        %s243 = scalar_lea.vmem %s1, %s242
      $region44: #{tmss_forward.3} parent=35 // pred_fallthru
        _
    $region36: #{tmss_forward.3} parent=5 // pred_fallthru
      _
    %p244 = scmp.le.s32.totalorder 1, %s13
    %p245 = scmp.lt.s32.totalorder %s13, 3
    %p246 = pnand %p244, %p245
    %p247 = pneg %p246
    // Predicated region
    $region45: #{tmss_forward.3} parent=5 // pred_check
      _
    $region46: #{tmss_forward.3} parent=5 // pred_check_branch
      %249 = sbr.rel (%p246) target = $region48
    $region47: #{tmss_forward.3} parent=5 // pred_region
      %s250 = ssub.s32 %s13, 1
      %p251 = scmp.lt.s32.totalorder %s18, 1
      %s252 = scalar_select %p251, %s18, 1
      %s253 = smul.addr %s252, 4
      %s254 = smul.addr %s253, 4
      %s255 = scalar_lea.vmem %s0, %s254
      %p256 = pneg %p39
      %p257 = pneg %p36
      %p258 = scmp.lt.s32.totalorder %s18, 1
      %s259 = scalar_select %p258, %s18, 1
      %s260 = scalar_lea.vmem %s1, %s259
      %p261 = pneg %p65
      %p262 = pneg %p62
      %p263 = pneg %p86
      %p264 = pneg %p83
      %p265 = pneg %p107
      %p266 = pneg %p104
      %p267 = pneg %p128
      %p268 = pneg %p125
      %p269 = pneg %p149
      %p270 = pneg %p146
      %p271 = pneg %p170
      %p272 = pneg %p167
      %p273 = pneg %p196
      %p274 = pneg %p193
      %p275 = scmp.lt.s32.totalorder %s18, 1
      %s276 = scalar_select %p275, %s18, 1
      %s277 = smul.addr %s276, 2
      %s278 = smul.addr %s277, 8
      %s279 = scalar_lea.vmem %s7, %s278
      %p280 = scmp.lt.s32.totalorder %s18, 1
      %s281 = scalar_select %p280, %s18, 1
      %s282 = smul.addr %s281, 4
      %s283 = smul.addr %s282, 4
      %s284 = scalar_lea.vmem %s0, %s283
      %p285 = scmp.lt.s32.totalorder %s18, 1
      %s286 = scalar_select %p285, %s18, 1
      %s287 = scalar_lea.vmem %s1, %s286
      %p288 = scmp.lt.s32.totalorder %s18, 1
      %s289 = scalar_select %p288, %s18, 1
      %s290 = smul.addr %s289, 2
      %s291 = smul.addr %s290, 8
      %s292 = scalar_lea.vmem %s7, %s291
      %v294 = vld [vmem:[%s284] sm:$0xff]
      %v295 = vld [vmem:[%s284 + $0x8] sm:$0xff]
      %v296 = vld [vmem:[%s2] sm:$0xf]
      %v297 = vld [vmem:[%s2 + $0x4] sm:$0xf]
      %v298 = vld [vmem:[%s2 + $0x8] sm:$0xf]
      %v299 = vld [vmem:[%s2 + $0xc] sm:$0xf]
      %v300 = vld [vmem:[%s2 + $0x10] sm:$0xf]
      %v301 = vld [vmem:[%s2 + $0x14] sm:$0xf]
      %v302 = vld [vmem:[%s2 + $0x18] sm:$0xf]
      %v303 = vld [vmem:[%s2 + $0x1c] sm:$0xf]
      %v304 = vld [vmem:[%s2 + $0x20] sm:$0xf]
      %v305 = vld [vmem:[%s2 + $0x24] sm:$0xf]
      %v306 = vld [vmem:[%s2 + $0x28] sm:$0xf]
      %v307 = vld [vmem:[%s2 + $0x2c] sm:$0xf]
      %v308 = vld [vmem:[%s2 + $0x30] sm:$0xf]
      %v309 = vld [vmem:[%s2 + $0x34] sm:$0xf]
      %v310 = vld [vmem:[%s2 + $0x38] sm:$0xf]
      %v311 = vld [vmem:[%s2 + $0x3c] sm:$0xf]
      %v312 = vld [vmem:[%s2 + $0x40] sm:$0xf]
      %v313 = vld [vmem:[%s2 + $0x44] sm:$0xf]
      %v314 = vld [vmem:[%s2 + $0x48] sm:$0xf]
      %v315 = vld [vmem:[%s2 + $0x4c] sm:$0xf]
      %v316 = vld [vmem:[%s2 + $0x50] sm:$0xf]
      %v317 = vld [vmem:[%s2 + $0x54] sm:$0xf]
      %v318 = vld [vmem:[%s2 + $0x58] sm:$0xf]
      %v319 = vld [vmem:[%s2 + $0x5c] sm:$0xf]
      %v320 = vld [vmem:[%s2 + $0x60] sm:$0xf]
      %v321 = vld [vmem:[%s2 + $0x64] sm:$0xf]
      %v322 = vld [vmem:[%s2 + $0x68] sm:$0xf]
      %v323 = vld [vmem:[%s2 + $0x6c] sm:$0xf]
      %v324 = vld [vmem:[%s2 + $0x70] sm:$0xf]
      %v325 = vld [vmem:[%s2 + $0x74] sm:$0xf]
      %v326 = vld [vmem:[%s2 + $0x78] sm:$0xf]
      %v327 = vld [vmem:[%s2 + $0x7c] sm:$0xf]
      %v328 = vld [vmem:[%s2 + $0x80] sm:$0xf]
      %v329 = vld [vmem:[%s2 + $0x84] sm:$0xf]
      %v330 = vld [vmem:[%s2 + $0x88] sm:$0xf]
      %v331 = vld [vmem:[%s2 + $0x8c] sm:$0xf]
      %v332 = vld [vmem:[%s2 + $0x90] sm:$0xf]
      %v333 = vld [vmem:[%s2 + $0x94] sm:$0xf]
      %v334 = vld [vmem:[%s2 + $0x98] sm:$0xf]
      %v335 = vld [vmem:[%s2 + $0x9c] sm:$0xf]
      %v336 = vld [vmem:[%s2 + $0xa0] sm:$0xf]
      %v337 = vld [vmem:[%s2 + $0xa4] sm:$0xf]
      %v338 = vld [vmem:[%s2 + $0xa8] sm:$0xf]
      %v339 = vld [vmem:[%s2 + $0xac] sm:$0xf]
      %v340 = vld [vmem:[%s2 + $0xb0] sm:$0xf]
      %v341 = vld [vmem:[%s2 + $0xb4] sm:$0xf]
      %v342 = vld [vmem:[%s2 + $0xb8] sm:$0xf]
      %v343 = vld [vmem:[%s2 + $0xbc] sm:$0xf]
      %v344 = vld [vmem:[%s2 + $0xc0] sm:$0xf]
      %v345 = vld [vmem:[%s2 + $0xc4] sm:$0xf]
      %v346 = vld [vmem:[%s2 + $0xc8] sm:$0xf]
      %v347 = vld [vmem:[%s2 + $0xcc] sm:$0xf]
      %v348 = vld [vmem:[%s2 + $0xd0] sm:$0xf]
      %v349 = vld [vmem:[%s2 + $0xd4] sm:$0xf]
      %v350 = vld [vmem:[%s2 + $0xd8] sm:$0xf]
      %v351 = vld [vmem:[%s2 + $0xdc] sm:$0xf]
      %v352 = vld [vmem:[%s2 + $0xe0] sm:$0xf]
      %v353 = vld [vmem:[%s2 + $0xe4] sm:$0xf]
      %v354 = vld [vmem:[%s2 + $0xe8] sm:$0xf]
      %v355 = vld [vmem:[%s2 + $0xec] sm:$0xf]
      %v356 = vld [vmem:[%s2 + $0xf0] sm:$0xf]
      %v357 = vld [vmem:[%s2 + $0xf4] sm:$0xf]
      %v358 = vld [vmem:[%s2 + $0xf8] sm:$0xf]
      %v359 = vld [vmem:[%s2 + $0xfc] sm:$0xf]
      %v360 = vld [vmem:[%s3] sm:$0x1]
      %v362 = vlaneseq
      %v363 = vshrl.u32 %v362, 7
      %v364 = vsub.s32 0, %v363
      %v365 = vrot.slane %v360, %v364
      %v369 = vunpack.c.l.b16 %v294
      %v370 = vunpack.c.h.b16 %v294
      %v371 = vunpack.c.l.b16 %v295
      %v372 = vunpack.c.h.b16 %v295
      %v373 = vpack.c.b16 %v369, %v369
      %v374 = vpack.c.b16 %v370, %v370
      %v375 = vpack.c.b16 %v371, %v371
      %v376 = vpack.c.b16 %v372, %v372
      %v445 = vunpack.c.l.b16 %v296
      %v446 = vunpack.c.l.b16 %v297
      %v447 = vunpack.c.l.b16 %v298
      %v448 = vunpack.c.l.b16 %v299
      %v449 = vunpack.c.l.b16 %v300
      %v450 = vunpack.c.l.b16 %v301
      %v451 = vunpack.c.l.b16 %v302
      %v452 = vunpack.c.l.b16 %v303
      %v453 = vunpack.c.l.b16 %v304
      %v454 = vunpack.c.l.b16 %v305
      %v455 = vunpack.c.l.b16 %v306
      %v456 = vunpack.c.l.b16 %v307
      %v457 = vunpack.c.l.b16 %v308
      %v458 = vunpack.c.l.b16 %v309
      %v459 = vunpack.c.l.b16 %v310
      %v460 = vunpack.c.l.b16 %v311
      %v461 = vunpack.c.l.b16 %v312
      %v462 = vunpack.c.l.b16 %v313
      %v463 = vunpack.c.l.b16 %v314
      %v464 = vunpack.c.l.b16 %v315
      %v465 = vunpack.c.l.b16 %v316
      %v466 = vunpack.c.l.b16 %v317
      %v467 = vunpack.c.l.b16 %v318
      %v468 = vunpack.c.l.b16 %v319
      %v469 = vunpack.c.l.b16 %v320
      %v470 = vunpack.c.l.b16 %v321
      %v471 = vunpack.c.l.b16 %v322
      %v472 = vunpack.c.l.b16 %v323
      %v473 = vunpack.c.l.b16 %v324
      %v474 = vunpack.c.l.b16 %v325
      %v475 = vunpack.c.l.b16 %v326
      %v476 = vunpack.c.l.b16 %v327
      %v477 = vunpack.c.l.b16 %v328
      %v478 = vunpack.c.l.b16 %v329
      %v479 = vunpack.c.l.b16 %v330
      %v480 = vunpack.c.l.b16 %v331
      %v481 = vunpack.c.l.b16 %v332
      %v482 = vunpack.c.l.b16 %v333
      %v483 = vunpack.c.l.b16 %v334
      %v484 = vunpack.c.l.b16 %v335
      %v485 = vunpack.c.l.b16 %v336
      %v486 = vunpack.c.l.b16 %v337
      %v487 = vunpack.c.l.b16 %v338
      %v488 = vunpack.c.l.b16 %v339
      %v489 = vunpack.c.l.b16 %v340
      %v490 = vunpack.c.l.b16 %v341
      %v491 = vunpack.c.l.b16 %v342
      %v492 = vunpack.c.l.b16 %v343
      %v493 = vunpack.c.l.b16 %v344
      %v494 = vunpack.c.l.b16 %v345
      %v495 = vunpack.c.l.b16 %v346
      %v496 = vunpack.c.l.b16 %v347
      %v497 = vunpack.c.l.b16 %v348
      %v498 = vunpack.c.l.b16 %v349
      %v499 = vunpack.c.l.b16 %v350
      %v500 = vunpack.c.l.b16 %v351
      %v501 = vunpack.c.l.b16 %v352
      %v502 = vunpack.c.l.b16 %v353
      %v503 = vunpack.c.l.b16 %v354
      %v504 = vunpack.c.l.b16 %v355
      %v505 = vunpack.c.l.b16 %v356
      %v506 = vunpack.c.l.b16 %v357
      %v507 = vunpack.c.l.b16 %v358
      %v508 = vunpack.c.l.b16 %v359
      %v509 = vpack.c.b16 %v446, %v445
      %v510 = vpack.c.b16 %v448, %v447
      %v511 = vpack.c.b16 %v450, %v449
      %v512 = vpack.c.b16 %v452, %v451
      %v513 = vpack.c.b16 %v454, %v453
      %v514 = vpack.c.b16 %v456, %v455
      %v515 = vpack.c.b16 %v458, %v457
      %v516 = vpack.c.b16 %v460, %v459
      %v517 = vpack.c.b16 %v462, %v461
      %v518 = vpack.c.b16 %v464, %v463
      %v519 = vpack.c.b16 %v466, %v465
      %v520 = vpack.c.b16 %v468, %v467
      %v521 = vpack.c.b16 %v470, %v469
      %v522 = vpack.c.b16 %v472, %v471
      %v523 = vpack.c.b16 %v474, %v473
      %v524 = vpack.c.b16 %v476, %v475
      %v525 = vpack.c.b16 %v478, %v477
      %v526 = vpack.c.b16 %v480, %v479
      %v527 = vpack.c.b16 %v482, %v481
      %v528 = vpack.c.b16 %v484, %v483
      %v529 = vpack.c.b16 %v486, %v485
      %v530 = vpack.c.b16 %v488, %v487
      %v531 = vpack.c.b16 %v490, %v489
      %v532 = vpack.c.b16 %v492, %v491
      %v533 = vpack.c.b16 %v494, %v493
      %v534 = vpack.c.b16 %v496, %v495
      %v535 = vpack.c.b16 %v498, %v497
      %v536 = vpack.c.b16 %v500, %v499
      %v537 = vpack.c.b16 %v502, %v501
      %v538 = vpack.c.b16 %v504, %v503
      %v539 = vpack.c.b16 %v506, %v505
      %v540 = vpack.c.b16 %v508, %v507
      %573 = vmatprep.subr.bf16.mxu0 0
      %574 = vmatpush1.bf16.msra.mxu0 %v509
      %575 = vmatprep.subr.bf16.mxu0 0
      %576 = vmatpush1.bf16.msra.mxu0 %v510
      %577 = vmatprep.subr.bf16.mxu0 0
      %578 = vmatpush1.bf16.msra.mxu0 %v511
      %579 = vmatprep.subr.bf16.mxu0 0
      %580 = vmatpush1.bf16.msra.mxu0 %v512
      %581 = vmatprep.subr.bf16.mxu0 0
      %582 = vmatpush1.bf16.msra.mxu0 %v513
      %583 = vmatprep.subr.bf16.mxu0 0
      %584 = vmatpush1.bf16.msra.mxu0 %v514
      %585 = vmatprep.subr.bf16.mxu0 0
      %586 = vmatpush1.bf16.msra.mxu0 %v515
      %587 = vmatprep.subr.bf16.mxu0 0
      %588 = vmatpush1.bf16.msra.mxu0 %v516
      %589 = vmatprep.subr.bf16.mxu0 0
      %590 = vmatpush1.bf16.msra.mxu0 %v517
      %591 = vmatprep.subr.bf16.mxu0 0
      %592 = vmatpush1.bf16.msra.mxu0 %v518
      %593 = vmatprep.subr.bf16.mxu0 0
      %594 = vmatpush1.bf16.msra.mxu0 %v519
      %595 = vmatprep.subr.bf16.mxu0 0
      %596 = vmatpush1.bf16.msra.mxu0 %v520
      %597 = vmatprep.subr.bf16.mxu0 0
      %598 = vmatpush1.bf16.msra.mxu0 %v521
      %599 = vmatprep.subr.bf16.mxu0 0
      %600 = vmatpush1.bf16.msra.mxu0 %v522
      %601 = vmatprep.subr.bf16.mxu0 0
      %602 = vmatpush1.bf16.msra.mxu0 %v523
      %603 = vmatprep.subr.bf16.mxu0 0
      %604 = vmatpush1.bf16.msra.mxu0 %v524
      %605 = vmatprep.mubr.bf16.mxu0 %v374
      %606 = vmatmul.mubr.bf16.gmra.mrb[0].mxu0 %v373
      %v607 = vpop.f32.mrb[0].mxu0
      %v608 = vadd.f32 %v365, %v607
      %v609 = vpop.f32.mrb[0].mxu0
      %v610 = vpop.f32.mrb[0].mxu0
      %v611 = vpop.f32.mrb[0].mxu0
      %612 = vdwg.mxu0
      %613 = vmatprep.subr.bf16.mxu0 0
      %614 = vmatpush1.bf16.msra.mxu0 %v525
      %615 = vmatprep.subr.bf16.mxu0 0
      %616 = vmatpush1.bf16.msra.mxu0 %v526
      %617 = vmatprep.subr.bf16.mxu0 0
      %618 = vmatpush1.bf16.msra.mxu0 %v527
      %619 = vmatprep.subr.bf16.mxu0 0
      %620 = vmatpush1.bf16.msra.mxu0 %v528
      %621 = vmatprep.subr.bf16.mxu0 0
      %622 = vmatpush1.bf16.msra.mxu0 %v529
      %623 = vmatprep.subr.bf16.mxu0 0
      %624 = vmatpush1.bf16.msra.mxu0 %v530
      %625 = vmatprep.subr.bf16.mxu0 0
      %626 = vmatpush1.bf16.msra.mxu0 %v531
      %627 = vmatprep.subr.bf16.mxu0 0
      %628 = vmatpush1.bf16.msra.mxu0 %v532
      %629 = vmatprep.subr.bf16.mxu0 0
      %630 = vmatpush1.bf16.msra.mxu0 %v533
      %631 = vmatprep.subr.bf16.mxu0 0
      %632 = vmatpush1.bf16.msra.mxu0 %v534
      %633 = vmatprep.subr.bf16.mxu0 0
      %634 = vmatpush1.bf16.msra.mxu0 %v535
      %635 = vmatprep.subr.bf16.mxu0 0
      %636 = vmatpush1.bf16.msra.mxu0 %v536
      %637 = vmatprep.subr.bf16.mxu0 0
      %638 = vmatpush1.bf16.msra.mxu0 %v537
      %639 = vmatprep.subr.bf16.mxu0 0
      %640 = vmatpush1.bf16.msra.mxu0 %v538
      %641 = vmatprep.subr.bf16.mxu0 0
      %642 = vmatpush1.bf16.msra.mxu0 %v539
      %643 = vmatprep.subr.bf16.mxu0 0
      %644 = vmatpush1.bf16.msra.mxu0 %v540
      %645 = vmatprep.mubr.bf16.mxu0 %v376
      %646 = vmatmul.mubr.bf16.gmra.mrb[0].mxu0 %v375
      %v647 = vpop.f32.mrb[0].mxu0
      %v648 = vadd.f32 %v608, %v647
      %v649 = vpop.f32.mrb[0].mxu0
      %v650 = vpop.f32.mrb[0].mxu0
      %v651 = vpop.f32.mrb[0].mxu0
      %652 = vdwg.mxu0
      %v653 = vld [vmem:[%s287] sm:$0x1]
      %v654 = vld [vmem:[%s4] sm:$0xf]
      %v655 = vld [vmem:[%s4 + $0x4] sm:$0xf]
      %v656 = vld [vmem:[%s4 + $0x8] sm:$0xf]
      %v657 = vld [vmem:[%s4 + $0xc] sm:$0x3]
      %v658 = vld [vmem:[%s5] sm:$0x1]
      %v663 = vunpack.c.l.b16 %v654
      %v664 = vunpack.c.l.b16 %v655
      %v665 = vunpack.c.l.b16 %v656
      %v666 = vunpack.c.l.b16 %v657
      %v667 = vpack.c.b16 %v664, %v663
      %v668 = vpack.c.b16 %v666, %v665
      %vm670 = vcmask 220160
      %v672 = vsel %vm670, %v653, 0
      %vm674 = vcmask 1044480
      %vm675 = vcmask 1045504
      %v676 = vsel %vm674, 4294967295, 65535
      %v677 = vsel %vm675, %v676, 0
      %v679 = vand.u32 %v668, %v677
      %681 = vmatprep.subr.bf16.mxu0 0
      %682 = vmatpush1.bf16.msra.mxu0 %v667
      %683 = vmatprep.subr.bf16.mxu0 0
      %684 = vmatpush1.bf16.msra.mxu0 %v679
      %685 = vmatprep.subr.bf16.mxu0 0
      %686 = vmatpush1.bf16.msra.mxu0 0
      %687 = vmatprep.subr.bf16.mxu0 0
      %688 = vmatpush1.bf16.msra.mxu0 0
      %689 = vmatprep.subr.bf16.mxu0 0
      %690 = vmatpush1.bf16.msra.mxu0 0
      %691 = vmatprep.subr.bf16.mxu0 0
      %692 = vmatpush1.bf16.msra.mxu0 0
      %693 = vmatprep.subr.bf16.mxu0 0
      %694 = vmatpush1.bf16.msra.mxu0 0
      %695 = vmatprep.subr.bf16.mxu0 0
      %696 = vmatpush1.bf16.msra.mxu0 0
      %697 = vmatprep.subr.bf16.mxu0 0
      %698 = vmatpush1.bf16.msra.mxu0 0
      %699 = vmatprep.subr.bf16.mxu0 0
      %700 = vmatpush1.bf16.msra.mxu0 0
      %701 = vmatprep.subr.bf16.mxu0 0
      %702 = vmatpush1.bf16.msra.mxu0 0
      %703 = vmatprep.subr.bf16.mxu0 0
      %704 = vmatpush1.bf16.msra.mxu0 0
      %705 = vmatprep.subr.bf16.mxu0 0
      %706 = vmatpush1.bf16.msra.mxu0 0
      %707 = vmatprep.subr.bf16.mxu0 0
      %708 = vmatpush1.bf16.msra.mxu0 0
      %709 = vmatprep.subr.bf16.mxu0 0
      %710 = vmatpush1.bf16.msra.mxu0 0
      %711 = vmatprep.subr.bf16.mxu0 0
      %712 = vmatpush1.bf16.msra.mxu0 0
      %713 = vmatprep.mubr.bf16.mxu0 0
      %714 = vmatmul.mubr.bf16.gmra.mrb[0].mxu0 %v672
      %v715 = vpop.f32.mrb[0].mxu0
      %v716 = vadd.f32 %v658, %v715
      %v717 = vpop.f32.mrb[0].mxu0
      %v718 = vpop.f32.mrb[0].mxu0
      %v719 = vpop.f32.mrb[0].mxu0
      %720 = vdwg.mxu0
      %v721 = vld [vmem:[%s6] sm:$0x1]
      %v722 = vadd.f32 %v716, %v721
      %723 = vst [vmem:[%s292] sm:$0x1] %v722
      %724 = vst [vmem:[%s292 + $0x1] sm:$0x7f] 0.0
      %v725 = vld [vmem:[%s6 + $0x8] sm:$0xff]
      %v726 = vadd.f32 %v648, %v725
      %727 = vst [vmem:[%s292 + $0x8] sm:$0xff] %v726
      %p728 = scmp.lt.s32.totalorder %s18, 1
      %s729 = scalar_select %p728, %s18, 1
      %s730 = smul.addr %s729, 2
      %s731 = smul.addr %s730, 8
      %s732 = scalar_lea.vmem %s7, %s731
      // Predicated region
      $region49: #{tmss_forward.3} parent=47 // pred_check
        %p733 = pneg %p193
      $region50: #{tmss_forward.3} parent=47 // pred_check_branch
        %735 = sbr.rel (%p733) target = $region52
      $region51: #{tmss_forward.3} parent=47 // pred_region
        _
      $region52: #{tmss_forward.3} parent=47 // pred_fallthru
        _
    $region48: #{tmss_forward.3} parent=5 // pred_fallthru
      _
    %p736 = scmp.le.s32.totalorder 2, %s13
    // Predicated region
    $region53: #{tmss_forward.3} parent=5 // pred_check
      %p737 = pneg %p736
    $region54: #{tmss_forward.3} parent=5 // pred_check_branch
      %739 = sbr.rel (%p737) target = $region56
    $region55: #{tmss_forward.3} parent=5 // pred_region
      %s740 = ssub.s32 %s13, 2
      // Predicated region
      $region57: #{tmss_forward.3} parent=55 // pred_check
        %p741 = pneg %p199
      $region58: #{tmss_forward.3} parent=55 // pred_check_branch
        %743 = sbr.rel (%p741) target = $region60
      $region59: #{tmss_forward.3} parent=55 // pred_region
        %p744 = scmp.lt.s32.totalorder %s19, 1
        %s745 = scalar_select %p744, %s19, 1
        %s746 = smul.addr %s745, 2
        %s747 = smul.addr %s746, 8
        %s748 = scalar_lea.vmem %s7, %s747
      $region60: #{tmss_forward.3} parent=55 // pred_fallthru
        _
    $region56: #{tmss_forward.3} parent=5 // pred_fallthru
      _
  $region6: #{tmss_forward.3} parent=0 // loop_footer
    %s17 = sadd.s32 1, %s13
  $region7: #{tmss_forward.3} parent=0 // loop_footer_branch
    %12 = sbr.rel target = $region3
  $region8: #{tmss_forward.3} parent=0 // loop_exit
    _

// kernel: tmss_forward.5
$region0: #{tmss_forward.5}
  #allocation0 [shape = 'u32[]', space=smem, size = 0x4, offset = 0x4, fixed_abs, tag = 'smem constant byte address 0x4 - core index']
  #allocation1 [shape = 'u32[144,128]{1,0:T(1,128)}', space=vmem, size = 0x12000, scoped, tag = 'internal scratch']
  %s0 = inlined_call_operand.vmem [shape: f32[2,16,128], index: 0, kind: input, shape index: {}]
  %s1 = inlined_call_operand.vmem [shape: f32[1,128], index: 1, kind: input, shape index: {}]
  %s2 = inlined_call_operand.vmem [shape: f32[1,128], index: 2, kind: input, shape index: {}]
  %s3 = inlined_call_operand.vmem [shape: bf16[128,256], index: 3, kind: input, shape index: {}]
  %s4 = inlined_call_operand.vmem [shape: f32[1,256], index: 4, kind: input, shape index: {}]
  %s5 = inlined_call_operand.vmem [shape: f32[1,256], index: 5, kind: input, shape index: {}]
  %s6 = inlined_call_operand.vmem [shape: f32[1,256], index: 6, kind: input, shape index: {}]
  %s7 = inlined_call_operand.vmem [shape: f32[1,256], index: 7, kind: input, shape index: {}]
  %s8 = inlined_call_operand.vmem [shape: f32[1,256], index: 8, kind: input, shape index: {}]
  %s9 = inlined_call_operand.vmem [shape: bf16[256,128], index: 9, kind: input, shape index: {}]
  %s10 = inlined_call_operand.vmem [shape: f32[1,128], index: 10, kind: input, shape index: {}]
  %s11 = inlined_call_operand.hbm [shape: f32[2,128], index: 11, kind: output, shape index: {}]
  %s12 = sld [smem:[#allocation0]]
  $region54: #{tmss_forward.5} parent=0
    _
  %s14 = ssub.s32 1, %s12
  %s15 = scalar_select 0, %s14, %s12
  $region1: #{tmss_forward.5} parent=0
    #allocation2 [shape = 'u8[1024]{0}', space=vmem, size = 0x400, scoped, tag = 'output window, operand 0, single buffered']
    #allocation3 [shape = 's32[1]{0}', space=sflag, size = 0x4, scoped, tag = 'scoped memory for tmss_forward.5']
    %16 = vsyncpa [#allocation3], 0
    // Predicated region
    $region2: #{tmss_forward.5} parent=1 // pred_check
      _
    $region3: #{tmss_forward.5} parent=1 // pred_check_branch
      %18 = sbr.rel (0) target = $region5
    $region4: #{tmss_forward.5} parent=1 // pred_region
      _
    $region5: #{tmss_forward.5} parent=1 // pred_fallthru
      _
    // Predicated region
    $region6: #{tmss_forward.5} parent=1 // pred_check
      _
    $region7: #{tmss_forward.5} parent=1 // pred_check_branch
      %20 = sbr.rel (0) target = $region9
    $region8: #{tmss_forward.5} parent=1 // pred_region
      _
    $region9: #{tmss_forward.5} parent=1 // pred_fallthru
      _
    // Predicated region
    $region10: #{tmss_forward.5} parent=1 // pred_check
      _
    $region11: #{tmss_forward.5} parent=1 // pred_check_branch
      %22 = sbr.rel (0) target = $region13
    $region12: #{tmss_forward.5} parent=1 // pred_region
      _
    $region13: #{tmss_forward.5} parent=1 // pred_fallthru
      _
    // Predicated region
    $region14: #{tmss_forward.5} parent=1 // pred_check
      _
    $region15: #{tmss_forward.5} parent=1 // pred_check_branch
      %24 = sbr.rel (0) target = $region17
    $region16: #{tmss_forward.5} parent=1 // pred_region
      _
    $region17: #{tmss_forward.5} parent=1 // pred_fallthru
      _
    // Predicated region
    $region18: #{tmss_forward.5} parent=1 // pred_check
      _
    $region19: #{tmss_forward.5} parent=1 // pred_check_branch
      %26 = sbr.rel (0) target = $region21
    $region20: #{tmss_forward.5} parent=1 // pred_region
      _
    $region21: #{tmss_forward.5} parent=1 // pred_fallthru
      _
    // Predicated region
    $region22: #{tmss_forward.5} parent=1 // pred_check
      _
    $region23: #{tmss_forward.5} parent=1 // pred_check_branch
      %28 = sbr.rel (0) target = $region25
    $region24: #{tmss_forward.5} parent=1 // pred_region
      _
    $region25: #{tmss_forward.5} parent=1 // pred_fallthru
      _
    // Predicated region
    $region26: #{tmss_forward.5} parent=1 // pred_check
      _
    $region27: #{tmss_forward.5} parent=1 // pred_check_branch
      %30 = sbr.rel (0) target = $region29
    $region28: #{tmss_forward.5} parent=1 // pred_region
      _
    $region29: #{tmss_forward.5} parent=1 // pred_fallthru
      _
    // Predicated region
    $region30: #{tmss_forward.5} parent=1 // pred_check
      _
    $region31: #{tmss_forward.5} parent=1 // pred_check_branch
      %32 = sbr.rel (0) target = $region33
    $region32: #{tmss_forward.5} parent=1 // pred_region
      _
    $region33: #{tmss_forward.5} parent=1 // pred_fallthru
      _
    // Predicated region
    $region34: #{tmss_forward.5} parent=1 // pred_check
      _
    $region35: #{tmss_forward.5} parent=1 // pred_check_branch
      %34 = sbr.rel (0) target = $region37
    $region36: #{tmss_forward.5} parent=1 // pred_region
      _
    $region37: #{tmss_forward.5} parent=1 // pred_fallthru
      _
    // Predicated region
    $region38: #{tmss_forward.5} parent=1 // pred_check
      _
    $region39: #{tmss_forward.5} parent=1 // pred_check_branch
      %36 = sbr.rel (0) target = $region41
    $region40: #{tmss_forward.5} parent=1 // pred_region
      _
    $region41: #{tmss_forward.5} parent=1 // pred_fallthru
      _
    // Predicated region
    $region42: #{tmss_forward.5} parent=1 // pred_check
      _
    $region43: #{tmss_forward.5} parent=1 // pred_check_branch
      %38 = sbr.rel (0) target = $region45
    $region44: #{tmss_forward.5} parent=1 // pred_region
      _
    $region45: #{tmss_forward.5} parent=1 // pred_fallthru
      _
    %v40 = vld [vmem:[%s0] sm:$0xff]
    %v41 = vld [vmem:[%s0 + $0x8] sm:$0xff]
    %v42 = vld [vmem:[%s0 + $0x10] sm:$0xff]
    %v43 = vld [vmem:[%s0 + $0x18] sm:$0xff]
    %v44 = vld [vmem:[%s1] sm:$0x1]
    %v45 = vld [vmem:[%s2] sm:$0x1]
    %46 = vadd.xlane.f32.xlu0 %v40
    %v47 = vpop.xlane.xlu0 %46
    %48 = vadd.xlane.f32.xlu0 %v41
    %v49 = vpop.xlane.xlu0 %48
    %50 = vadd.xlane.f32.xlu0 %v42
    %v51 = vpop.xlane.xlu0 %50
    %52 = vadd.xlane.f32.xlu0 %v43
    %v53 = vpop.xlane.xlu0 %52
    %v54 = vrcp.pop 128.0
    %v55 = vmul.f32 %v47, %v54
    %v56 = vmul.f32 %v49, %v54
    %v57 = vmul.f32 %v51, %v54
    %v58 = vmul.f32 %v53, %v54
    %v59 = vsub.f32 %v40, %v55
    %v60 = vsub.f32 %v41, %v56
    %v61 = vsub.f32 %v42, %v57
    %v62 = vsub.f32 %v43, %v58
    %v63 = vmul.f32 %v59, %v59
    %v64 = vmul.f32 %v60, %v60
    %v65 = vmul.f32 %v61, %v61
    %v66 = vmul.f32 %v62, %v62
    %67 = vadd.xlane.f32.xlu0 %v63
    %v68 = vpop.xlane.xlu0 %67
    %69 = vadd.xlane.f32.xlu0 %v64
    %v70 = vpop.xlane.xlu0 %69
    %71 = vadd.xlane.f32.xlu0 %v65
    %v72 = vpop.xlane.xlu0 %71
    %73 = vadd.xlane.f32.xlu0 %v66
    %v74 = vpop.xlane.xlu0 %73
    %v75 = vmul.f32 %v68, %v54
    %v76 = vmul.f32 %v70, %v54
    %v77 = vmul.f32 %v72, %v54
    %v78 = vmul.f32 %v74, %v54
    %v79 = vadd.f32 %v75, 1e-05
    %v80 = vadd.f32 %v76, 1e-05
    %v81 = vadd.f32 %v77, 1e-05
    %v82 = vadd.f32 %v78, 1e-05
    %v83 = vrsqrt.pop %v79
    %v84 = vrsqrt.pop %v80
    %v85 = vrsqrt.pop %v81
    %v86 = vrsqrt.pop %v82
    %v87 = vmul.f32 %v59, %v83
    %v88 = vmul.f32 %v60, %v84
    %v89 = vmul.f32 %v61, %v85
    %v90 = vmul.f32 %v62, %v86
    %v92 = vlaneseq
    %v93 = vshrl.u32 %v92, 7
    %v94 = vsub.s32 0, %v93
    %v95 = vrot.slane %v44, %v94
    %v97 = vmul.f32 %v87, %v95
    %v98 = vmul.f32 %v88, %v95
    %v99 = vmul.f32 %v89, %v95
    %v100 = vmul.f32 %v90, %v95
    %v102 = vlaneseq
    %v103 = vshrl.u32 %v102, 7
    %v104 = vsub.s32 0, %v103
    %v105 = vrot.slane %v45, %v104
    %v107 = vadd.f32 %v97, %v105
    %v108 = vadd.f32 %v98, %v105
    %v109 = vadd.f32 %v99, %v105
    %v110 = vadd.f32 %v100, %v105
    %v111 = vadd.f32 %v107, 0.0
    %v112 = vadd.f32 %v109, 0.0
    %v113 = vrot.slane %v108, 4
    %v114 = vadd.f32 %v108, %v113
    %v115 = vrot.slane %v114, 2
    %v116 = vadd.f32 %v114, %v115
    %v117 = vrot.slane %v116, 1
    %v118 = vadd.f32 %v116, %v117
    %v119 = vrot.slane %v110, 4
    %v120 = vadd.f32 %v110, %v119
    %v121 = vrot.slane %v120, 2
    %v122 = vadd.f32 %v120, %v121
    %v123 = vrot.slane %v122, 1
    %v124 = vadd.f32 %v122, %v123
    %v125 = vadd.f32 %v111, %v118
    %v126 = vadd.f32 %v112, %v124
    %v127 = vmul.f32 %v125, 0.11111111
    %v128 = vmul.f32 %v126, 0.11111111
    %v129 = vpack.c.bf16 %v127, %v127
    %v130 = vpack.c.bf16 %v128, %v128
    %v131 = vld [vmem:[%s3] sm:$0xff]
    %v132 = vld [vmem:[%s3 + $0x8] sm:$0xff]
    %v133 = vld [vmem:[%s3 + $0x10] sm:$0xff]
    %v134 = vld [vmem:[%s3 + $0x18] sm:$0xff]
    %v135 = vld [vmem:[%s3 + $0x20] sm:$0xff]
    %v136 = vld [vmem:[%s3 + $0x28] sm:$0xff]
    %v137 = vld [vmem:[%s3 + $0x30] sm:$0xff]
    %v138 = vld [vmem:[%s3 + $0x38] sm:$0xff]
    %v139 = vld [vmem:[%s3 + $0x40] sm:$0xff]
    %v140 = vld [vmem:[%s3 + $0x48] sm:$0xff]
    %v141 = vld [vmem:[%s3 + $0x50] sm:$0xff]
    %v142 = vld [vmem:[%s3 + $0x58] sm:$0xff]
    %v143 = vld [vmem:[%s3 + $0x60] sm:$0xff]
    %v144 = vld [vmem:[%s3 + $0x68] sm:$0xff]
    %v145 = vld [vmem:[%s3 + $0x70] sm:$0xff]
    %v146 = vld [vmem:[%s3 + $0x78] sm:$0xff]
    %v147 = vld [vmem:[%s4] sm:$0x3]
    %v149 = vlaneseq
    %v150 = vshrl.u32 %v149, 7
    %v151 = vsub.s32 0, %v150
    %v152 = vrot.slane %v147, %v151
    %v153 = vlaneseq
    %v154 = vshrl.u32 %v153, 7
    %v155 = vsub.s32 1, %v154
    %v156 = vrot.slane %v147, %v155
    %v161 = vunpack.c.l.b16 %v129
    %v162 = vunpack.c.l.b16 %v130
    %v163 = vrot.slane %v162, 7
    %vm164 = vcmask 1041409
    %v165 = vsel %vm164, %v163, %v161
    %v166 = vpack.c.b16 %v165, %v165
    %v184 = vunpack.c.l.b16 %v131
    %v185 = vunpack.c.h.b16 %v131
    %v186 = vunpack.c.l.b16 %v132
    %v187 = vunpack.c.h.b16 %v132
    %v188 = vunpack.c.l.b16 %v133
    %v189 = vunpack.c.h.b16 %v133
    %v190 = vunpack.c.l.b16 %v134
    %v191 = vunpack.c.h.b16 %v134
    %v192 = vunpack.c.l.b16 %v135
    %v193 = vunpack.c.h.b16 %v135
    %v194 = vunpack.c.l.b16 %v136
    %v195 = vunpack.c.h.b16 %v136
    %v196 = vunpack.c.l.b16 %v137
    %v197 = vunpack.c.h.b16 %v137
    %v198 = vunpack.c.l.b16 %v138
    %v199 = vunpack.c.h.b16 %v138
    %v200 = vunpack.c.l.b16 %v139
    %v201 = vunpack.c.h.b16 %v139
    %v202 = vunpack.c.l.b16 %v140
    %v203 = vunpack.c.h.b16 %v140
    %v204 = vunpack.c.l.b16 %v141
    %v205 = vunpack.c.h.b16 %v141
    %v206 = vunpack.c.l.b16 %v142
    %v207 = vunpack.c.h.b16 %v142
    %v208 = vunpack.c.l.b16 %v143
    %v209 = vunpack.c.h.b16 %v143
    %v210 = vunpack.c.l.b16 %v144
    %v211 = vunpack.c.h.b16 %v144
    %v212 = vunpack.c.l.b16 %v145
    %v213 = vunpack.c.h.b16 %v145
    %v214 = vunpack.c.l.b16 %v146
    %v215 = vunpack.c.h.b16 %v146
    %v216 = vpack.c.b16 %v186, %v184
    %v217 = vpack.c.b16 %v187, %v185
    %v218 = vpack.c.b16 %v190, %v188
    %v219 = vpack.c.b16 %v191, %v189
    %v220 = vpack.c.b16 %v194, %v192
    %v221 = vpack.c.b16 %v195, %v193
    %v222 = vpack.c.b16 %v198, %v196
    %v223 = vpack.c.b16 %v199, %v197
    %v224 = vpack.c.b16 %v202, %v200
    %v225 = vpack.c.b16 %v203, %v201
    %v226 = vpack.c.b16 %v206, %v204
    %v227 = vpack.c.b16 %v207, %v205
    %v228 = vpack.c.b16 %v210, %v208
    %v229 = vpack.c.b16 %v211, %v209
    %v230 = vpack.c.b16 %v214, %v212
    %v231 = vpack.c.b16 %v215, %v213
    %248 = vmatprep.subr.bf16.mxu0 %v217
    %249 = vmatpush1.bf16.msra.mxu0 %v216
    %250 = vmatprep.subr.bf16.mxu0 %v219
    %251 = vmatpush1.bf16.msra.mxu0 %v218
    %252 = vmatprep.subr.bf16.mxu0 %v221
    %253 = vmatpush1.bf16.msra.mxu0 %v220
    %254 = vmatprep.subr.bf16.mxu0 %v223
    %255 = vmatpush1.bf16.msra.mxu0 %v222
    %256 = vmatprep.subr.bf16.mxu0 %v225
    %257 = vmatpush1.bf16.msra.mxu0 %v224
    %258 = vmatprep.subr.bf16.mxu0 %v227
    %259 = vmatpush1.bf16.msra.mxu0 %v226
    %260 = vmatprep.subr.bf16.mxu0 %v229
    %261 = vmatpush1.bf16.msra.mxu0 %v228
    %262 = vmatprep.subr.bf16.mxu0 %v231
    %263 = vmatpush1.bf16.msra.mxu0 %v230
    %264 = vmatprep.subr.bf16.mxu0 0
    %265 = vmatpush1.bf16.msra.mxu0 0
    %266 = vmatprep.subr.bf16.mxu0 0
    %267 = vmatpush1.bf16.msra.mxu0 0
    %268 = vmatprep.subr.bf16.mxu0 0
    %269 = vmatpush1.bf16.msra.mxu0 0
    %270 = vmatprep.subr.bf16.mxu0 0
    %271 = vmatpush1.bf16.msra.mxu0 0
    %272 = vmatprep.subr.bf16.mxu0 0
    %273 = vmatpush1.bf16.msra.mxu0 0
    %274 = vmatprep.subr.bf16.mxu0 0
    %275 = vmatpush1.bf16.msra.mxu0 0
    %276 = vmatprep.subr.bf16.mxu0 0
    %277 = vmatpush1.bf16.msra.mxu0 0
    %278 = vmatprep.subr.bf16.mxu0 0
    %279 = vmatpush1.bf16.msra.mxu0 0
    %280 = vmatprep.mubr.bf16.mxu0 0
    %281 = vmatmul.mubr.bf16.gmra.mrb[0].mxu0 %v166
    %v282 = vpop.f32.mrb[0].mxu0
    %v283 = vadd.f32 %v152, %v282
    %v284 = vpop.f32.mrb[0].mxu0
    %v285 = vadd.f32 %v156, %v284
    %v286 = vpop.f32.mrb[0].mxu0
    %v287 = vpop.f32.mrb[0].mxu0
    %288 = vdwg.mxu0
    %v289 = vld [vmem:[%s7] sm:$0x3]
    %v291 = vlaneseq
    %v292 = vshrl.u32 %v291, 7
    %v293 = vsub.s32 0, %v292
    %v294 = vrot.slane %v289, %v293
    %v295 = vlaneseq
    %v296 = vshrl.u32 %v295, 7
    %v297 = vsub.s32 1, %v296
    %v298 = vrot.slane %v289, %v297
    %v301 = vsub.f32 %v283, %v294
    %v302 = vsub.f32 %v285, %v298
    %v303 = vld [vmem:[%s8] sm:$0x3]
    %v304 = vadd.f32 %v303, 1e-05
    %v305 = vrsqrt.pop %v304
    %v307 = vlaneseq
    %v308 = vshrl.u32 %v307, 7
    %v309 = vsub.s32 0, %v308
    %v310 = vrot.slane %v305, %v309
    %v311 = vlaneseq
    %v312 = vshrl.u32 %v311, 7
    %v313 = vsub.s32 1, %v312
    %v314 = vrot.slane %v305, %v313
    %v317 = vmul.f32 %v301, %v310
    %v318 = vmul.f32 %v302, %v314
    %v319 = vld [vmem:[%s5] sm:$0x3]
    %v321 = vlaneseq
    %v322 = vshrl.u32 %v321, 7
    %v323 = vsub.s32 0, %v322
    %v324 = vrot.slane %v319, %v323
    %v325 = vlaneseq
    %v326 = vshrl.u32 %v325, 7
    %v327 = vsub.s32 1, %v326
    %v328 = vrot.slane %v319, %v327
    %v331 = vmul.f32 %v317, %v324
    %v332 = vmul.f32 %v318, %v328
    %v333 = vld [vmem:[%s6] sm:$0x3]
    %v335 = vlaneseq
    %v336 = vshrl.u32 %v335, 7
    %v337 = vsub.s32 0, %v336
    %v338 = vrot.slane %v333, %v337
    %v339 = vlaneseq
    %v340 = vshrl.u32 %v339, 7
    %v341 = vsub.s32 1, %v340
    %v342 = vrot.slane %v333, %v341
    %v345 = vadd.f32 %v331, %v338
    %v346 = vadd.f32 %v332, %v342
    %v347 = vmax.f32 %v345, 0.0
    %v348 = vmax.f32 %v346, 0.0
    %v349 = vpack.c.bf16 %v347, %v347
    %v350 = vpack.c.bf16 %v348, %v348
    %v351 = vld [vmem:[%s9] sm:$0xf]
    %v352 = vld [vmem:[%s9 + $0x4] sm:$0xf]
    %v353 = vld [vmem:[%s9 + $0x8] sm:$0xf]
    %v354 = vld [vmem:[%s9 + $0xc] sm:$0xf]
    %v355 = vld [vmem:[%s9 + $0x10] sm:$0xf]
    %v356 = vld [vmem:[%s9 + $0x14] sm:$0xf]
    %v357 = vld [vmem:[%s9 + $0x18] sm:$0xf]
    %v358 = vld [vmem:[%s9 + $0x1c] sm:$0xf]
    %v359 = vld [vmem:[%s9 + $0x20] sm:$0xf]
    %v360 = vld [vmem:[%s9 + $0x24] sm:$0xf]
    %v361 = vld [vmem:[%s9 + $0x28] sm:$0xf]
    %v362 = vld [vmem:[%s9 + $0x2c] sm:$0xf]
    %v363 = vld [vmem:[%s9 + $0x30] sm:$0xf]
    %v364 = vld [vmem:[%s9 + $0x34] sm:$0xf]
    %v365 = vld [vmem:[%s9 + $0x38] sm:$0xf]
    %v366 = vld [vmem:[%s9 + $0x3c] sm:$0xf]
    %v367 = vld [vmem:[%s9 + $0x40] sm:$0xf]
    %v368 = vld [vmem:[%s9 + $0x44] sm:$0xf]
    %v369 = vld [vmem:[%s9 + $0x48] sm:$0xf]
    %v370 = vld [vmem:[%s9 + $0x4c] sm:$0xf]
    %v371 = vld [vmem:[%s9 + $0x50] sm:$0xf]
    %v372 = vld [vmem:[%s9 + $0x54] sm:$0xf]
    %v373 = vld [vmem:[%s9 + $0x58] sm:$0xf]
    %v374 = vld [vmem:[%s9 + $0x5c] sm:$0xf]
    %v375 = vld [vmem:[%s9 + $0x60] sm:$0xf]
    %v376 = vld [vmem:[%s9 + $0x64] sm:$0xf]
    %v377 = vld [vmem:[%s9 + $0x68] sm:$0xf]
    %v378 = vld [vmem:[%s9 + $0x6c] sm:$0xf]
    %v379 = vld [vmem:[%s9 + $0x70] sm:$0xf]
    %v380 = vld [vmem:[%s9 + $0x74] sm:$0xf]
    %v381 = vld [vmem:[%s9 + $0x78] sm:$0xf]
    %v382 = vld [vmem:[%s9 + $0x7c] sm:$0xf]
    %v383 = vld [vmem:[%s10] sm:$0x1]
    %v385 = vlaneseq
    %v386 = vshrl.u32 %v385, 7
    %v387 = vsub.s32 0, %v386
    %v388 = vrot.slane %v383, %v387
    %v422 = vunpack.c.l.b16 %v351
    %v423 = vunpack.c.l.b16 %v352
    %v424 = vunpack.c.l.b16 %v353
    %v425 = vunpack.c.l.b16 %v354
    %v426 = vunpack.c.l.b16 %v355
    %v427 = vunpack.c.l.b16 %v356
    %v428 = vunpack.c.l.b16 %v357
    %v429 = vunpack.c.l.b16 %v358
    %v430 = vunpack.c.l.b16 %v359
    %v431 = vunpack.c.l.b16 %v360
    %v432 = vunpack.c.l.b16 %v361
    %v433 = vunpack.c.l.b16 %v362
    %v434 = vunpack.c.l.b16 %v363
    %v435 = vunpack.c.l.b16 %v364
    %v436 = vunpack.c.l.b16 %v365
    %v437 = vunpack.c.l.b16 %v366
    %v438 = vunpack.c.l.b16 %v367
    %v439 = vunpack.c.l.b16 %v368
    %v440 = vunpack.c.l.b16 %v369
    %v441 = vunpack.c.l.b16 %v370
    %v442 = vunpack.c.l.b16 %v371
    %v443 = vunpack.c.l.b16 %v372
    %v444 = vunpack.c.l.b16 %v373
    %v445 = vunpack.c.l.b16 %v374
    %v446 = vunpack.c.l.b16 %v375
    %v447 = vunpack.c.l.b16 %v376
    %v448 = vunpack.c.l.b16 %v377
    %v449 = vunpack.c.l.b16 %v378
    %v450 = vunpack.c.l.b16 %v379
    %v451 = vunpack.c.l.b16 %v380
    %v452 = vunpack.c.l.b16 %v381
    %v453 = vunpack.c.l.b16 %v382
    %v454 = vpack.c.b16 %v423, %v422
    %v455 = vpack.c.b16 %v425, %v424
    %v456 = vpack.c.b16 %v427, %v426
    %v457 = vpack.c.b16 %v429, %v428
    %v458 = vpack.c.b16 %v431, %v430
    %v459 = vpack.c.b16 %v433, %v432
    %v460 = vpack.c.b16 %v435, %v434
    %v461 = vpack.c.b16 %v437, %v436
    %v462 = vpack.c.b16 %v439, %v438
    %v463 = vpack.c.b16 %v441, %v440
    %v464 = vpack.c.b16 %v443, %v442
    %v465 = vpack.c.b16 %v445, %v444
    %v466 = vpack.c.b16 %v447, %v446
    %v467 = vpack.c.b16 %v449, %v448
    %v468 = vpack.c.b16 %v451, %v450
    %v469 = vpack.c.b16 %v453, %v452
    %486 = vmatprep.subr.bf16.mxu0 0
    %487 = vmatpush1.bf16.msra.mxu0 %v454
    %488 = vmatprep.subr.bf16.mxu0 0
    %489 = vmatpush1.bf16.msra.mxu0 %v455
    %490 = vmatprep.subr.bf16.mxu0 0
    %491 = vmatpush1.bf16.msra.mxu0 %v456
    %492 = vmatprep.subr.bf16.mxu0 0
    %493 = vmatpush1.bf16.msra.mxu0 %v457
    %494 = vmatprep.subr.bf16.mxu0 0
    %495 = vmatpush1.bf16.msra.mxu0 %v458
    %496 = vmatprep.subr.bf16.mxu0 0
    %497 = vmatpush1.bf16.msra.mxu0 %v459
    %498 = vmatprep.subr.bf16.mxu0 0
    %499 = vmatpush1.bf16.msra.mxu0 %v460
    %500 = vmatprep.subr.bf16.mxu0 0
    %501 = vmatpush1.bf16.msra.mxu0 %v461
    %502 = vmatprep.subr.bf16.mxu0 0
    %503 = vmatpush1.bf16.msra.mxu0 %v462
    %504 = vmatprep.subr.bf16.mxu0 0
    %505 = vmatpush1.bf16.msra.mxu0 %v463
    %506 = vmatprep.subr.bf16.mxu0 0
    %507 = vmatpush1.bf16.msra.mxu0 %v464
    %508 = vmatprep.subr.bf16.mxu0 0
    %509 = vmatpush1.bf16.msra.mxu0 %v465
    %510 = vmatprep.subr.bf16.mxu0 0
    %511 = vmatpush1.bf16.msra.mxu0 %v466
    %512 = vmatprep.subr.bf16.mxu0 0
    %513 = vmatpush1.bf16.msra.mxu0 %v467
    %514 = vmatprep.subr.bf16.mxu0 0
    %515 = vmatpush1.bf16.msra.mxu0 %v468
    %516 = vmatprep.subr.bf16.mxu0 0
    %517 = vmatpush1.bf16.msra.mxu0 %v469
    %518 = vmatprep.mubr.bf16.mxu0 %v350
    %519 = vmatmul.mubr.bf16.gmra.mrb[0].mxu0 %v349
    %v520 = vpop.f32.mrb[0].mxu0
    %v521 = vadd.f32 %v388, %v520
    %v522 = vpop.f32.mrb[0].mxu0
    %v523 = vpop.f32.mrb[0].mxu0
    %v524 = vpop.f32.mrb[0].mxu0
    %525 = vdwg.mxu0
    %526 = vst [vmem:[#allocation2] sm:$0x3] %v521
    // Predicated region
    $region46: #{tmss_forward.5} parent=1 // pred_check
      _
    $region47: #{tmss_forward.5} parent=1 // pred_check_branch
      %528 = sbr.rel (0) target = $region49
    $region48: #{tmss_forward.5} parent=1 // pred_region
      %s530 = ssub.s32 32, 32
      %531 = vsyncadd [#allocation3], %s530
      %s533 = sshll.u32 [#allocation2], 4
      %s534 = int_to_ptr.vmem [resolvable:$true] %s533
      %536 = dma.vmem_to_hbm [thread:$0]  %s534, 32, %s11, [#allocation3]
    $region49: #{tmss_forward.5} parent=1 // pred_fallthru
      _
    // Predicated region
    $region50: #{tmss_forward.5} parent=1 // pred_check
      _
    $region51: #{tmss_forward.5} parent=1 // pred_check_branch
      %538 = sbr.rel (0) target = $region53
    $region52: #{tmss_forward.5} parent=1 // pred_region
      %539 = dma.done [#allocation3], 32
    $region53: #{tmss_forward.5} parent=1 // pred_fallthru
      _
    %540 = vsyncpa [#allocation3], 1

// kernel: tmss_forward.4
$region0: #{tmss_forward.4}
  #allocation0 [shape = 'u32[]', space=smem, size = 0x4, offset = 0x4, fixed_abs, tag = 'smem constant byte address 0x4 - core index']
  #allocation1 [shape = 'u32[144,128]{1,0:T(1,128)}', space=vmem, size = 0x12000, scoped, tag = 'internal scratch']
  %s0 = inlined_call_operand.vmem [shape: f32[2,16,128], index: 0, kind: input, shape index: {}]
  %s1 = inlined_call_operand.vmem [shape: f32[12,1,128], index: 1, kind: input, shape index: {}]
  %s2 = inlined_call_operand.vmem [shape: f32[12,1,128], index: 2, kind: input, shape index: {}]
  %s3 = inlined_call_operand.vmem [shape: bf16[12,4,128,32], index: 3, kind: input, shape index: {}]
  %s4 = inlined_call_operand.vmem [shape: bf16[12,4,128,32], index: 4, kind: input, shape index: {}]
  %s5 = inlined_call_operand.vmem [shape: bf16[12,4,128,32], index: 5, kind: input, shape index: {}]
  %s6 = inlined_call_operand.vmem [shape: bf16[12,4,32,128], index: 6, kind: input, shape index: {}]
  %s7 = inlined_call_operand.vmem [shape: f32[12,1,128], index: 7, kind: input, shape index: {}]
  %s8 = inlined_call_operand.vmem [shape: f32[12,1,128], index: 8, kind: input, shape index: {}]
  %s9 = inlined_call_operand.vmem [shape: f32[12,1,128], index: 9, kind: input, shape index: {}]
  %s10 = inlined_call_operand.vmem [shape: bf16[12,128,256], index: 10, kind: input, shape index: {}]
  %s11 = inlined_call_operand.vmem [shape: f32[12,1,256], index: 11, kind: input, shape index: {}]
  %s12 = inlined_call_operand.vmem [shape: bf16[12,256,128], index: 12, kind: input, shape index: {}]
  %s13 = inlined_call_operand.vmem [shape: f32[12,1,128], index: 13, kind: input, shape index: {}]
  %s14 = inlined_call_operand.vmem [shape: f32[2,16,128], index: 14, kind: output, shape index: {}]
  %s15 = sld [smem:[#allocation0]]
  $region77: #{tmss_forward.4} parent=0
    _
  %s17 = ssub.s32 1, %s15
  %s18 = scalar_select 0, %s17, %s15
  // Predicated region
  $region2: #{tmss_forward.4} parent=0 // pred_check
    _
  $region3: #{tmss_forward.4} parent=0 // pred_check_branch
    %20 = sbr.rel (0) target = $region5
  $region4: #{tmss_forward.4} parent=0 // pred_region
    _
  $region5: #{tmss_forward.4} parent=0 // pred_fallthru
    _
  // Predicated region
  $region6: #{tmss_forward.4} parent=0 // pred_check
    _
  $region7: #{tmss_forward.4} parent=0 // pred_check_branch
    %22 = sbr.rel (0) target = $region9
  $region8: #{tmss_forward.4} parent=0 // pred_region
    _
  $region9: #{tmss_forward.4} parent=0 // pred_fallthru
    _
  // Predicated region
  $region10: #{tmss_forward.4} parent=0 // pred_check
    _
  $region11: #{tmss_forward.4} parent=0 // pred_check_branch
    %24 = sbr.rel (0) target = $region13
  $region12: #{tmss_forward.4} parent=0 // pred_region
    _
  $region13: #{tmss_forward.4} parent=0 // pred_fallthru
    _
  // Predicated region
  $region14: #{tmss_forward.4} parent=0 // pred_check
    _
  $region15: #{tmss_forward.4} parent=0 // pred_check_branch
    %26 = sbr.rel (0) target = $region17
  $region16: #{tmss_forward.4} parent=0 // pred_region
    _
  $region17: #{tmss_forward.4} parent=0 // pred_fallthru
    _
  // Predicated region
  $region18: #{tmss_forward.4} parent=0 // pred_check
    _
  $region19: #{tmss_forward.4} parent=0 // pred_check_branch
    %28 = sbr.rel (0) target = $region21
  $region20: #{tmss_forward.4} parent=0 // pred_region
    _
  $region21: #{tmss_forward.4} parent=0 // pred_fallthru
    _
  // Predicated region
  $region22: #{tmss_forward.4} parent=0 // pred_check
    _
  $region23: #{tmss_forward.4} parent=0 // pred_check_branch
    %30 = sbr.rel (0) target = $region25
  $region24: #{tmss_forward.4} parent=0 // pred_region
    _
  $region25: #{tmss_forward.4} parent=0 // pred_fallthru
    _
  // Predicated region
  $region26: #{tmss_forward.4} parent=0 // pred_check
    _
  $region27: #{tmss_forward.4} parent=0 // pred_check_branch
    %32 = sbr.rel (0) target = $region29
  $region28: #{tmss_forward.4} parent=0 // pred_region
    _
  $region29: #{tmss_forward.4} parent=0 // pred_fallthru
    _
  // Predicated region
  $region30: #{tmss_forward.4} parent=0 // pred_check
    _
  $region31: #{tmss_forward.4} parent=0 // pred_check_branch
    %34 = sbr.rel (0) target = $region33
  $region32: #{tmss_forward.4} parent=0 // pred_region
    _
  $region33: #{tmss_forward.4} parent=0 // pred_fallthru
    _
  // Predicated region
  $region34: #{tmss_forward.4} parent=0 // pred_check
    _
  $region35: #{tmss_forward.4} parent=0 // pred_check_branch
    %36 = sbr.rel (0) target = $region37
  $region36: #{tmss_forward.4} parent=0 // pred_region
    _
  $region37: #{tmss_forward.4} parent=0 // pred_fallthru
    _
  // Predicated region
  $region38: #{tmss_forward.4} parent=0 // pred_check
    _
  $region39: #{tmss_forward.4} parent=0 // pred_check_branch
    %38 = sbr.rel (0) target = $region41
  $region40: #{tmss_forward.4} parent=0 // pred_region
    _
  $region41: #{tmss_forward.4} parent=0 // pred_fallthru
    _
  // Predicated region
  $region42: #{tmss_forward.4} parent=0 // pred_check
    _
  $region43: #{tmss_forward.4} parent=0 // pred_check_branch
    %40 = sbr.rel (0) target = $region45
  $region44: #{tmss_forward.4} parent=0 // pred_region
    _
  $region45: #{tmss_forward.4} parent=0 // pred_fallthru
    _
  // Predicated region
  $region46: #{tmss_forward.4} parent=0 // pred_check
    _
  $region47: #{tmss_forward.4} parent=0 // pred_check_branch
    %42 = sbr.rel (0) target = $region49
  $region48: #{tmss_forward.4} parent=0 // pred_region
    _
  $region49: #{tmss_forward.4} parent=0 // pred_fallthru
    _
  // Predicated region
  $region50: #{tmss_forward.4} parent=0 // pred_check
    _
  $region51: #{tmss_forward.4} parent=0 // pred_check_branch
    %44 = sbr.rel (0) target = $region53
  $region52: #{tmss_forward.4} parent=0 // pred_region
    _
  $region53: #{tmss_forward.4} parent=0 // pred_fallthru
    _
  // Predicated region
  $region54: #{tmss_forward.4} parent=0 // pred_check
    _
  $region55: #{tmss_forward.4} parent=0 // pred_check_branch
    %46 = sbr.rel (0) target = $region57
  $region56: #{tmss_forward.4} parent=0 // pred_region
    _
  $region57: #{tmss_forward.4} parent=0 // pred_fallthru
    _
  %p48 = scmp.eq.s32.totalorder 0, 0
  // Predicated region
  $region58: #{tmss_forward.4} parent=0 // pred_check
    %p49 = pneg %p48
  $region59: #{tmss_forward.4} parent=0 // pred_check_branch
    %51 = sbr.rel (%p49) target = $region61
  $region60: #{tmss_forward.4} parent=0 // pred_region
    %v52 = vld [vmem:[%s0] sm:$0xff]
    %v53 = vld [vmem:[%s0 + $0x8] sm:$0xff]
    %v54 = vld [vmem:[%s0 + $0x10] sm:$0xff]
    %v55 = vld [vmem:[%s0 + $0x18] sm:$0xff]
    %56 = vst [vmem:[%s14] sm:$0xff] %v52
    %57 = vst [vmem:[%s14 + $0x8] sm:$0xff] %v53
    %58 = vst [vmem:[%s14 + $0x10] sm:$0xff] %v54
    %59 = vst [vmem:[%s14 + $0x18] sm:$0xff] %v55
  $region61: #{tmss_forward.4} parent=0 // pred_fallthru
    _
  %v60 = vlaneseq
  %v61 = vand.u32 %v60, 127
  %vm62 = vcmp.eq.s32.totalorder %v61, 0
  %vm63 = vcmp.ge.s32.totalorder %v61, 8
  %vm64 = vcmp.lt.s32.totalorder %v61, 16
  %vm65 = vmand %vm63, %vm64
  %vm66 = vmor %vm62, %vm65
  %v67 = vsel %vm66, 0.0, -1e+30
  loop: start=0, step=1, limit=12
  $region62: #{tmss_forward.4} parent=0 // loop_pre_header
    _
  $region63: #{tmss_forward.4} parent=0 // loop_header
    %s69 = sphi 0, %s73
    %p70 = scmp.ge.s32.totalorder %s69, 12
  $region64: #{tmss_forward.4} parent=0 // loop_header_branch
    %72 = sbr.rel (%p70) target = $region68
  $region65: #{tmss_forward.4} parent=0 // loop_body
    %v74 = vld [vmem:[%s14] sm:$0xff]
    %v75 = vld [vmem:[%s14 + $0x8] sm:$0xff]
    %v76 = vld [vmem:[%s14 + $0x10] sm:$0xff]
    %v77 = vld [vmem:[%s14 + $0x18] sm:$0xff]
    %s78 = scalar_lea.vmem %s1, %s69
    %v79 = vld [vmem:[%s78] sm:$0x1]
    %s80 = scalar_lea.vmem %s2, %s69
    %v81 = vld [vmem:[%s80] sm:$0x1]
    %82 = vadd.xlane.f32.xlu0 %v74
    %v83 = vpop.xlane.xlu0 %82
    %84 = vadd.xlane.f32.xlu0 %v75
    %v85 = vpop.xlane.xlu0 %84
    %86 = vadd.xlane.f32.xlu0 %v76
    %v87 = vpop.xlane.xlu0 %86
    %88 = vadd.xlane.f32.xlu0 %v77
    %v89 = vpop.xlane.xlu0 %88
    %v90 = vrcp.pop 128.0
    %v91 = vmul.f32 %v83, %v90
    %v92 = vmul.f32 %v85, %v90
    %v93 = vmul.f32 %v87, %v90
    %v94 = vmul.f32 %v89, %v90
    %v95 = vsub.f32 %v74, %v91
    %v96 = vsub.f32 %v75, %v92
    %v97 = vsub.f32 %v76, %v93
    %v98 = vsub.f32 %v77, %v94
    %v99 = vmul.f32 %v95, %v95
    %v100 = vmul.f32 %v96, %v96
    %v101 = vmul.f32 %v97, %v97
    %v102 = vmul.f32 %v98, %v98
    %103 = vadd.xlane.f32.xlu0 %v99
    %v104 = vpop.xlane.xlu0 %103
    %105 = vadd.xlane.f32.xlu0 %v100
    %v106 = vpop.xlane.xlu0 %105
    %107 = vadd.xlane.f32.xlu0 %v101
    %v108 = vpop.xlane.xlu0 %107
    %109 = vadd.xlane.f32.xlu0 %v102
    %v110 = vpop.xlane.xlu0 %109
    %v111 = vmul.f32 %v104, %v90
    %v112 = vmul.f32 %v106, %v90
    %v113 = vmul.f32 %v108, %v90
    %v114 = vmul.f32 %v110, %v90
    %v115 = vadd.f32 %v111, 1e-05
    %v116 = vadd.f32 %v112, 1e-05
    %v117 = vadd.f32 %v113, 1e-05
    %v118 = vadd.f32 %v114, 1e-05
    %v119 = vrsqrt.pop %v115
    %v120 = vrsqrt.pop %v116
    %v121 = vrsqrt.pop %v117
    %v122 = vrsqrt.pop %v118
    %v123 = vmul.f32 %v95, %v119
    %v124 = vmul.f32 %v96, %v120
    %v125 = vmul.f32 %v97, %v121
    %v126 = vmul.f32 %v98, %v122
    %v128 = vlaneseq
    %v129 = vshrl.u32 %v128, 7
    %v130 = vsub.s32 0, %v129
    %v131 = vrot.slane %v79, %v130
    %v133 = vmul.f32 %v123, %v131
    %v134 = vmul.f32 %v124, %v131
    %v135 = vmul.f32 %v125, %v131
    %v136 = vmul.f32 %v126, %v131
    %v138 = vlaneseq
    %v139 = vshrl.u32 %v138, 7
    %v140 = vsub.s32 0, %v139
    %v141 = vrot.slane %v81, %v140
    %v143 = vadd.f32 %v133, %v141
    %v144 = vadd.f32 %v134, %v141
    %v145 = vadd.f32 %v135, %v141
    %v146 = vadd.f32 %v136, %v141
    %v147 = vpack.c.bf16 %v144, %v143
    %v148 = vpack.c.bf16 %v146, %v145
    %s149 = smul.u32 %s69, 64
    %s150 = smul.addr %s149, 4
    %s151 = scalar_lea.vmem %s3, %s150
    %v152 = vld [vmem:[%s151] sm:$0xf]
    %v153 = vld [vmem:[%s151 + $0x4] sm:$0xf]
    %v154 = vld [vmem:[%s151 + $0x8] sm:$0xf]
    %v155 = vld [vmem:[%s151 + $0xc] sm:$0xf]
    %v156 = vld [vmem:[%s151 + $0x10] sm:$0xf]
    %v157 = vld [vmem:[%s151 + $0x14] sm:$0xf]
    %v158 = vld [vmem:[%s151 + $0x18] sm:$0xf]
    %v159 = vld [vmem:[%s151 + $0x1c] sm:$0xf]
    %v160 = vld [vmem:[%s151 + $0x20] sm:$0xf]
    %v161 = vld [vmem:[%s151 + $0x24] sm:$0xf]
    %v162 = vld [vmem:[%s151 + $0x28] sm:$0xf]
    %v163 = vld [vmem:[%s151 + $0x2c] sm:$0xf]
    %v164 = vld [vmem:[%s151 + $0x30] sm:$0xf]
    %v165 = vld [vmem:[%s151 + $0x34] sm:$0xf]
    %v166 = vld [vmem:[%s151 + $0x38] sm:$0xf]
    %v167 = vld [vmem:[%s151 + $0x3c] sm:$0xf]
    %v168 = vld [vmem:[%s151 + $0x40] sm:$0xf]
    %v169 = vld [vmem:[%s151 + $0x44] sm:$0xf]
    %v170 = vld [vmem:[%s151 + $0x48] sm:$0xf]
    %v171 = vld [vmem:[%s151 + $0x4c] sm:$0xf]
    %v172 = vld [vmem:[%s151 + $0x50] sm:$0xf]
    %v173 = vld [vmem:[%s151 + $0x54] sm:$0xf]
    %v174 = vld [vmem:[%s151 + $0x58] sm:$0xf]
    %v175 = vld [vmem:[%s151 + $0x5c] sm:$0xf]
    %v176 = vld [vmem:[%s151 + $0x60] sm:$0xf]
    %v177 = vld [vmem:[%s151 + $0x64] sm:$0xf]
    %v178 = vld [vmem:[%s151 + $0x68] sm:$0xf]
    %v179 = vld [vmem:[%s151 + $0x6c] sm:$0xf]
    %v180 = vld [vmem:[%s151 + $0x70] sm:$0xf]
    %v181 = vld [vmem:[%s151 + $0x74] sm:$0xf]
    %v182 = vld [vmem:[%s151 + $0x78] sm:$0xf]
    %v183 = vld [vmem:[%s151 + $0x7c] sm:$0xf]
    %v184 = vld [vmem:[%s151 + $0x80] sm:$0xf]
    %v185 = vld [vmem:[%s151 + $0x84] sm:$0xf]
    %v186 = vld [vmem:[%s151 + $0x88] sm:$0xf]
    %v187 = vld [vmem:[%s151 + $0x8c] sm:$0xf]
    %v188 = vld [vmem:[%s151 + $0x90] sm:$0xf]
    %v189 = vld [vmem:[%s151 + $0x94] sm:$0xf]
    %v190 = vld [vmem:[%s151 + $0x98] sm:$0xf]
    %v191 = vld [vmem:[%s151 + $0x9c] sm:$0xf]
    %v192 = vld [vmem:[%s151 + $0xa0] sm:$0xf]
    %v193 = vld [vmem:[%s151 + $0xa4] sm:$0xf]
    %v194 = vld [vmem:[%s151 + $0xa8] sm:$0xf]
    %v195 = vld [vmem:[%s151 + $0xac] sm:$0xf]
    %v196 = vld [vmem:[%s151 + $0xb0] sm:$0xf]
    %v197 = vld [vmem:[%s151 + $0xb4] sm:$0xf]
    %v198 = vld [vmem:[%s151 + $0xb8] sm:$0xf]
    %v199 = vld [vmem:[%s151 + $0xbc] sm:$0xf]
    %v200 = vld [vmem:[%s151 + $0xc0] sm:$0xf]
    %v201 = vld [vmem:[%s151 + $0xc4] sm:$0xf]
    %v202 = vld [vmem:[%s151 + $0xc8] sm:$0xf]
    %v203 = vld [vmem:[%s151 + $0xcc] sm:$0xf]
    %v204 = vld [vmem:[%s151 + $0xd0] sm:$0xf]
    %v205 = vld [vmem:[%s151 + $0xd4] sm:$0xf]
    %v206 = vld [vmem:[%s151 + $0xd8] sm:$0xf]
    %v207 = vld [vmem:[%s151 + $0xdc] sm:$0xf]
    %v208 = vld [vmem:[%s151 + $0xe0] sm:$0xf]
    %v209 = vld [vmem:[%s151 + $0xe4] sm:$0xf]
    %v210 = vld [vmem:[%s151 + $0xe8] sm:$0xf]
    %v211 = vld [vmem:[%s151 + $0xec] sm:$0xf]
    %v212 = vld [vmem:[%s151 + $0xf0] sm:$0xf]
    %v213 = vld [vmem:[%s151 + $0xf4] sm:$0xf]
    %v214 = vld [vmem:[%s151 + $0xf8] sm:$0xf]
    %v215 = vld [vmem:[%s151 + $0xfc] sm:$0xf]
    %v232 = vunpack.c.l.b16 %v152
    %v233 = vunpack.c.l.b16 %v153
    %v234 = vunpack.c.l.b16 %v154
    %v235 = vunpack.c.l.b16 %v155
    %v236 = vunpack.c.l.b16 %v156
    %v237 = vunpack.c.l.b16 %v157
    %v238 = vunpack.c.l.b16 %v158
    %v239 = vunpack.c.l.b16 %v159
    %v240 = vunpack.c.l.b16 %v160
    %v241 = vunpack.c.l.b16 %v161
    %v242 = vunpack.c.l.b16 %v162
    %v243 = vunpack.c.l.b16 %v163
    %v244 = vunpack.c.l.b16 %v164
    %v245 = vunpack.c.l.b16 %v165
    %v246 = vunpack.c.l.b16 %v166
    %v247 = vunpack.c.l.b16 %v167
    %v248 = vpack.c.b16 %v233, %v232
    %v249 = vpack.c.b16 %v235, %v234
    %v250 = vpack.c.b16 %v237, %v236
    %v251 = vpack.c.b16 %v239, %v238
    %v252 = vpack.c.b16 %v241, %v240
    %v253 = vpack.c.b16 %v243, %v242
    %v254 = vpack.c.b16 %v245, %v244
    %v255 = vpack.c.b16 %v247, %v246
    %264 = vmatprep.subr.bf16.mxu0 0
    %265 = vmatpush1.bf16.msra.mxu0 %v248
    %266 = vmatprep.subr.bf16.mxu0 0
    %267 = vmatpush1.bf16.msra.mxu0 %v249
    %268 = vmatprep.subr.bf16.mxu0 0
    %269 = vmatpush1.bf16.msra.mxu0 %v250
    %270 = vmatprep.subr.bf16.mxu0 0
    %271 = vmatpush1.bf16.msra.mxu0 %v251
    %272 = vmatprep.subr.bf16.mxu0 0
    %273 = vmatpush1.bf16.msra.mxu0 %v252
    %274 = vmatprep.subr.bf16.mxu0 0
    %275 = vmatpush1.bf16.msra.mxu0 %v253
    %276 = vmatprep.subr.bf16.mxu0 0
    %277 = vmatpush1.bf16.msra.mxu0 %v254
    %278 = vmatprep.subr.bf16.mxu0 0
    %279 = vmatpush1.bf16.msra.mxu0 %v255
    %280 = vmatprep.subr.bf16.mxu0 0
    %281 = vmatpush1.bf16.msra.mxu0 0
    %282 = vmatprep.subr.bf16.mxu0 0
    %283 = vmatpush1.bf16.msra.mxu0 0
    %284 = vmatprep.subr.bf16.mxu0 0
    %285 = vmatpush1.bf16.msra.mxu0 0
    %286 = vmatprep.subr.bf16.mxu0 0
    %287 = vmatpush1.bf16.msra.mxu0 0
    %288 = vmatprep.subr.bf16.mxu0 0
    %289 = vmatpush1.bf16.msra.mxu0 0
    %290 = vmatprep.subr.bf16.mxu0 0
    %291 = vmatpush1.bf16.msra.mxu0 0
    %292 = vmatprep.subr.bf16.mxu0 0
    %293 = vmatpush1.bf16.msra.mxu0 0
    %294 = vmatprep.subr.bf16.mxu0 0
    %295 = vmatpush1.bf16.msra.mxu0 0
    %296 = vmatprep.mubr.bf16.mxu0 0
    %297 = vmatmul.mubr.bf16.gmra.mrb[0].mxu0 %v147
    %v298 = vpop.f32.mrb[0].mxu0
    %v299 = vadd.f32 0.0, %v298
    %v300 = vpop.f32.mrb[0].mxu0
    %v301 = vpop.f32.mrb[0].mxu0
    %v302 = vadd.f32 0.0, %v301
    %v303 = vpop.f32.mrb[0].mxu0
    %304 = vmatprep.mubr.bf16.mxu0 0
    %305 = vmatmul.mubr.bf16.gmra.mrb[0].mxu0 %v148
    %v306 = vpop.f32.mrb[0].mxu0
    %v307 = vadd.f32 0.0, %v306
    %v308 = vpop.f32.mrb[0].mxu0
    %v309 = vpop.f32.mrb[0].mxu0
    %v310 = vadd.f32 0.0, %v309
    %v311 = vpop.f32.mrb[0].mxu0
    %312 = vdwg.mxu0
    %v329 = vunpack.c.l.b16 %v168
    %v330 = vunpack.c.l.b16 %v169
    %v331 = vunpack.c.l.b16 %v170
    %v332 = vunpack.c.l.b16 %v171
    %v333 = vunpack.c.l.b16 %v172
    %v334 = vunpack.c.l.b16 %v173
    %v335 = vunpack.c.l.b16 %v174
    %v336 = vunpack.c.l.b16 %v175
    %v337 = vunpack.c.l.b16 %v176
    %v338 = vunpack.c.l.b16 %v177
    %v339 = vunpack.c.l.b16 %v178
    %v340 = vunpack.c.l.b16 %v179
    %v341 = vunpack.c.l.b16 %v180
    %v342 = vunpack.c.l.b16 %v181
    %v343 = vunpack.c.l.b16 %v182
    %v344 = vunpack.c.l.b16 %v183
    %v345 = vpack.c.b16 %v330, %v329
    %v346 = vpack.c.b16 %v332, %v331
    %v347 = vpack.c.b16 %v334, %v333
    %v348 = vpack.c.b16 %v336, %v335
    %v349 = vpack.c.b16 %v338, %v337
    %v350 = vpack.c.b16 %v340, %v339
    %v351 = vpack.c.b16 %v342, %v341
    %v352 = vpack.c.b16 %v344, %v343
    %361 = vmatprep.subr.bf16.mxu0 0
    %362 = vmatpush1.bf16.msra.mxu0 %v345
    %363 = vmatprep.subr.bf16.mxu0 0
    %364 = vmatpush1.bf16.msra.mxu0 %v346
    %365 = vmatprep.subr.bf16.mxu0 0
    %366 = vmatpush1.bf16.msra.mxu0 %v347
    %367 = vmatprep.subr.bf16.mxu0 0
    %368 = vmatpush1.bf16.msra.mxu0 %v348
    %369 = vmatprep.subr.bf16.mxu0 0
    %370 = vmatpush1.bf16.msra.mxu0 %v349
    %371 = vmatprep.subr.bf16.mxu0 0
    %372 = vmatpush1.bf16.msra.mxu0 %v350
    %373 = vmatprep.subr.bf16.mxu0 0
    %374 = vmatpush1.bf16.msra.mxu0 %v351
    %375 = vmatprep.subr.bf16.mxu0 0
    %376 = vmatpush1.bf16.msra.mxu0 %v352
    %377 = vmatprep.subr.bf16.mxu0 0
    %378 = vmatpush1.bf16.msra.mxu0 0
    %379 = vmatprep.subr.bf16.mxu0 0
    %380 = vmatpush1.bf16.msra.mxu0 0
    %381 = vmatprep.subr.bf16.mxu0 0
    %382 = vmatpush1.bf16.msra.mxu0 0
    %383 = vmatprep.subr.bf16.mxu0 0
    %384 = vmatpush1.bf16.msra.mxu0 0
    %385 = vmatprep.subr.bf16.mxu0 0
    %386 = vmatpush1.bf16.msra.mxu0 0
    %387 = vmatprep.subr.bf16.mxu0 0
    %388 = vmatpush1.bf16.msra.mxu0 0
    %389 = vmatprep.subr.bf16.mxu0 0
    %390 = vmatpush1.bf16.msra.mxu0 0
    %391 = vmatprep.subr.bf16.mxu0 0
    %392 = vmatpush1.bf16.msra.mxu0 0
    %393 = vmatprep.mubr.bf16.mxu0 0
    %394 = vmatmul.mubr.bf16.gmra.mrb[0].mxu0 %v147
    %v395 = vpop.f32.mrb[0].mxu0
    %v396 = vadd.f32 0.0, %v395
    %v397 = vpop.f32.mrb[0].mxu0
    %v398 = vpop.f32.mrb[0].mxu0
    %v399 = vadd.f32 0.0, %v398
    %v400 = vpop.f32.mrb[0].mxu0
    %401 = vmatprep.mubr.bf16.mxu0 0
    %402 = vmatmul.mubr.bf16.gmra.mrb[0].mxu0 %v148
    %v403 = vpop.f32.mrb[0].mxu0
    %v404 = vadd.f32 0.0, %v403
    %v405 = vpop.f32.mrb[0].mxu0
    %v406 = vpop.f32.mrb[0].mxu0
    %v407 = vadd.f32 0.0, %v406
    %v408 = vpop.f32.mrb[0].mxu0
    %409 = vdwg.mxu0
    %v426 = vunpack.c.l.b16 %v184
    %v427 = vunpack.c.l.b16 %v185
    %v428 = vunpack.c.l.b16 %v186
    %v429 = vunpack.c.l.b16 %v187
    %v430 = vunpack.c.l.b16 %v188
    %v431 = vunpack.c.l.b16 %v189
    %v432 = vunpack.c.l.b16 %v190
    %v433 = vunpack.c.l.b16 %v191
    %v434 = vunpack.c.l.b16 %v192
    %v435 = vunpack.c.l.b16 %v193
    %v436 = vunpack.c.l.b16 %v194
    %v437 = vunpack.c.l.b16 %v195
    %v438 = vunpack.c.l.b16 %v196
    %v439 = vunpack.c.l.b16 %v197
    %v440 = vunpack.c.l.b16 %v198
    %v441 = vunpack.c.l.b16 %v199
    %v442 = vpack.c.b16 %v427, %v426
    %v443 = vpack.c.b16 %v429, %v428
    %v444 = vpack.c.b16 %v431, %v430
    %v445 = vpack.c.b16 %v433, %v432
    %v446 = vpack.c.b16 %v435, %v434
    %v447 = vpack.c.b16 %v437, %v436
    %v448 = vpack.c.b16 %v439, %v438
    %v449 = vpack.c.b16 %v441, %v440
    %458 = vmatprep.subr.bf16.mxu0 0
    %459 = vmatpush1.bf16.msra.mxu0 %v442
    %460 = vmatprep.subr.bf16.mxu0 0
    %461 = vmatpush1.bf16.msra.mxu0 %v443
    %462 = vmatprep.subr.bf16.mxu0 0
    %463 = vmatpush1.bf16.msra.mxu0 %v444
    %464 = vmatprep.subr.bf16.mxu0 0
    %465 = vmatpush1.bf16.msra.mxu0 %v445
    %466 = vmatprep.subr.bf16.mxu0 0
    %467 = vmatpush1.bf16.msra.mxu0 %v446
    %468 = vmatprep.subr.bf16.mxu0 0
    %469 = vmatpush1.bf16.msra.mxu0 %v447
    %470 = vmatprep.subr.bf16.mxu0 0
    %471 = vmatpush1.bf16.msra.mxu0 %v448
    %472 = vmatprep.subr.bf16.mxu0 0
    %473 = vmatpush1.bf16.msra.mxu0 %v449
    %474 = vmatprep.subr.bf16.mxu0 0
    %475 = vmatpush1.bf16.msra.mxu0 0
    %476 = vmatprep.subr.bf16.mxu0 0
    %477 = vmatpush1.bf16.msra.mxu0 0
    %478 = vmatprep.subr.bf16.mxu0 0
    %479 = vmatpush1.bf16.msra.mxu0 0
    %480 = vmatprep.subr.bf16.mxu0 0
    %481 = vmatpush1.bf16.msra.mxu0 0
    %482 = vmatprep.subr.bf16.mxu0 0
    %483 = vmatpush1.bf16.msra.mxu0 0
    %484 = vmatprep.subr.bf16.mxu0 0
    %485 = vmatpush1.bf16.msra.mxu0 0
    %486 = vmatprep.subr.bf16.mxu0 0
    %487 = vmatpush1.bf16.msra.mxu0 0
    %488 = vmatprep.subr.bf16.mxu0 0
    %489 = vmatpush1.bf16.msra.mxu0 0
    %490 = vmatprep.mubr.bf16.mxu0 0
    %491 = vmatmul.mubr.bf16.gmra.mrb[0].mxu0 %v147
    %v492 = vpop.f32.mrb[0].mxu0
    %v493 = vadd.f32 0.0, %v492
    %v494 = vpop.f32.mrb[0].mxu0
    %v495 = vpop.f32.mrb[0].mxu0
    %v496 = vadd.f32 0.0, %v495
    %v497 = vpop.f32.mrb[0].mxu0
    %498 = vmatprep.mubr.bf16.mxu0 0
    %499 = vmatmul.mubr.bf16.gmra.mrb[0].mxu0 %v148
    %v500 = vpop.f32.mrb[0].mxu0
    %v501 = vadd.f32 0.0, %v500
    %v502 = vpop.f32.mrb[0].mxu0
    %v503 = vpop.f32.mrb[0].mxu0
    %v504 = vadd.f32 0.0, %v503
    %v505 = vpop.f32.mrb[0].mxu0
    %506 = vdwg.mxu0
    %v523 = vunpack.c.l.b16 %v200
    %v524 = vunpack.c.l.b16 %v201
    %v525 = vunpack.c.l.b16 %v202
    %v526 = vunpack.c.l.b16 %v203
    %v527 = vunpack.c.l.b16 %v204
    %v528 = vunpack.c.l.b16 %v205
    %v529 = vunpack.c.l.b16 %v206
    %v530 = vunpack.c.l.b16 %v207
    %v531 = vunpack.c.l.b16 %v208
    %v532 = vunpack.c.l.b16 %v209
    %v533 = vunpack.c.l.b16 %v210
    %v534 = vunpack.c.l.b16 %v211
    %v535 = vunpack.c.l.b16 %v212
    %v536 = vunpack.c.l.b16 %v213
    %v537 = vunpack.c.l.b16 %v214
    %v538 = vunpack.c.l.b16 %v215
    %v539 = vpack.c.b16 %v524, %v523
    %v540 = vpack.c.b16 %v526, %v525
    %v541 = vpack.c.b16 %v528, %v527
    %v542 = vpack.c.b16 %v530, %v529
    %v543 = vpack.c.b16 %v532, %v531
    %v544 = vpack.c.b16 %v534, %v533
    %v545 = vpack.c.b16 %v536, %v535
    %v546 = vpack.c.b16 %v538, %v537
    %555 = vmatprep.subr.bf16.mxu0 0
    %556 = vmatpush1.bf16.msra.mxu0 %v539
    %557 = vmatprep.subr.bf16.mxu0 0
    %558 = vmatpush1.bf16.msra.mxu0 %v540
    %559 = vmatprep.subr.bf16.mxu0 0
    %560 = vmatpush1.bf16.msra.mxu0 %v541
    %561 = vmatprep.subr.bf16.mxu0 0
    %562 = vmatpush1.bf16.msra.mxu0 %v542
    %563 = vmatprep.subr.bf16.mxu0 0
    %564 = vmatpush1.bf16.msra.mxu0 %v543
    %565 = vmatprep.subr.bf16.mxu0 0
    %566 = vmatpush1.bf16.msra.mxu0 %v544
    %567 = vmatprep.subr.bf16.mxu0 0
    %568 = vmatpush1.bf16.msra.mxu0 %v545
    %569 = vmatprep.subr.bf16.mxu0 0
    %570 = vmatpush1.bf16.msra.mxu0 %v546
    %571 = vmatprep.subr.bf16.mxu0 0
    %572 = vmatpush1.bf16.msra.mxu0 0
    %573 = vmatprep.subr.bf16.mxu0 0
    %574 = vmatpush1.bf16.msra.mxu0 0
    %575 = vmatprep.subr.bf16.mxu0 0
    %576 = vmatpush1.bf16.msra.mxu0 0
    %577 = vmatprep.subr.bf16.mxu0 0
    %578 = vmatpush1.bf16.msra.mxu0 0
    %579 = vmatprep.subr.bf16.mxu0 0
    %580 = vmatpush1.bf16.msra.mxu0 0
    %581 = vmatprep.subr.bf16.mxu0 0
    %582 = vmatpush1.bf16.msra.mxu0 0
    %583 = vmatprep.subr.bf16.mxu0 0
    %584 = vmatpush1.bf16.msra.mxu0 0
    %585 = vmatprep.subr.bf16.mxu0 0
    %586 = vmatpush1.bf16.msra.mxu0 0
    %587 = vmatprep.mubr.bf16.mxu0 0
    %588 = vmatmul.mubr.bf16.gmra.mrb[0].mxu0 %v147
    %v589 = vpop.f32.mrb[0].mxu0
    %v590 = vadd.f32 0.0, %v589
    %v591 = vpop.f32.mrb[0].mxu0
    %v592 = vpop.f32.mrb[0].mxu0
    %v593 = vadd.f32 0.0, %v592
    %v594 = vpop.f32.mrb[0].mxu0
    %595 = vmatprep.mubr.bf16.mxu0 0
    %596 = vmatmul.mubr.bf16.gmra.mrb[0].mxu0 %v148
    %v597 = vpop.f32.mrb[0].mxu0
    %v598 = vadd.f32 0.0, %v597
    %v599 = vpop.f32.mrb[0].mxu0
    %v600 = vpop.f32.mrb[0].mxu0
    %v601 = vadd.f32 0.0, %v600
    %v602 = vpop.f32.mrb[0].mxu0
    %603 = vdwg.mxu0
    %s604 = smul.addr %s149, 4
    %s605 = scalar_lea.vmem %s4, %s604
    %v606 = vld [vmem:[%s605] sm:$0xf]
    %v607 = vld [vmem:[%s605 + $0x4] sm:$0xf]
    %v608 = vld [vmem:[%s605 + $0x8] sm:$0xf]
    %v609 = vld [vmem:[%s605 + $0xc] sm:$0xf]
    %v610 = vld [vmem:[%s605 + $0x10] sm:$0xf]
    %v611 = vld [vmem:[%s605 + $0x14] sm:$0xf]
    %v612 = vld [vmem:[%s605 + $0x18] sm:$0xf]
    %v613 = vld [vmem:[%s605 + $0x1c] sm:$0xf]
    %v614 = vld [vmem:[%s605 + $0x20] sm:$0xf]
    %v615 = vld [vmem:[%s605 + $0x24] sm:$0xf]
    %v616 = vld [vmem:[%s605 + $0x28] sm:$0xf]
    %v617 = vld [vmem:[%s605 + $0x2c] sm:$0xf]
    %v618 = vld [vmem:[%s605 + $0x30] sm:$0xf]
    %v619 = vld [vmem:[%s605 + $0x34] sm:$0xf]
    %v620 = vld [vmem:[%s605 + $0x38] sm:$0xf]
    %v621 = vld [vmem:[%s605 + $0x3c] sm:$0xf]
    %v622 = vld [vmem:[%s605 + $0x40] sm:$0xf]
    %v623 = vld [vmem:[%s605 + $0x44] sm:$0xf]
    %v624 = vld [vmem:[%s605 + $0x48] sm:$0xf]
    %v625 = vld [vmem:[%s605 + $0x4c] sm:$0xf]
    %v626 = vld [vmem:[%s605 + $0x50] sm:$0xf]
    %v627 = vld [vmem:[%s605 + $0x54] sm:$0xf]
    %v628 = vld [vmem:[%s605 + $0x58] sm:$0xf]
    %v629 = vld [vmem:[%s605 + $0x5c] sm:$0xf]
    %v630 = vld [vmem:[%s605 + $0x60] sm:$0xf]
    %v631 = vld [vmem:[%s605 + $0x64] sm:$0xf]
    %v632 = vld [vmem:[%s605 + $0x68] sm:$0xf]
    %v633 = vld [vmem:[%s605 + $0x6c] sm:$0xf]
    %v634 = vld [vmem:[%s605 + $0x70] sm:$0xf]
    %v635 = vld [vmem:[%s605 + $0x74] sm:$0xf]
    %v636 = vld [vmem:[%s605 + $0x78] sm:$0xf]
    %v637 = vld [vmem:[%s605 + $0x7c] sm:$0xf]
    %v638 = vld [vmem:[%s605 + $0x80] sm:$0xf]
    %v639 = vld [vmem:[%s605 + $0x84] sm:$0xf]
    %v640 = vld [vmem:[%s605 + $0x88] sm:$0xf]
    %v641 = vld [vmem:[%s605 + $0x8c] sm:$0xf]
    %v642 = vld [vmem:[%s605 + $0x90] sm:$0xf]
    %v643 = vld [vmem:[%s605 + $0x94] sm:$0xf]
    %v644 = vld [vmem:[%s605 + $0x98] sm:$0xf]
    %v645 = vld [vmem:[%s605 + $0x9c] sm:$0xf]
    %v646 = vld [vmem:[%s605 + $0xa0] sm:$0xf]
    %v647 = vld [vmem:[%s605 + $0xa4] sm:$0xf]
    %v648 = vld [vmem:[%s605 + $0xa8] sm:$0xf]
    %v649 = vld [vmem:[%s605 + $0xac] sm:$0xf]
    %v650 = vld [vmem:[%s605 + $0xb0] sm:$0xf]
    %v651 = vld [vmem:[%s605 + $0xb4] sm:$0xf]
    %v652 = vld [vmem:[%s605 + $0xb8] sm:$0xf]
    %v653 = vld [vmem:[%s605 + $0xbc] sm:$0xf]
    %v654 = vld [vmem:[%s605 + $0xc0] sm:$0xf]
    %v655 = vld [vmem:[%s605 + $0xc4] sm:$0xf]
    %v656 = vld [vmem:[%s605 + $0xc8] sm:$0xf]
    %v657 = vld [vmem:[%s605 + $0xcc] sm:$0xf]
    %v658 = vld [vmem:[%s605 + $0xd0] sm:$0xf]
    %v659 = vld [vmem:[%s605 + $0xd4] sm:$0xf]
    %v660 = vld [vmem:[%s605 + $0xd8] sm:$0xf]
    %v661 = vld [vmem:[%s605 + $0xdc] sm:$0xf]
    %v662 = vld [vmem:[%s605 + $0xe0] sm:$0xf]
    %v663 = vld [vmem:[%s605 + $0xe4] sm:$0xf]
    %v664 = vld [vmem:[%s605 + $0xe8] sm:$0xf]
    %v665 = vld [vmem:[%s605 + $0xec] sm:$0xf]
    %v666 = vld [vmem:[%s605 + $0xf0] sm:$0xf]
    %v667 = vld [vmem:[%s605 + $0xf4] sm:$0xf]
    %v668 = vld [vmem:[%s605 + $0xf8] sm:$0xf]
    %v669 = vld [vmem:[%s605 + $0xfc] sm:$0xf]
    %v686 = vunpack.c.l.b16 %v606
    %v687 = vunpack.c.l.b16 %v607
    %v688 = vunpack.c.l.b16 %v608
    %v689 = vunpack.c.l.b16 %v609
    %v690 = vunpack.c.l.b16 %v610
    %v691 = vunpack.c.l.b16 %v611
    %v692 = vunpack.c.l.b16 %v612
    %v693 = vunpack.c.l.b16 %v613
    %v694 = vunpack.c.l.b16 %v614
    %v695 = vunpack.c.l.b16 %v615
    %v696 = vunpack.c.l.b16 %v616
    %v697 = vunpack.c.l.b16 %v617
    %v698 = vunpack.c.l.b16 %v618
    %v699 = vunpack.c.l.b16 %v619
    %v700 = vunpack.c.l.b16 %v620
    %v701 = vunpack.c.l.b16 %v621
    %v702 = vpack.c.b16 %v687, %v686
    %v703 = vpack.c.b16 %v689, %v688
    %v704 = vpack.c.b16 %v691, %v690
    %v705 = vpack.c.b16 %v693, %v692
    %v706 = vpack.c.b16 %v695, %v694
    %v707 = vpack.c.b16 %v697, %v696
    %v708 = vpack.c.b16 %v699, %v698
    %v709 = vpack.c.b16 %v701, %v700
    %718 = vmatprep.subr.bf16.mxu0 0
    %719 = vmatpush1.bf16.msra.mxu0 %v702
    %720 = vmatprep.subr.bf16.mxu0 0
    %721 = vmatpush1.bf16.msra.mxu0 %v703
    %722 = vmatprep.subr.bf16.mxu0 0
    %723 = vmatpush1.bf16.msra.mxu0 %v704
    %724 = vmatprep.subr.bf16.mxu0 0
    %725 = vmatpush1.bf16.msra.mxu0 %v705
    %726 = vmatprep.subr.bf16.mxu0 0
    %727 = vmatpush1.bf16.msra.mxu0 %v706
    %728 = vmatprep.subr.bf16.mxu0 0
    %729 = vmatpush1.bf16.msra.mxu0 %v707
    %730 = vmatprep.subr.bf16.mxu0 0
    %731 = vmatpush1.bf16.msra.mxu0 %v708
    %732 = vmatprep.subr.bf16.mxu0 0
    %733 = vmatpush1.bf16.msra.mxu0 %v709
    %734 = vmatprep.subr.bf16.mxu0 0
    %735 = vmatpush1.bf16.msra.mxu0 0
    %736 = vmatprep.subr.bf16.mxu0 0
    %737 = vmatpush1.bf16.msra.mxu0 0
    %738 = vmatprep.subr.bf16.mxu0 0
    %739 = vmatpush1.bf16.msra.mxu0 0
    %740 = vmatprep.subr.bf16.mxu0 0
    %741 = vmatpush1.bf16.msra.mxu0 0
    %742 = vmatprep.subr.bf16.mxu0 0
    %743 = vmatpush1.bf16.msra.mxu0 0
    %744 = vmatprep.subr.bf16.mxu0 0
    %745 = vmatpush1.bf16.msra.mxu0 0
    %746 = vmatprep.subr.bf16.mxu0 0
    %747 = vmatpush1.bf16.msra.mxu0 0
    %748 = vmatprep.subr.bf16.mxu0 0
    %749 = vmatpush1.bf16.msra.mxu0 0
    %750 = vmatprep.mubr.bf16.mxu0 0
    %751 = vmatmul.mubr.bf16.gmra.mrb[0].mxu0 %v147
    %v752 = vpop.f32.mrb[0].mxu0
    %v753 = vadd.f32 0.0, %v752
    %v754 = vpop.f32.mrb[0].mxu0
    %v755 = vpop.f32.mrb[0].mxu0
    %v756 = vadd.f32 0.0, %v755
    %v757 = vpop.f32.mrb[0].mxu0
    %758 = vmatprep.mubr.bf16.mxu0 0
    %759 = vmatmul.mubr.bf16.gmra.mrb[0].mxu0 %v148
    %v760 = vpop.f32.mrb[0].mxu0
    %v761 = vadd.f32 0.0, %v760
    %v762 = vpop.f32.mrb[0].mxu0
    %v763 = vpop.f32.mrb[0].mxu0
    %v764 = vadd.f32 0.0, %v763
    %v765 = vpop.f32.mrb[0].mxu0
    %766 = vdwg.mxu0
    %v783 = vunpack.c.l.b16 %v622
    %v784 = vunpack.c.l.b16 %v623
    %v785 = vunpack.c.l.b16 %v624
    %v786 = vunpack.c.l.b16 %v625
    %v787 = vunpack.c.l.b16 %v626
    %v788 = vunpack.c.l.b16 %v627
    %v789 = vunpack.c.l.b16 %v628
    %v790 = vunpack.c.l.b16 %v629
    %v791 = vunpack.c.l.b16 %v630
    %v792 = vunpack.c.l.b16 %v631
    %v793 = vunpack.c.l.b16 %v632
    %v794 = vunpack.c.l.b16 %v633
    %v795 = vunpack.c.l.b16 %v634
    %v796 = vunpack.c.l.b16 %v635
    %v797 = vunpack.c.l.b16 %v636
    %v798 = vunpack.c.l.b16 %v637
    %v799 = vpack.c.b16 %v784, %v783
    %v800 = vpack.c.b16 %v786, %v785
    %v801 = vpack.c.b16 %v788, %v787
    %v802 = vpack.c.b16 %v790, %v789
    %v803 = vpack.c.b16 %v792, %v791
    %v804 = vpack.c.b16 %v794, %v793
    %v805 = vpack.c.b16 %v796, %v795
    %v806 = vpack.c.b16 %v798, %v797
    %815 = vmatprep.subr.bf16.mxu0 0
    %816 = vmatpush1.bf16.msra.mxu0 %v799
    %817 = vmatprep.subr.bf16.mxu0 0
    %818 = vmatpush1.bf16.msra.mxu0 %v800
    %819 = vmatprep.subr.bf16.mxu0 0
    %820 = vmatpush1.bf16.msra.mxu0 %v801
    %821 = vmatprep.subr.bf16.mxu0 0
    %822 = vmatpush1.bf16.msra.mxu0 %v802
    %823 = vmatprep.subr.bf16.mxu0 0
    %824 = vmatpush1.bf16.msra.mxu0 %v803
    %825 = vmatprep.subr.bf16.mxu0 0
    %826 = vmatpush1.bf16.msra.mxu0 %v804
    %827 = vmatprep.subr.bf16.mxu0 0
    %828 = vmatpush1.bf16.msra.mxu0 %v805
    %829 = vmatprep.subr.bf16.mxu0 0
    %830 = vmatpush1.bf16.msra.mxu0 %v806
    %831 = vmatprep.subr.bf16.mxu0 0
    %832 = vmatpush1.bf16.msra.mxu0 0
    %833 = vmatprep.subr.bf16.mxu0 0
    %834 = vmatpush1.bf16.msra.mxu0 0
    %835 = vmatprep.subr.bf16.mxu0 0
    %836 = vmatpush1.bf16.msra.mxu0 0
    %837 = vmatprep.subr.bf16.mxu0 0
    %838 = vmatpush1.bf16.msra.mxu0 0
    %839 = vmatprep.subr.bf16.mxu0 0
    %840 = vmatpush1.bf16.msra.mxu0 0
    %841 = vmatprep.subr.bf16.mxu0 0
    %842 = vmatpush1.bf16.msra.mxu0 0
    %843 = vmatprep.subr.bf16.mxu0 0
    %844 = vmatpush1.bf16.msra.mxu0 0
    %845 = vmatprep.subr.bf16.mxu0 0
    %846 = vmatpush1.bf16.msra.mxu0 0
    %847 = vmatprep.mubr.bf16.mxu0 0
    %848 = vmatmul.mubr.bf16.gmra.mrb[0].mxu0 %v147
    %v849 = vpop.f32.mrb[0].mxu0
    %v850 = vadd.f32 0.0, %v849
    %v851 = vpop.f32.mrb[0].mxu0
    %v852 = vpop.f32.mrb[0].mxu0
    %v853 = vadd.f32 0.0, %v852
    %v854 = vpop.f32.mrb[0].mxu0
    %855 = vmatprep.mubr.bf16.mxu0 0
    %856 = vmatmul.mubr.bf16.gmra.mrb[0].mxu0 %v148
    %v857 = vpop.f32.mrb[0].mxu0
    %v858 = vadd.f32 0.0, %v857
    %v859 = vpop.f32.mrb[0].mxu0
    %v860 = vpop.f32.mrb[0].mxu0
    %v861 = vadd.f32 0.0, %v860
    %v862 = vpop.f32.mrb[0].mxu0
    %863 = vdwg.mxu0
    %v880 = vunpack.c.l.b16 %v638
    %v881 = vunpack.c.l.b16 %v639
    %v882 = vunpack.c.l.b16 %v640
    %v883 = vunpack.c.l.b16 %v641
    %v884 = vunpack.c.l.b16 %v642
    %v885 = vunpack.c.l.b16 %v643
    %v886 = vunpack.c.l.b16 %v644
    %v887 = vunpack.c.l.b16 %v645
    %v888 = vunpack.c.l.b16 %v646
    %v889 = vunpack.c.l.b16 %v647
    %v890 = vunpack.c.l.b16 %v648
    %v891 = vunpack.c.l.b16 %v649
    %v892 = vunpack.c.l.b16 %v650
    %v893 = vunpack.c.l.b16 %v651
    %v894 = vunpack.c.l.b16 %v652
    %v895 = vunpack.c.l.b16 %v653
    %v896 = vpack.c.b16 %v881, %v880
    %v897 = vpack.c.b16 %v883, %v882
    %v898 = vpack.c.b16 %v885, %v884
    %v899 = vpack.c.b16 %v887, %v886
    %v900 = vpack.c.b16 %v889, %v888
    %v901 = vpack.c.b16 %v891, %v890
    %v902 = vpack.c.b16 %v893, %v892
    %v903 = vpack.c.b16 %v895, %v894
    %912 = vmatprep.subr.bf16.mxu0 0
    %913 = vmatpush1.bf16.msra.mxu0 %v896
    %914 = vmatprep.subr.bf16.mxu0 0
    %915 = vmatpush1.bf16.msra.mxu0 %v897
    %916 = vmatprep.subr.bf16.mxu0 0
    %917 = vmatpush1.bf16.msra.mxu0 %v898
    %918 = vmatprep.subr.bf16.mxu0 0
    %919 = vmatpush1.bf16.msra.mxu0 %v899
    %920 = vmatprep.subr.bf16.mxu0 0
    %921 = vmatpush1.bf16.msra.mxu0 %v900
    %922 = vmatprep.subr.bf16.mxu0 0
    %923 = vmatpush1.bf16.msra.mxu0 %v901
    %924 = vmatprep.subr.bf16.mxu0 0
    %925 = vmatpush1.bf16.msra.mxu0 %v902
    %926 = vmatprep.subr.bf16.mxu0 0
    %927 = vmatpush1.bf16.msra.mxu0 %v903
    %928 = vmatprep.subr.bf16.mxu0 0
    %929 = vmatpush1.bf16.msra.mxu0 0
    %930 = vmatprep.subr.bf16.mxu0 0
    %931 = vmatpush1.bf16.msra.mxu0 0
    %932 = vmatprep.subr.bf16.mxu0 0
    %933 = vmatpush1.bf16.msra.mxu0 0
    %934 = vmatprep.subr.bf16.mxu0 0
    %935 = vmatpush1.bf16.msra.mxu0 0
    %936 = vmatprep.subr.bf16.mxu0 0
    %937 = vmatpush1.bf16.msra.mxu0 0
    %938 = vmatprep.subr.bf16.mxu0 0
    %939 = vmatpush1.bf16.msra.mxu0 0
    %940 = vmatprep.subr.bf16.mxu0 0
    %941 = vmatpush1.bf16.msra.mxu0 0
    %942 = vmatprep.subr.bf16.mxu0 0
    %943 = vmatpush1.bf16.msra.mxu0 0
    %944 = vmatprep.mubr.bf16.mxu0 0
    %945 = vmatmul.mubr.bf16.gmra.mrb[0].mxu0 %v147
    %v946 = vpop.f32.mrb[0].mxu0
    %v947 = vadd.f32 0.0, %v946
    %v948 = vpop.f32.mrb[0].mxu0
    %v949 = vpop.f32.mrb[0].mxu0
    %v950 = vadd.f32 0.0, %v949
    %v951 = vpop.f32.mrb[0].mxu0
    %952 = vmatprep.mubr.bf16.mxu0 0
    %953 = vmatmul.mubr.bf16.gmra.mrb[0].mxu0 %v148
    %v954 = vpop.f32.mrb[0].mxu0
    %v955 = vadd.f32 0.0, %v954
    %v956 = vpop.f32.mrb[0].mxu0
    %v957 = vpop.f32.mrb[0].mxu0
    %v958 = vadd.f32 0.0, %v957
    %v959 = vpop.f32.mrb[0].mxu0
    %960 = vdwg.mxu0
    %v977 = vunpack.c.l.b16 %v654
    %v978 = vunpack.c.l.b16 %v655
    %v979 = vunpack.c.l.b16 %v656
    %v980 = vunpack.c.l.b16 %v657
    %v981 = vunpack.c.l.b16 %v658
    %v982 = vunpack.c.l.b16 %v659
    %v983 = vunpack.c.l.b16 %v660
    %v984 = vunpack.c.l.b16 %v661
    %v985 = vunpack.c.l.b16 %v662
    %v986 = vunpack.c.l.b16 %v663
    %v987 = vunpack.c.l.b16 %v664
    %v988 = vunpack.c.l.b16 %v665
    %v989 = vunpack.c.l.b16 %v666
    %v990 = vunpack.c.l.b16 %v667
    %v991 = vunpack.c.l.b16 %v668
    %v992 = vunpack.c.l.b16 %v669
    %v993 = vpack.c.b16 %v978, %v977
    %v994 = vpack.c.b16 %v980, %v979
    %v995 = vpack.c.b16 %v982, %v981
    %v996 = vpack.c.b16 %v984, %v983
    %v997 = vpack.c.b16 %v986, %v985
    %v998 = vpack.c.b16 %v988, %v987
    %v999 = vpack.c.b16 %v990, %v989
    %v1000 = vpack.c.b16 %v992, %v991
    %1009 = vmatprep.subr.bf16.mxu0 0
    %1010 = vmatpush1.bf16.msra.mxu0 %v993
    %1011 = vmatprep.subr.bf16.mxu0 0
    %1012 = vmatpush1.bf16.msra.mxu0 %v994
    %1013 = vmatprep.subr.bf16.mxu0 0
    %1014 = vmatpush1.bf16.msra.mxu0 %v995
    %1015 = vmatprep.subr.bf16.mxu0 0
    %1016 = vmatpush1.bf16.msra.mxu0 %v996
    %1017 = vmatprep.subr.bf16.mxu0 0
    %1018 = vmatpush1.bf16.msra.mxu0 %v997
    %1019 = vmatprep.subr.bf16.mxu0 0
    %1020 = vmatpush1.bf16.msra.mxu0 %v998
    %1021 = vmatprep.subr.bf16.mxu0 0
    %1022 = vmatpush1.bf16.msra.mxu0 %v999
    %1023 = vmatprep.subr.bf16.mxu0 0
    %1024 = vmatpush1.bf16.msra.mxu0 %v1000
    %1025 = vmatprep.subr.bf16.mxu0 0
    %1026 = vmatpush1.bf16.msra.mxu0 0
    %1027 = vmatprep.subr.bf16.mxu0 0
    %1028 = vmatpush1.bf16.msra.mxu0 0
    %1029 = vmatprep.subr.bf16.mxu0 0
    %1030 = vmatpush1.bf16.msra.mxu0 0
    %1031 = vmatprep.subr.bf16.mxu0 0
    %1032 = vmatpush1.bf16.msra.mxu0 0
    %1033 = vmatprep.subr.bf16.mxu0 0
    %1034 = vmatpush1.bf16.msra.mxu0 0
    %1035 = vmatprep.subr.bf16.mxu0 0
    %1036 = vmatpush1.bf16.msra.mxu0 0
    %1037 = vmatprep.subr.bf16.mxu0 0
    %1038 = vmatpush1.bf16.msra.mxu0 0
    %1039 = vmatprep.subr.bf16.mxu0 0
    %1040 = vmatpush1.bf16.msra.mxu0 0
    %1041 = vmatprep.mubr.bf16.mxu0 0
    %1042 = vmatmul.mubr.bf16.gmra.mrb[0].mxu0 %v147
    %v1043 = vpop.f32.mrb[0].mxu0
    %v1044 = vadd.f32 0.0, %v1043
    %v1045 = vpop.f32.mrb[0].mxu0
    %v1046 = vpop.f32.mrb[0].mxu0
    %v1047 = vadd.f32 0.0, %v1046
    %v1048 = vpop.f32.mrb[0].mxu0
    %1049 = vmatprep.mubr.bf16.mxu0 0
    %1050 = vmatmul.mubr.bf16.gmra.mrb[0].mxu0 %v148
    %v1051 = vpop.f32.mrb[0].mxu0
    %v1052 = vadd.f32 0.0, %v1051
    %v1053 = vpop.f32.mrb[0].mxu0
    %v1054 = vpop.f32.mrb[0].mxu0
    %v1055 = vadd.f32 0.0, %v1054
    %v1056 = vpop.f32.mrb[0].mxu0
    %1057 = vdwg.mxu0
    %s1058 = smul.addr %s149, 4
    %s1059 = scalar_lea.vmem %s5, %s1058
    %v1060 = vld [vmem:[%s1059] sm:$0xf]
    %v1061 = vld [vmem:[%s1059 + $0x4] sm:$0xf]
    %v1062 = vld [vmem:[%s1059 + $0x8] sm:$0xf]
    %v1063 = vld [vmem:[%s1059 + $0xc] sm:$0xf]
    %v1064 = vld [vmem:[%s1059 + $0x10] sm:$0xf]
    %v1065 = vld [vmem:[%s1059 + $0x14] sm:$0xf]
    %v1066 = vld [vmem:[%s1059 + $0x18] sm:$0xf]
    %v1067 = vld [vmem:[%s1059 + $0x1c] sm:$0xf]
    %v1068 = vld [vmem:[%s1059 + $0x20] sm:$0xf]
    %v1069 = vld [vmem:[%s1059 + $0x24] sm:$0xf]
    %v1070 = vld [vmem:[%s1059 + $0x28] sm:$0xf]
    %v1071 = vld [vmem:[%s1059 + $0x2c] sm:$0xf]
    %v1072 = vld [vmem:[%s1059 + $0x30] sm:$0xf]
    %v1073 = vld [vmem:[%s1059 + $0x34] sm:$0xf]
    %v1074 = vld [vmem:[%s1059 + $0x38] sm:$0xf]
    %v1075 = vld [vmem:[%s1059 + $0x3c] sm:$0xf]
    %v1076 = vld [vmem:[%s1059 + $0x40] sm:$0xf]
    %v1077 = vld [vmem:[%s1059 + $0x44] sm:$0xf]
    %v1078 = vld [vmem:[%s1059 + $0x48] sm:$0xf]
    %v1079 = vld [vmem:[%s1059 + $0x4c] sm:$0xf]
    %v1080 = vld [vmem:[%s1059 + $0x50] sm:$0xf]
    %v1081 = vld [vmem:[%s1059 + $0x54] sm:$0xf]
    %v1082 = vld [vmem:[%s1059 + $0x58] sm:$0xf]
    %v1083 = vld [vmem:[%s1059 + $0x5c] sm:$0xf]
    %v1084 = vld [vmem:[%s1059 + $0x60] sm:$0xf]
    %v1085 = vld [vmem:[%s1059 + $0x64] sm:$0xf]
    %v1086 = vld [vmem:[%s1059 + $0x68] sm:$0xf]
    %v1087 = vld [vmem:[%s1059 + $0x6c] sm:$0xf]
    %v1088 = vld [vmem:[%s1059 + $0x70] sm:$0xf]
    %v1089 = vld [vmem:[%s1059 + $0x74] sm:$0xf]
    %v1090 = vld [vmem:[%s1059 + $0x78] sm:$0xf]
    %v1091 = vld [vmem:[%s1059 + $0x7c] sm:$0xf]
    %v1092 = vld [vmem:[%s1059 + $0x80] sm:$0xf]
    %v1093 = vld [vmem:[%s1059 + $0x84] sm:$0xf]
    %v1094 = vld [vmem:[%s1059 + $0x88] sm:$0xf]
    %v1095 = vld [vmem:[%s1059 + $0x8c] sm:$0xf]
    %v1096 = vld [vmem:[%s1059 + $0x90] sm:$0xf]
    %v1097 = vld [vmem:[%s1059 + $0x94] sm:$0xf]
    %v1098 = vld [vmem:[%s1059 + $0x98] sm:$0xf]
    %v1099 = vld [vmem:[%s1059 + $0x9c] sm:$0xf]
    %v1100 = vld [vmem:[%s1059 + $0xa0] sm:$0xf]
    %v1101 = vld [vmem:[%s1059 + $0xa4] sm:$0xf]
    %v1102 = vld [vmem:[%s1059 + $0xa8] sm:$0xf]
    %v1103 = vld [vmem:[%s1059 + $0xac] sm:$0xf]
    %v1104 = vld [vmem:[%s1059 + $0xb0] sm:$0xf]
    %v1105 = vld [vmem:[%s1059 + $0xb4] sm:$0xf]
    %v1106 = vld [vmem:[%s1059 + $0xb8] sm:$0xf]
    %v1107 = vld [vmem:[%s1059 + $0xbc] sm:$0xf]
    %v1108 = vld [vmem:[%s1059 + $0xc0] sm:$0xf]
    %v1109 = vld [vmem:[%s1059 + $0xc4] sm:$0xf]
    %v1110 = vld [vmem:[%s1059 + $0xc8] sm:$0xf]
    %v1111 = vld [vmem:[%s1059 + $0xcc] sm:$0xf]
    %v1112 = vld [vmem:[%s1059 + $0xd0] sm:$0xf]
    %v1113 = vld [vmem:[%s1059 + $0xd4] sm:$0xf]
    %v1114 = vld [vmem:[%s1059 + $0xd8] sm:$0xf]
    %v1115 = vld [vmem:[%s1059 + $0xdc] sm:$0xf]
    %v1116 = vld [vmem:[%s1059 + $0xe0] sm:$0xf]
    %v1117 = vld [vmem:[%s1059 + $0xe4] sm:$0xf]
    %v1118 = vld [vmem:[%s1059 + $0xe8] sm:$0xf]
    %v1119 = vld [vmem:[%s1059 + $0xec] sm:$0xf]
    %v1120 = vld [vmem:[%s1059 + $0xf0] sm:$0xf]
    %v1121 = vld [vmem:[%s1059 + $0xf4] sm:$0xf]
    %v1122 = vld [vmem:[%s1059 + $0xf8] sm:$0xf]
    %v1123 = vld [vmem:[%s1059 + $0xfc] sm:$0xf]
    %v1140 = vunpack.c.l.b16 %v1060
    %v1141 = vunpack.c.l.b16 %v1061
    %v1142 = vunpack.c.l.b16 %v1062
    %v1143 = vunpack.c.l.b16 %v1063
    %v1144 = vunpack.c.l.b16 %v1064
    %v1145 = vunpack.c.l.b16 %v1065
    %v1146 = vunpack.c.l.b16 %v1066
    %v1147 = vunpack.c.l.b16 %v1067
    %v1148 = vunpack.c.l.b16 %v1068
    %v1149 = vunpack.c.l.b16 %v1069
    %v1150 = vunpack.c.l.b16 %v1070
    %v1151 = vunpack.c.l.b16 %v1071
    %v1152 = vunpack.c.l.b16 %v1072
    %v1153 = vunpack.c.l.b16 %v1073
    %v1154 = vunpack.c.l.b16 %v1074
    %v1155 = vunpack.c.l.b16 %v1075
    %v1156 = vpack.c.b16 %v1141, %v1140
    %v1157 = vpack.c.b16 %v1143, %v1142
    %v1158 = vpack.c.b16 %v1145, %v1144
    %v1159 = vpack.c.b16 %v1147, %v1146
    %v1160 = vpack.c.b16 %v1149, %v1148
    %v1161 = vpack.c.b16 %v1151, %v1150
    %v1162 = vpack.c.b16 %v1153, %v1152
    %v1163 = vpack.c.b16 %v1155, %v1154
    %1172 = vmatprep.subr.bf16.mxu0 0
    %1173 = vmatpush1.bf16.msra.mxu0 %v1156
    %1174 = vmatprep.subr.bf16.mxu0 0
    %1175 = vmatpush1.bf16.msra.mxu0 %v1157
    %1176 = vmatprep.subr.bf16.mxu0 0
    %1177 = vmatpush1.bf16.msra.mxu0 %v1158
    %1178 = vmatprep.subr.bf16.mxu0 0
    %1179 = vmatpush1.bf16.msra.mxu0 %v1159
    %1180 = vmatprep.subr.bf16.mxu0 0
    %1181 = vmatpush1.bf16.msra.mxu0 %v1160
    %1182 = vmatprep.subr.bf16.mxu0 0
    %1183 = vmatpush1.bf16.msra.mxu0 %v1161
    %1184 = vmatprep.subr.bf16.mxu0 0
    %1185 = vmatpush1.bf16.msra.mxu0 %v1162
    %1186 = vmatprep.subr.bf16.mxu0 0
    %1187 = vmatpush1.bf16.msra.mxu0 %v1163
    %1188 = vmatprep.subr.bf16.mxu0 0
    %1189 = vmatpush1.bf16.msra.mxu0 0
    %1190 = vmatprep.subr.bf16.mxu0 0
    %1191 = vmatpush1.bf16.msra.mxu0 0
    %1192 = vmatprep.subr.bf16.mxu0 0
    %1193 = vmatpush1.bf16.msra.mxu0 0
    %1194 = vmatprep.subr.bf16.mxu0 0
    %1195 = vmatpush1.bf16.msra.mxu0 0
    %1196 = vmatprep.subr.bf16.mxu0 0
    %1197 = vmatpush1.bf16.msra.mxu0 0
    %1198 = vmatprep.subr.bf16.mxu0 0
    %1199 = vmatpush1.bf16.msra.mxu0 0
    %1200 = vmatprep.subr.bf16.mxu0 0
    %1201 = vmatpush1.bf16.msra.mxu0 0
    %1202 = vmatprep.subr.bf16.mxu0 0
    %1203 = vmatpush1.bf16.msra.mxu0 0
    %1204 = vmatprep.mubr.bf16.mxu0 0
    %1205 = vmatmul.mubr.bf16.gmra.mrb[0].mxu0 %v147
    %v1206 = vpop.f32.mrb[0].mxu0
    %v1207 = vadd.f32 0.0, %v1206
    %v1208 = vpop.f32.mrb[0].mxu0
    %v1209 = vpop.f32.mrb[0].mxu0
    %v1210 = vadd.f32 0.0, %v1209
    %v1211 = vpop.f32.mrb[0].mxu0
    %1212 = vmatprep.mubr.bf16.mxu0 0
    %1213 = vmatmul.mubr.bf16.gmra.mrb[0].mxu0 %v148
    %v1214 = vpop.f32.mrb[0].mxu0
    %v1215 = vadd.f32 0.0, %v1214
    %v1216 = vpop.f32.mrb[0].mxu0
    %v1217 = vpop.f32.mrb[0].mxu0
    %v1218 = vadd.f32 0.0, %v1217
    %v1219 = vpop.f32.mrb[0].mxu0
    %1220 = vdwg.mxu0
    %v1237 = vunpack.c.l.b16 %v1076
    %v1238 = vunpack.c.l.b16 %v1077
    %v1239 = vunpack.c.l.b16 %v1078
    %v1240 = vunpack.c.l.b16 %v1079
    %v1241 = vunpack.c.l.b16 %v1080
    %v1242 = vunpack.c.l.b16 %v1081
    %v1243 = vunpack.c.l.b16 %v1082
    %v1244 = vunpack.c.l.b16 %v1083
    %v1245 = vunpack.c.l.b16 %v1084
    %v1246 = vunpack.c.l.b16 %v1085
    %v1247 = vunpack.c.l.b16 %v1086
    %v1248 = vunpack.c.l.b16 %v1087
    %v1249 = vunpack.c.l.b16 %v1088
    %v1250 = vunpack.c.l.b16 %v1089
    %v1251 = vunpack.c.l.b16 %v1090
    %v1252 = vunpack.c.l.b16 %v1091
    %v1253 = vpack.c.b16 %v1238, %v1237
    %v1254 = vpack.c.b16 %v1240, %v1239
    %v1255 = vpack.c.b16 %v1242, %v1241
    %v1256 = vpack.c.b16 %v1244, %v1243
    %v1257 = vpack.c.b16 %v1246, %v1245
    %v1258 = vpack.c.b16 %v1248, %v1247
    %v1259 = vpack.c.b16 %v1250, %v1249
    %v1260 = vpack.c.b16 %v1252, %v1251
    %1269 = vmatprep.subr.bf16.mxu0 0
    %1270 = vmatpush1.bf16.msra.mxu0 %v1253
    %1271 = vmatprep.subr.bf16.mxu0 0
    %1272 = vmatpush1.bf16.msra.mxu0 %v1254
    %1273 = vmatprep.subr.bf16.mxu0 0
    %1274 = vmatpush1.bf16.msra.mxu0 %v1255
    %1275 = vmatprep.subr.bf16.mxu0 0
    %1276 = vmatpush1.bf16.msra.mxu0 %v1256
    %1277 = vmatprep.subr.bf16.mxu0 0
    %1278 = vmatpush1.bf16.msra.mxu0 %v1257
    %1279 = vmatprep.subr.bf16.mxu0 0
    %1280 = vmatpush1.bf16.msra.mxu0 %v1258
    %1281 = vmatprep.subr.bf16.mxu0 0
    %1282 = vmatpush1.bf16.msra.mxu0 %v1259
    %1283 = vmatprep.subr.bf16.mxu0 0
    %1284 = vmatpush1.bf16.msra.mxu0 %v1260
    %1285 = vmatprep.subr.bf16.mxu0 0
    %1286 = vmatpush1.bf16.msra.mxu0 0
    %1287 = vmatprep.subr.bf16.mxu0 0
    %1288 = vmatpush1.bf16.msra.mxu0 0
    %1289 = vmatprep.subr.bf16.mxu0 0
    %1290 = vmatpush1.bf16.msra.mxu0 0
    %1291 = vmatprep.subr.bf16.mxu0 0
    %1292 = vmatpush1.bf16.msra.mxu0 0
    %1293 = vmatprep.subr.bf16.mxu0 0
    %1294 = vmatpush1.bf16.msra.mxu0 0
    %1295 = vmatprep.subr.bf16.mxu0 0
    %1296 = vmatpush1.bf16.msra.mxu0 0
    %1297 = vmatprep.subr.bf16.mxu0 0
    %1298 = vmatpush1.bf16.msra.mxu0 0
    %1299 = vmatprep.subr.bf16.mxu0 0
    %1300 = vmatpush1.bf16.msra.mxu0 0
    %1301 = vmatprep.mubr.bf16.mxu0 0
    %1302 = vmatmul.mubr.bf16.gmra.mrb[0].mxu0 %v147
    %v1303 = vpop.f32.mrb[0].mxu0
    %v1304 = vadd.f32 0.0, %v1303
    %v1305 = vpop.f32.mrb[0].mxu0
    %v1306 = vpop.f32.mrb[0].mxu0
    %v1307 = vadd.f32 0.0, %v1306
    %v1308 = vpop.f32.mrb[0].mxu0
    %1309 = vmatprep.mubr.bf16.mxu0 0
    %1310 = vmatmul.mubr.bf16.gmra.mrb[0].mxu0 %v148
    %v1311 = vpop.f32.mrb[0].mxu0
    %v1312 = vadd.f32 0.0, %v1311
    %v1313 = vpop.f32.mrb[0].mxu0
    %v1314 = vpop.f32.mrb[0].mxu0
    %v1315 = vadd.f32 0.0, %v1314
    %v1316 = vpop.f32.mrb[0].mxu0
    %1317 = vdwg.mxu0
    %v1334 = vunpack.c.l.b16 %v1092
    %v1335 = vunpack.c.l.b16 %v1093
    %v1336 = vunpack.c.l.b16 %v1094
    %v1337 = vunpack.c.l.b16 %v1095
    %v1338 = vunpack.c.l.b16 %v1096
    %v1339 = vunpack.c.l.b16 %v1097
    %v1340 = vunpack.c.l.b16 %v1098
    %v1341 = vunpack.c.l.b16 %v1099
    %v1342 = vunpack.c.l.b16 %v1100
    %v1343 = vunpack.c.l.b16 %v1101
    %v1344 = vunpack.c.l.b16 %v1102
    %v1345 = vunpack.c.l.b16 %v1103
    %v1346 = vunpack.c.l.b16 %v1104
    %v1347 = vunpack.c.l.b16 %v1105
    %v1348 = vunpack.c.l.b16 %v1106
    %v1349 = vunpack.c.l.b16 %v1107
    %v1350 = vpack.c.b16 %v1335, %v1334
    %v1351 = vpack.c.b16 %v1337, %v1336
    %v1352 = vpack.c.b16 %v1339, %v1338
    %v1353 = vpack.c.b16 %v1341, %v1340
    %v1354 = vpack.c.b16 %v1343, %v1342
    %v1355 = vpack.c.b16 %v1345, %v1344
    %v1356 = vpack.c.b16 %v1347, %v1346
    %v1357 = vpack.c.b16 %v1349, %v1348
    %1366 = vmatprep.subr.bf16.mxu0 0
    %1367 = vmatpush1.bf16.msra.mxu0 %v1350
    %1368 = vmatprep.subr.bf16.mxu0 0
    %1369 = vmatpush1.bf16.msra.mxu0 %v1351
    %1370 = vmatprep.subr.bf16.mxu0 0
    %1371 = vmatpush1.bf16.msra.mxu0 %v1352
    %1372 = vmatprep.subr.bf16.mxu0 0
    %1373 = vmatpush1.bf16.msra.mxu0 %v1353
    %1374 = vmatprep.subr.bf16.mxu0 0
    %1375 = vmatpush1.bf16.msra.mxu0 %v1354
    %1376 = vmatprep.subr.bf16.mxu0 0
    %1377 = vmatpush1.bf16.msra.mxu0 %v1355
    %1378 = vmatprep.subr.bf16.mxu0 0
    %1379 = vmatpush1.bf16.msra.mxu0 %v1356
    %1380 = vmatprep.subr.bf16.mxu0 0
    %1381 = vmatpush1.bf16.msra.mxu0 %v1357
    %1382 = vmatprep.subr.bf16.mxu0 0
    %1383 = vmatpush1.bf16.msra.mxu0 0
    %1384 = vmatprep.subr.bf16.mxu0 0
    %1385 = vmatpush1.bf16.msra.mxu0 0
    %1386 = vmatprep.subr.bf16.mxu0 0
    %1387 = vmatpush1.bf16.msra.mxu0 0
    %1388 = vmatprep.subr.bf16.mxu0 0
    %1389 = vmatpush1.bf16.msra.mxu0 0
    %1390 = vmatprep.subr.bf16.mxu0 0
    %1391 = vmatpush1.bf16.msra.mxu0 0
    %1392 = vmatprep.subr.bf16.mxu0 0
    %1393 = vmatpush1.bf16.msra.mxu0 0
    %1394 = vmatprep.subr.bf16.mxu0 0
    %1395 = vmatpush1.bf16.msra.mxu0 0
    %1396 = vmatprep.subr.bf16.mxu0 0
    %1397 = vmatpush1.bf16.msra.mxu0 0
    %1398 = vmatprep.mubr.bf16.mxu0 0
    %1399 = vmatmul.mubr.bf16.gmra.mrb[0].mxu0 %v147
    %v1400 = vpop.f32.mrb[0].mxu0
    %v1401 = vadd.f32 0.0, %v1400
    %v1402 = vpop.f32.mrb[0].mxu0
    %v1403 = vpop.f32.mrb[0].mxu0
    %v1404 = vadd.f32 0.0, %v1403
    %v1405 = vpop.f32.mrb[0].mxu0
    %1406 = vmatprep.mubr.bf16.mxu0 0
    %1407 = vmatmul.mubr.bf16.gmra.mrb[0].mxu0 %v148
    %v1408 = vpop.f32.mrb[0].mxu0
    %v1409 = vadd.f32 0.0, %v1408
    %v1410 = vpop.f32.mrb[0].mxu0
    %v1411 = vpop.f32.mrb[0].mxu0
    %v1412 = vadd.f32 0.0, %v1411
    %v1413 = vpop.f32.mrb[0].mxu0
    %1414 = vdwg.mxu0
    %v1431 = vunpack.c.l.b16 %v1108
    %v1432 = vunpack.c.l.b16 %v1109
    %v1433 = vunpack.c.l.b16 %v1110
    %v1434 = vunpack.c.l.b16 %v1111
    %v1435 = vunpack.c.l.b16 %v1112
    %v1436 = vunpack.c.l.b16 %v1113
    %v1437 = vunpack.c.l.b16 %v1114
    %v1438 = vunpack.c.l.b16 %v1115
    %v1439 = vunpack.c.l.b16 %v1116
    %v1440 = vunpack.c.l.b16 %v1117
    %v1441 = vunpack.c.l.b16 %v1118
    %v1442 = vunpack.c.l.b16 %v1119
    %v1443 = vunpack.c.l.b16 %v1120
    %v1444 = vunpack.c.l.b16 %v1121
    %v1445 = vunpack.c.l.b16 %v1122
    %v1446 = vunpack.c.l.b16 %v1123
    %v1447 = vpack.c.b16 %v1432, %v1431
    %v1448 = vpack.c.b16 %v1434, %v1433
    %v1449 = vpack.c.b16 %v1436, %v1435
    %v1450 = vpack.c.b16 %v1438, %v1437
    %v1451 = vpack.c.b16 %v1440, %v1439
    %v1452 = vpack.c.b16 %v1442, %v1441
    %v1453 = vpack.c.b16 %v1444, %v1443
    %v1454 = vpack.c.b16 %v1446, %v1445
    %1463 = vmatprep.subr.bf16.mxu0 0
    %1464 = vmatpush1.bf16.msra.mxu0 %v1447
    %1465 = vmatprep.subr.bf16.mxu0 0
    %1466 = vmatpush1.bf16.msra.mxu0 %v1448
    %1467 = vmatprep.subr.bf16.mxu0 0
    %1468 = vmatpush1.bf16.msra.mxu0 %v1449
    %1469 = vmatprep.subr.bf16.mxu0 0
    %1470 = vmatpush1.bf16.msra.mxu0 %v1450
    %1471 = vmatprep.subr.bf16.mxu0 0
    %1472 = vmatpush1.bf16.msra.mxu0 %v1451
    %1473 = vmatprep.subr.bf16.mxu0 0
    %1474 = vmatpush1.bf16.msra.mxu0 %v1452
    %1475 = vmatprep.subr.bf16.mxu0 0
    %1476 = vmatpush1.bf16.msra.mxu0 %v1453
    %1477 = vmatprep.subr.bf16.mxu0 0
    %1478 = vmatpush1.bf16.msra.mxu0 %v1454
    %1479 = vmatprep.subr.bf16.mxu0 0
    %1480 = vmatpush1.bf16.msra.mxu0 0
    %1481 = vmatprep.subr.bf16.mxu0 0
    %1482 = vmatpush1.bf16.msra.mxu0 0
    %1483 = vmatprep.subr.bf16.mxu0 0
    %1484 = vmatpush1.bf16.msra.mxu0 0
    %1485 = vmatprep.subr.bf16.mxu0 0
    %1486 = vmatpush1.bf16.msra.mxu0 0
    %1487 = vmatprep.subr.bf16.mxu0 0
    %1488 = vmatpush1.bf16.msra.mxu0 0
    %1489 = vmatprep.subr.bf16.mxu0 0
    %1490 = vmatpush1.bf16.msra.mxu0 0
    %1491 = vmatprep.subr.bf16.mxu0 0
    %1492 = vmatpush1.bf16.msra.mxu0 0
    %1493 = vmatprep.subr.bf16.mxu0 0
    %1494 = vmatpush1.bf16.msra.mxu0 0
    %1495 = vmatprep.mubr.bf16.mxu0 0
    %1496 = vmatmul.mubr.bf16.gmra.mrb[0].mxu0 %v147
    %v1497 = vpop.f32.mrb[0].mxu0
    %v1498 = vadd.f32 0.0, %v1497
    %v1499 = vpop.f32.mrb[0].mxu0
    %v1500 = vpop.f32.mrb[0].mxu0
    %v1501 = vadd.f32 0.0, %v1500
    %v1502 = vpop.f32.mrb[0].mxu0
    %1503 = vmatprep.mubr.bf16.mxu0 0
    %1504 = vmatmul.mubr.bf16.gmra.mrb[0].mxu0 %v148
    %v1505 = vpop.f32.mrb[0].mxu0
    %v1506 = vadd.f32 0.0, %v1505
    %v1507 = vpop.f32.mrb[0].mxu0
    %v1508 = vpop.f32.mrb[0].mxu0
    %v1509 = vadd.f32 0.0, %v1508
    %v1510 = vpop.f32.mrb[0].mxu0
    %1511 = vdwg.mxu0
    %v1512 = vpack.c.bf16 %v302, %v299
    %v1513 = vpack.c.bf16 %v310, %v307
    %v1514 = vpack.c.bf16 %v399, %v396
    %v1515 = vpack.c.bf16 %v407, %v404
    %v1516 = vpack.c.bf16 %v496, %v493
    %v1517 = vpack.c.bf16 %v504, %v501
    %v1518 = vpack.c.bf16 %v593, %v590
    %v1519 = vpack.c.bf16 %v601, %v598
    %v1520 = vpack.c.bf16 %v756, %v753
    %v1521 = vpack.c.bf16 %v764, %v761
    %v1522 = vpack.c.bf16 %v853, %v850
    %v1523 = vpack.c.bf16 %v861, %v858
    %v1524 = vpack.c.bf16 %v950, %v947
    %v1525 = vpack.c.bf16 %v958, %v955
    %v1526 = vpack.c.bf16 %v1047, %v1044
    %v1527 = vpack.c.bf16 %v1055, %v1052
    %v1528 = vpack.c.bf16 %v1210, %v1207
    %v1529 = vpack.c.bf16 %v1218, %v1215
    %v1530 = vpack.c.bf16 %v1307, %v1304
    %v1531 = vpack.c.bf16 %v1315, %v1312
    %v1532 = vpack.c.bf16 %v1404, %v1401
    %v1533 = vpack.c.bf16 %v1412, %v1409
    %v1534 = vpack.c.bf16 %v1501, %v1498
    %v1535 = vpack.c.bf16 %v1509, %v1506
    %vm1536 = vcmask 261120
    %v1538 = vsel %vm1536, %v1512, 0
    %v1541 = vsel %vm1536, %v1520, 0
    %1543 = vmatprep.subr.bf16.mxu0 0
    %1544 = vmatpush1.bf16.xpose.msra.mxu0 %v1541
    %1545 = vmatprep.subr.bf16.mxu0 0
    %1546 = vmatpush1.bf16.xpose.msra.mxu0 0
    %1547 = vmatprep.subr.bf16.mxu0 0
    %1548 = vmatpush1.bf16.xpose.msra.mxu0 0
    %1549 = vmatprep.subr.bf16.mxu0 0
    %1550 = vmatpush1.bf16.xpose.msra.mxu0 0
    %1551 = vmatprep.subr.bf16.mxu0 0
    %1552 = vmatpush1.bf16.xpose.msra.mxu0 0
    %1553 = vmatprep.subr.bf16.mxu0 0
    %1554 = vmatpush1.bf16.xpose.msra.mxu0 0
    %1555 = vmatprep.subr.bf16.mxu0 0
    %1556 = vmatpush1.bf16.xpose.msra.mxu0 0
    %1557 = vmatprep.subr.bf16.mxu0 0
    %1558 = vmatpush1.bf16.xpose.msra.mxu0 0
    %1559 = vmatprep.subr.bf16.mxu0 0
    %1560 = vmatpush1.bf16.xpose.msra.mxu0 0
    %1561 = vmatprep.subr.bf16.mxu0 0
    %1562 = vmatpush1.bf16.xpose.msra.mxu0 0
    %1563 = vmatprep.subr.bf16.mxu0 0
    %1564 = vmatpush1.bf16.xpose.msra.mxu0 0
    %1565 = vmatprep.subr.bf16.mxu0 0
    %1566 = vmatpush1.bf16.xpose.msra.mxu0 0
    %1567 = vmatprep.subr.bf16.mxu0 0
    %1568 = vmatpush1.bf16.xpose.msra.mxu0 0
    %1569 = vmatprep.subr.bf16.mxu0 0
    %1570 = vmatpush1.bf16.xpose.msra.mxu0 0
    %1571 = vmatprep.subr.bf16.mxu0 0
    %1572 = vmatpush1.bf16.xpose.msra.mxu0 0
    %1573 = vmatprep.subr.bf16.mxu0 0
    %1574 = vmatpush1.bf16.xpose.msra.mxu0 0
    %1575 = vmatprep.mubr.bf16.mxu0 0
    %1576 = vmatmul.mubr.bf16.gmra.mrb[0].mxu0 %v1538
    %v1577 = vpop.f32.mrb[0].mxu0
    %v1578 = vadd.f32 0.0, %v1577
    %v1579 = vpop.f32.mrb[0].mxu0
    %v1580 = vpop.f32.mrb[0].mxu0
    %v1581 = vadd.f32 0.0, %v1580
    %v1582 = vpop.f32.mrb[0].mxu0
    %1583 = vdwg.mxu0
    %v1585 = vsel %vm1536, %v1513, 0
    %v1588 = vsel %vm1536, %v1521, 0
    %1590 = vmatprep.subr.bf16.mxu0 0
    %1591 = vmatpush1.bf16.xpose.msra.mxu0 %v1588
    %1592 = vmatprep.subr.bf16.mxu0 0
    %1593 = vmatpush1.bf16.xpose.msra.mxu0 0
    %1594 = vmatprep.subr.bf16.mxu0 0
    %1595 = vmatpush1.bf16.xpose.msra.mxu0 0
    %1596 = vmatprep.subr.bf16.mxu0 0
    %1597 = vmatpush1.bf16.xpose.msra.mxu0 0
    %1598 = vmatprep.subr.bf16.mxu0 0
    %1599 = vmatpush1.bf16.xpose.msra.mxu0 0
    %1600 = vmatprep.subr.bf16.mxu0 0
    %1601 = vmatpush1.bf16.xpose.msra.mxu0 0
    %1602 = vmatprep.subr.bf16.mxu0 0
    %1603 = vmatpush1.bf16.xpose.msra.mxu0 0
    %1604 = vmatprep.subr.bf16.mxu0 0
    %1605 = vmatpush1.bf16.xpose.msra.mxu0 0
    %1606 = vmatprep.subr.bf16.mxu0 0
    %1607 = vmatpush1.bf16.xpose.msra.mxu0 0
    %1608 = vmatprep.subr.bf16.mxu0 0
    %1609 = vmatpush1.bf16.xpose.msra.mxu0 0
    %1610 = vmatprep.subr.bf16.mxu0 0
    %1611 = vmatpush1.bf16.xpose.msra.mxu0 0
    %1612 = vmatprep.subr.bf16.mxu0 0
    %1613 = vmatpush1.bf16.xpose.msra.mxu0 0
    %1614 = vmatprep.subr.bf16.mxu0 0
    %1615 = vmatpush1.bf16.xpose.msra.mxu0 0
    %1616 = vmatprep.subr.bf16.mxu0 0
    %1617 = vmatpush1.bf16.xpose.msra.mxu0 0
    %1618 = vmatprep.subr.bf16.mxu0 0
    %1619 = vmatpush1.bf16.xpose.msra.mxu0 0
    %1620 = vmatprep.subr.bf16.mxu0 0
    %1621 = vmatpush1.bf16.xpose.msra.mxu0 0
    %1622 = vmatprep.mubr.bf16.mxu0 0
    %1623 = vmatmul.mubr.bf16.gmra.mrb[0].mxu0 %v1585
    %v1624 = vpop.f32.mrb[0].mxu0
    %v1625 = vadd.f32 0.0, %v1624
    %v1626 = vpop.f32.mrb[0].mxu0
    %v1627 = vpop.f32.mrb[0].mxu0
    %v1628 = vadd.f32 0.0, %v1627
    %v1629 = vpop.f32.mrb[0].mxu0
    %1630 = vdwg.mxu0
    %v1632 = vsel %vm1536, %v1514, 0
    %v1635 = vsel %vm1536, %v1522, 0
    %1637 = vmatprep.subr.bf16.mxu0 0
    %1638 = vmatpush1.bf16.xpose.msra.mxu0 %v1635
    %1639 = vmatprep.subr.bf16.mxu0 0
    %1640 = vmatpush1.bf16.xpose.msra.mxu0 0
    %1641 = vmatprep.subr.bf16.mxu0 0
    %1642 = vmatpush1.bf16.xpose.msra.mxu0 0
    %1643 = vmatprep.subr.bf16.mxu0 0
    %1644 = vmatpush1.bf16.xpose.msra.mxu0 0
    %1645 = vmatprep.subr.bf16.mxu0 0
    %1646 = vmatpush1.bf16.xpose.msra.mxu0 0
    %1647 = vmatprep.subr.bf16.mxu0 0
    %1648 = vmatpush1.bf16.xpose.msra.mxu0 0
    %1649 = vmatprep.subr.bf16.mxu0 0
    %1650 = vmatpush1.bf16.xpose.msra.mxu0 0
    %1651 = vmatprep.subr.bf16.mxu0 0
    %1652 = vmatpush1.bf16.xpose.msra.mxu0 0
    %1653 = vmatprep.subr.bf16.mxu0 0
    %1654 = vmatpush1.bf16.xpose.msra.mxu0 0
    %1655 = vmatprep.subr.bf16.mxu0 0
    %1656 = vmatpush1.bf16.xpose.msra.mxu0 0
    %1657 = vmatprep.subr.bf16.mxu0 0
    %1658 = vmatpush1.bf16.xpose.msra.mxu0 0
    %1659 = vmatprep.subr.bf16.mxu0 0
    %1660 = vmatpush1.bf16.xpose.msra.mxu0 0
    %1661 = vmatprep.subr.bf16.mxu0 0
    %1662 = vmatpush1.bf16.xpose.msra.mxu0 0
    %1663 = vmatprep.subr.bf16.mxu0 0
    %1664 = vmatpush1.bf16.xpose.msra.mxu0 0
    %1665 = vmatprep.subr.bf16.mxu0 0
    %1666 = vmatpush1.bf16.xpose.msra.mxu0 0
    %1667 = vmatprep.subr.bf16.mxu0 0
    %1668 = vmatpush1.bf16.xpose.msra.mxu0 0
    %1669 = vmatprep.mubr.bf16.mxu0 0
    %1670 = vmatmul.mubr.bf16.gmra.mrb[0].mxu0 %v1632
    %v1671 = vpop.f32.mrb[0].mxu0
    %v1672 = vadd.f32 0.0, %v1671
    %v1673 = vpop.f32.mrb[0].mxu0
    %v1674 = vpop.f32.mrb[0].mxu0
    %v1675 = vadd.f32 0.0, %v1674
    %v1676 = vpop.f32.mrb[0].mxu0
    %1677 = vdwg.mxu0
    %v1679 = vsel %vm1536, %v1515, 0
    %v1682 = vsel %vm1536, %v1523, 0
    %1684 = vmatprep.subr.bf16.mxu0 0
    %1685 = vmatpush1.bf16.xpose.msra.mxu0 %v1682
    %1686 = vmatprep.subr.bf16.mxu0 0
    %1687 = vmatpush1.bf16.xpose.msra.mxu0 0
    %1688 = vmatprep.subr.bf16.mxu0 0
    %1689 = vmatpush1.bf16.xpose.msra.mxu0 0
    %1690 = vmatprep.subr.bf16.mxu0 0
    %1691 = vmatpush1.bf16.xpose.msra.mxu0 0
    %1692 = vmatprep.subr.bf16.mxu0 0
    %1693 = vmatpush1.bf16.xpose.msra.mxu0 0
    %1694 = vmatprep.subr.bf16.mxu0 0
    %1695 = vmatpush1.bf16.xpose.msra.mxu0 0
    %1696 = vmatprep.subr.bf16.mxu0 0
    %1697 = vmatpush1.bf16.xpose.msra.mxu0 0
    %1698 = vmatprep.subr.bf16.mxu0 0
    %1699 = vmatpush1.bf16.xpose.msra.mxu0 0
    %1700 = vmatprep.subr.bf16.mxu0 0
    %1701 = vmatpush1.bf16.xpose.msra.mxu0 0
    %1702 = vmatprep.subr.bf16.mxu0 0
    %1703 = vmatpush1.bf16.xpose.msra.mxu0 0
    %1704 = vmatprep.subr.bf16.mxu0 0
    %1705 = vmatpush1.bf16.xpose.msra.mxu0 0
    %1706 = vmatprep.subr.bf16.mxu0 0
    %1707 = vmatpush1.bf16.xpose.msra.mxu0 0
    %1708 = vmatprep.subr.bf16.mxu0 0
    %1709 = vmatpush1.bf16.xpose.msra.mxu0 0
    %1710 = vmatprep.subr.bf16.mxu0 0
    %1711 = vmatpush1.bf16.xpose.msra.mxu0 0
    %1712 = vmatprep.subr.bf16.mxu0 0
    %1713 = vmatpush1.bf16.xpose.msra.mxu0 0
    %1714 = vmatprep.subr.bf16.mxu0 0
    %1715 = vmatpush1.bf16.xpose.msra.mxu0 0
    %1716 = vmatprep.mubr.bf16.mxu0 0
    %1717 = vmatmul.mubr.bf16.gmra.mrb[0].mxu0 %v1679
    %v1718 = vpop.f32.mrb[0].mxu0
    %v1719 = vadd.f32 0.0, %v1718
    %v1720 = vpop.f32.mrb[0].mxu0
    %v1721 = vpop.f32.mrb[0].mxu0
    %v1722 = vadd.f32 0.0, %v1721
    %v1723 = vpop.f32.mrb[0].mxu0
    %1724 = vdwg.mxu0
    %v1726 = vsel %vm1536, %v1516, 0
    %v1729 = vsel %vm1536, %v1524, 0
    %1731 = vmatprep.subr.bf16.mxu0 0
    %1732 = vmatpush1.bf16.xpose.msra.mxu0 %v1729
    %1733 = vmatprep.subr.bf16.mxu0 0
    %1734 = vmatpush1.bf16.xpose.msra.mxu0 0
    %1735 = vmatprep.subr.bf16.mxu0 0
    %1736 = vmatpush1.bf16.xpose.msra.mxu0 0
    %1737 = vmatprep.subr.bf16.mxu0 0
    %1738 = vmatpush1.bf16.xpose.msra.mxu0 0
    %1739 = vmatprep.subr.bf16.mxu0 0
    %1740 = vmatpush1.bf16.xpose.msra.mxu0 0
    %1741 = vmatprep.subr.bf16.mxu0 0
    %1742 = vmatpush1.bf16.xpose.msra.mxu0 0
    %1743 = vmatprep.subr.bf16.mxu0 0
    %1744 = vmatpush1.bf16.xpose.msra.mxu0 0
    %1745 = vmatprep.subr.bf16.mxu0 0
    %1746 = vmatpush1.bf16.xpose.msra.mxu0 0
    %1747 = vmatprep.subr.bf16.mxu0 0
    %1748 = vmatpush1.bf16.xpose.msra.mxu0 0
    %1749 = vmatprep.subr.bf16.mxu0 0
    %1750 = vmatpush1.bf16.xpose.msra.mxu0 0
    %1751 = vmatprep.subr.bf16.mxu0 0
    %1752 = vmatpush1.bf16.xpose.msra.mxu0 0
    %1753 = vmatprep.subr.bf16.mxu0 0
    %1754 = vmatpush1.bf16.xpose.msra.mxu0 0
    %1755 = vmatprep.subr.bf16.mxu0 0
    %1756 = vmatpush1.bf16.xpose.msra.mxu0 0
    %1757 = vmatprep.subr.bf16.mxu0 0
    %1758 = vmatpush1.bf16.xpose.msra.mxu0 0
    %1759 = vmatprep.subr.bf16.mxu0 0
    %1760 = vmatpush1.bf16.xpose.msra.mxu0 0
    %1761 = vmatprep.subr.bf16.mxu0 0
    %1762 = vmatpush1.bf16.xpose.msra.mxu0 0
    %1763 = vmatprep.mubr.bf16.mxu0 0
    %1764 = vmatmul.mubr.bf16.gmra.mrb[0].mxu0 %v1726
    %v1765 = vpop.f32.mrb[0].mxu0
    %v1766 = vadd.f32 0.0, %v1765
    %v1767 = vpop.f32.mrb[0].mxu0
    %v1768 = vpop.f32.mrb[0].mxu0
    %v1769 = vadd.f32 0.0, %v1768
    %v1770 = vpop.f32.mrb[0].mxu0
    %1771 = vdwg.mxu0
    %v1773 = vsel %vm1536, %v1517, 0
    %v1776 = vsel %vm1536, %v1525, 0
    %1778 = vmatprep.subr.bf16.mxu0 0
    %1779 = vmatpush1.bf16.xpose.msra.mxu0 %v1776
    %1780 = vmatprep.subr.bf16.mxu0 0
    %1781 = vmatpush1.bf16.xpose.msra.mxu0 0
    %1782 = vmatprep.subr.bf16.mxu0 0
    %1783 = vmatpush1.bf16.xpose.msra.mxu0 0
    %1784 = vmatprep.subr.bf16.mxu0 0
    %1785 = vmatpush1.bf16.xpose.msra.mxu0 0
    %1786 = vmatprep.subr.bf16.mxu0 0
    %1787 = vmatpush1.bf16.xpose.msra.mxu0 0
    %1788 = vmatprep.subr.bf16.mxu0 0
    %1789 = vmatpush1.bf16.xpose.msra.mxu0 0
    %1790 = vmatprep.subr.bf16.mxu0 0
    %1791 = vmatpush1.bf16.xpose.msra.mxu0 0
    %1792 = vmatprep.subr.bf16.mxu0 0
    %1793 = vmatpush1.bf16.xpose.msra.mxu0 0
    %1794 = vmatprep.subr.bf16.mxu0 0
    %1795 = vmatpush1.bf16.xpose.msra.mxu0 0
    %1796 = vmatprep.subr.bf16.mxu0 0
    %1797 = vmatpush1.bf16.xpose.msra.mxu0 0
    %1798 = vmatprep.subr.bf16.mxu0 0
    %1799 = vmatpush1.bf16.xpose.msra.mxu0 0
    %1800 = vmatprep.subr.bf16.mxu0 0
    %1801 = vmatpush1.bf16.xpose.msra.mxu0 0
    %1802 = vmatprep.subr.bf16.mxu0 0
    %1803 = vmatpush1.bf16.xpose.msra.mxu0 0
    %1804 = vmatprep.subr.bf16.mxu0 0
    %1805 = vmatpush1.bf16.xpose.msra.mxu0 0
    %1806 = vmatprep.subr.bf16.mxu0 0
    %1807 = vmatpush1.bf16.xpose.msra.mxu0 0
    %1808 = vmatprep.subr.bf16.mxu0 0
    %1809 = vmatpush1.bf16.xpose.msra.mxu0 0
    %1810 = vmatprep.mubr.bf16.mxu0 0
    %1811 = vmatmul.mubr.bf16.gmra.mrb[0].mxu0 %v1773
    %v1812 = vpop.f32.mrb[0].mxu0
    %v1813 = vadd.f32 0.0, %v1812
    %v1814 = vpop.f32.mrb[0].mxu0
    %v1815 = vpop.f32.mrb[0].mxu0
    %v1816 = vadd.f32 0.0, %v1815
    %v1817 = vpop.f32.mrb[0].mxu0
    %1818 = vdwg.mxu0
    %v1820 = vsel %vm1536, %v1518, 0
    %v1823 = vsel %vm1536, %v1526, 0
    %1825 = vmatprep.subr.bf16.mxu0 0
    %1826 = vmatpush1.bf16.xpose.msra.mxu0 %v1823
    %1827 = vmatprep.subr.bf16.mxu0 0
    %1828 = vmatpush1.bf16.xpose.msra.mxu0 0
    %1829 = vmatprep.subr.bf16.mxu0 0
    %1830 = vmatpush1.bf16.xpose.msra.mxu0 0
    %1831 = vmatprep.subr.bf16.mxu0 0
    %1832 = vmatpush1.bf16.xpose.msra.mxu0 0
    %1833 = vmatprep.subr.bf16.mxu0 0
    %1834 = vmatpush1.bf16.xpose.msra.mxu0 0
    %1835 = vmatprep.subr.bf16.mxu0 0
    %1836 = vmatpush1.bf16.xpose.msra.mxu0 0
    %1837 = vmatprep.subr.bf16.mxu0 0
    %1838 = vmatpush1.bf16.xpose.msra.mxu0 0
    %1839 = vmatprep.subr.bf16.mxu0 0
    %1840 = vmatpush1.bf16.xpose.msra.mxu0 0
    %1841 = vmatprep.subr.bf16.mxu0 0
    %1842 = vmatpush1.bf16.xpose.msra.mxu0 0
    %1843 = vmatprep.subr.bf16.mxu0 0
    %1844 = vmatpush1.bf16.xpose.msra.mxu0 0
    %1845 = vmatprep.subr.bf16.mxu0 0
    %1846 = vmatpush1.bf16.xpose.msra.mxu0 0
    %1847 = vmatprep.subr.bf16.mxu0 0
    %1848 = vmatpush1.bf16.xpose.msra.mxu0 0
    %1849 = vmatprep.subr.bf16.mxu0 0
    %1850 = vmatpush1.bf16.xpose.msra.mxu0 0
    %1851 = vmatprep.subr.bf16.mxu0 0
    %1852 = vmatpush1.bf16.xpose.msra.mxu0 0
    %1853 = vmatprep.subr.bf16.mxu0 0
    %1854 = vmatpush1.bf16.xpose.msra.mxu0 0
    %1855 = vmatprep.subr.bf16.mxu0 0
    %1856 = vmatpush1.bf16.xpose.msra.mxu0 0
    %1857 = vmatprep.mubr.bf16.mxu0 0
    %1858 = vmatmul.mubr.bf16.gmra.mrb[0].mxu0 %v1820
    %v1859 = vpop.f32.mrb[0].mxu0
    %v1860 = vadd.f32 0.0, %v1859
    %v1861 = vpop.f32.mrb[0].mxu0
    %v1862 = vpop.f32.mrb[0].mxu0
    %v1863 = vadd.f32 0.0, %v1862
    %v1864 = vpop.f32.mrb[0].mxu0
    %1865 = vdwg.mxu0
    %v1867 = vsel %vm1536, %v1519, 0
    %v1870 = vsel %vm1536, %v1527, 0
    %1872 = vmatprep.subr.bf16.mxu0 0
    %1873 = vmatpush1.bf16.xpose.msra.mxu0 %v1870
    %1874 = vmatprep.subr.bf16.mxu0 0
    %1875 = vmatpush1.bf16.xpose.msra.mxu0 0
    %1876 = vmatprep.subr.bf16.mxu0 0
    %1877 = vmatpush1.bf16.xpose.msra.mxu0 0
    %1878 = vmatprep.subr.bf16.mxu0 0
    %1879 = vmatpush1.bf16.xpose.msra.mxu0 0
    %1880 = vmatprep.subr.bf16.mxu0 0
    %1881 = vmatpush1.bf16.xpose.msra.mxu0 0
    %1882 = vmatprep.subr.bf16.mxu0 0
    %1883 = vmatpush1.bf16.xpose.msra.mxu0 0
    %1884 = vmatprep.subr.bf16.mxu0 0
    %1885 = vmatpush1.bf16.xpose.msra.mxu0 0
    %1886 = vmatprep.subr.bf16.mxu0 0
    %1887 = vmatpush1.bf16.xpose.msra.mxu0 0
    %1888 = vmatprep.subr.bf16.mxu0 0
    %1889 = vmatpush1.bf16.xpose.msra.mxu0 0
    %1890 = vmatprep.subr.bf16.mxu0 0
    %1891 = vmatpush1.bf16.xpose.msra.mxu0 0
    %1892 = vmatprep.subr.bf16.mxu0 0
    %1893 = vmatpush1.bf16.xpose.msra.mxu0 0
    %1894 = vmatprep.subr.bf16.mxu0 0
    %1895 = vmatpush1.bf16.xpose.msra.mxu0 0
    %1896 = vmatprep.subr.bf16.mxu0 0
    %1897 = vmatpush1.bf16.xpose.msra.mxu0 0
    %1898 = vmatprep.subr.bf16.mxu0 0
    %1899 = vmatpush1.bf16.xpose.msra.mxu0 0
    %1900 = vmatprep.subr.bf16.mxu0 0
    %1901 = vmatpush1.bf16.xpose.msra.mxu0 0
    %1902 = vmatprep.subr.bf16.mxu0 0
    %1903 = vmatpush1.bf16.xpose.msra.mxu0 0
    %1904 = vmatprep.mubr.bf16.mxu0 0
    %1905 = vmatmul.mubr.bf16.gmra.mrb[0].mxu0 %v1867
    %v1906 = vpop.f32.mrb[0].mxu0
    %v1907 = vadd.f32 0.0, %v1906
    %v1908 = vpop.f32.mrb[0].mxu0
    %v1909 = vpop.f32.mrb[0].mxu0
    %v1910 = vadd.f32 0.0, %v1909
    %v1911 = vpop.f32.mrb[0].mxu0
    %1912 = vdwg.mxu0
    %v1913 = vmul.f32 %v1578, 0.17677669
    %v1914 = vmul.f32 %v1581, 0.17677669
    %v1915 = vmul.f32 %v1625, 0.17677669
    %v1916 = vmul.f32 %v1628, 0.17677669
    %v1917 = vmul.f32 %v1672, 0.17677669
    %v1918 = vmul.f32 %v1675, 0.17677669
    %v1919 = vmul.f32 %v1719, 0.17677669
    %v1920 = vmul.f32 %v1722, 0.17677669
    %v1921 = vmul.f32 %v1766, 0.17677669
    %v1922 = vmul.f32 %v1769, 0.17677669
    %v1923 = vmul.f32 %v1813, 0.17677669
    %v1924 = vmul.f32 %v1816, 0.17677669
    %v1925 = vmul.f32 %v1860, 0.17677669
    %v1926 = vmul.f32 %v1863, 0.17677669
    %v1927 = vmul.f32 %v1907, 0.17677669
    %v1928 = vmul.f32 %v1910, 0.17677669
    %v1929 = vadd.f32 %v1913, %v67
    %v1930 = vadd.f32 %v1914, %v67
    %v1931 = vadd.f32 %v1915, %v67
    %v1932 = vadd.f32 %v1916, %v67
    %v1933 = vadd.f32 %v1917, %v67
    %v1934 = vadd.f32 %v1918, %v67
    %v1935 = vadd.f32 %v1919, %v67
    %v1936 = vadd.f32 %v1920, %v67
    %v1937 = vadd.f32 %v1921, %v67
    %v1938 = vadd.f32 %v1922, %v67
    %v1939 = vadd.f32 %v1923, %v67
    %v1940 = vadd.f32 %v1924, %v67
    %v1941 = vadd.f32 %v1925, %v67
    %v1942 = vadd.f32 %v1926, %v67
    %v1943 = vadd.f32 %v1927, %v67
    %v1944 = vadd.f32 %v1928, %v67
    %vm1945 = vcmask 130048
    %v1946 = vsel %vm1945, %v1929, -inf
    %1947 = vmax.xlane.f32.xlu0 %v1946
    %v1948 = vpop.xlane.xlu0 %1947
    %v1949 = vsel %vm1945, %v1930, -inf
    %1950 = vmax.xlane.f32.xlu0 %v1949
    %v1951 = vpop.xlane.xlu0 %1950
    %v1952 = vsel %vm1945, %v1931, -inf
    %1953 = vmax.xlane.f32.xlu0 %v1952
    %v1954 = vpop.xlane.xlu0 %1953
    %v1955 = vsel %vm1945, %v1932, -inf
    %1956 = vmax.xlane.f32.xlu0 %v1955
    %v1957 = vpop.xlane.xlu0 %1956
    %v1958 = vsel %vm1945, %v1933, -inf
    %1959 = vmax.xlane.f32.xlu0 %v1958
    %v1960 = vpop.xlane.xlu0 %1959
    %v1961 = vsel %vm1945, %v1934, -inf
    %1962 = vmax.xlane.f32.xlu0 %v1961
    %v1963 = vpop.xlane.xlu0 %1962
    %v1964 = vsel %vm1945, %v1935, -inf
    %1965 = vmax.xlane.f32.xlu0 %v1964
    %v1966 = vpop.xlane.xlu0 %1965
    %v1967 = vsel %vm1945, %v1936, -inf
    %1968 = vmax.xlane.f32.xlu0 %v1967
    %v1969 = vpop.xlane.xlu0 %1968
    %v1970 = vsel %vm1945, %v1937, -inf
    %1971 = vmax.xlane.f32.xlu0 %v1970
    %v1972 = vpop.xlane.xlu0 %1971
    %v1973 = vsel %vm1945, %v1938, -inf
    %1974 = vmax.xlane.f32.xlu0 %v1973
    %v1975 = vpop.xlane.xlu0 %1974
    %v1976 = vsel %vm1945, %v1939, -inf
    %1977 = vmax.xlane.f32.xlu0 %v1976
    %v1978 = vpop.xlane.xlu0 %1977
    %v1979 = vsel %vm1945, %v1940, -inf
    %1980 = vmax.xlane.f32.xlu0 %v1979
    %v1981 = vpop.xlane.xlu0 %1980
    %v1982 = vsel %vm1945, %v1941, -inf
    %1983 = vmax.xlane.f32.xlu0 %v1982
    %v1984 = vpop.xlane.xlu0 %1983
    %v1985 = vsel %vm1945, %v1942, -inf
    %1986 = vmax.xlane.f32.xlu0 %v1985
    %v1987 = vpop.xlane.xlu0 %1986
    %v1988 = vsel %vm1945, %v1943, -inf
    %1989 = vmax.xlane.f32.xlu0 %v1988
    %v1990 = vpop.xlane.xlu0 %1989
    %v1991 = vsel %vm1945, %v1944, -inf
    %1992 = vmax.xlane.f32.xlu0 %v1991
    %v1993 = vpop.xlane.xlu0 %1992
    %v1994 = vsub.f32 %v1929, %v1948
    %v1995 = vsub.f32 %v1930, %v1951
    %v1996 = vsub.f32 %v1931, %v1954
    %v1997 = vsub.f32 %v1932, %v1957
    %v1998 = vsub.f32 %v1933, %v1960
    %v1999 = vsub.f32 %v1934, %v1963
    %v2000 = vsub.f32 %v1935, %v1966
    %v2001 = vsub.f32 %v1936, %v1969
    %v2002 = vsub.f32 %v1937, %v1972
    %v2003 = vsub.f32 %v1938, %v1975
    %v2004 = vsub.f32 %v1939, %v1978
    %v2005 = vsub.f32 %v1940, %v1981
    %v2006 = vsub.f32 %v1941, %v1984
    %v2007 = vsub.f32 %v1942, %v1987
    %v2008 = vsub.f32 %v1943, %v1990
    %v2009 = vsub.f32 %v1944, %v1993
    %v2010 = vmul.f32 %v1994, 1.442695
    %v2011 = vpow.pop %v2010
    %v2012 = vmul.f32 %v1995, 1.442695
    %v2013 = vpow.pop %v2012
    %v2014 = vmul.f32 %v1996, 1.442695
    %v2015 = vpow.pop %v2014
    %v2016 = vmul.f32 %v1997, 1.442695
    %v2017 = vpow.pop %v2016
    %v2018 = vmul.f32 %v1998, 1.442695
    %v2019 = vpow.pop %v2018
    %v2020 = vmul.f32 %v1999, 1.442695
    %v2021 = vpow.pop %v2020
    %v2022 = vmul.f32 %v2000, 1.442695
    %v2023 = vpow.pop %v2022
    %v2024 = vmul.f32 %v2001, 1.442695
    %v2025 = vpow.pop %v2024
    %v2026 = vmul.f32 %v2002, 1.442695
    %v2027 = vpow.pop %v2026
    %v2028 = vmul.f32 %v2003, 1.442695
    %v2029 = vpow.pop %v2028
    %v2030 = vmul.f32 %v2004, 1.442695
    %v2031 = vpow.pop %v2030
    %v2032 = vmul.f32 %v2005, 1.442695
    %v2033 = vpow.pop %v2032
    %v2034 = vmul.f32 %v2006, 1.442695
    %v2035 = vpow.pop %v2034
    %v2036 = vmul.f32 %v2007, 1.442695
    %v2037 = vpow.pop %v2036
    %v2038 = vmul.f32 %v2008, 1.442695
    %v2039 = vpow.pop %v2038
    %v2040 = vmul.f32 %v2009, 1.442695
    %v2041 = vpow.pop %v2040
    %v2042 = vsel %vm1945, %v2011, 0.0
    %2043 = vadd.xlane.f32.xlu0 %v2042
    %v2044 = vpop.xlane.xlu0 %2043
    %v2045 = vsel %vm1945, %v2013, 0.0
    %2046 = vadd.xlane.f32.xlu0 %v2045
    %v2047 = vpop.xlane.xlu0 %2046
    %v2048 = vsel %vm1945, %v2015, 0.0
    %2049 = vadd.xlane.f32.xlu0 %v2048
    %v2050 = vpop.xlane.xlu0 %2049
    %v2051 = vsel %vm1945, %v2017, 0.0
    %2052 = vadd.xlane.f32.xlu0 %v2051
    %v2053 = vpop.xlane.xlu0 %2052
    %v2054 = vsel %vm1945, %v2019, 0.0
    %2055 = vadd.xlane.f32.xlu0 %v2054
    %v2056 = vpop.xlane.xlu0 %2055
    %v2057 = vsel %vm1945, %v2021, 0.0
    %2058 = vadd.xlane.f32.xlu0 %v2057
    %v2059 = vpop.xlane.xlu0 %2058
    %v2060 = vsel %vm1945, %v2023, 0.0
    %2061 = vadd.xlane.f32.xlu0 %v2060
    %v2062 = vpop.xlane.xlu0 %2061
    %v2063 = vsel %vm1945, %v2025, 0.0
    %2064 = vadd.xlane.f32.xlu0 %v2063
    %v2065 = vpop.xlane.xlu0 %2064
    %v2066 = vsel %vm1945, %v2027, 0.0
    %2067 = vadd.xlane.f32.xlu0 %v2066
    %v2068 = vpop.xlane.xlu0 %2067
    %v2069 = vsel %vm1945, %v2029, 0.0
    %2070 = vadd.xlane.f32.xlu0 %v2069
    %v2071 = vpop.xlane.xlu0 %2070
    %v2072 = vsel %vm1945, %v2031, 0.0
    %2073 = vadd.xlane.f32.xlu0 %v2072
    %v2074 = vpop.xlane.xlu0 %2073
    %v2075 = vsel %vm1945, %v2033, 0.0
    %2076 = vadd.xlane.f32.xlu0 %v2075
    %v2077 = vpop.xlane.xlu0 %2076
    %v2078 = vsel %vm1945, %v2035, 0.0
    %2079 = vadd.xlane.f32.xlu0 %v2078
    %v2080 = vpop.xlane.xlu0 %2079
    %v2081 = vsel %vm1945, %v2037, 0.0
    %2082 = vadd.xlane.f32.xlu0 %v2081
    %v2083 = vpop.xlane.xlu0 %2082
    %v2084 = vsel %vm1945, %v2039, 0.0
    %2085 = vadd.xlane.f32.xlu0 %v2084
    %v2086 = vpop.xlane.xlu0 %2085
    %v2087 = vsel %vm1945, %v2041, 0.0
    %2088 = vadd.xlane.f32.xlu0 %v2087
    %v2089 = vpop.xlane.xlu0 %2088
    %v2090 = vrcp.pop %v2044
    %v2091 = vrcp.pop %v2047
    %v2092 = vrcp.pop %v2050
    %v2093 = vrcp.pop %v2053
    %v2094 = vrcp.pop %v2056
    %v2095 = vrcp.pop %v2059
    %v2096 = vrcp.pop %v2062
    %v2097 = vrcp.pop %v2065
    %v2098 = vrcp.pop %v2068
    %v2099 = vrcp.pop %v2071
    %v2100 = vrcp.pop %v2074
    %v2101 = vrcp.pop %v2077
    %v2102 = vrcp.pop %v2080
    %v2103 = vrcp.pop %v2083
    %v2104 = vrcp.pop %v2086
    %v2105 = vrcp.pop %v2089
    %v2106 = vmul.f32 %v2011, %v2090
    %v2107 = vmul.f32 %v2013, %v2091
    %v2108 = vmul.f32 %v2015, %v2092
    %v2109 = vmul.f32 %v2017, %v2093
    %v2110 = vmul.f32 %v2019, %v2094
    %v2111 = vmul.f32 %v2021, %v2095
    %v2112 = vmul.f32 %v2023, %v2096
    %v2113 = vmul.f32 %v2025, %v2097
    %v2114 = vmul.f32 %v2027, %v2098
    %v2115 = vmul.f32 %v2029, %v2099
    %v2116 = vmul.f32 %v2031, %v2100
    %v2117 = vmul.f32 %v2033, %v2101
    %v2118 = vmul.f32 %v2035, %v2102
    %v2119 = vmul.f32 %v2037, %v2103
    %v2120 = vmul.f32 %v2039, %v2104
    %v2121 = vmul.f32 %v2041, %v2105
    %v2122 = vpack.c.bf16 %v2107, %v2106
    %v2123 = vpack.c.bf16 %v2109, %v2108
    %v2124 = vpack.c.bf16 %v2111, %v2110
    %v2125 = vpack.c.bf16 %v2113, %v2112
    %v2126 = vpack.c.bf16 %v2115, %v2114
    %v2127 = vpack.c.bf16 %v2117, %v2116
    %v2128 = vpack.c.bf16 %v2119, %v2118
    %v2129 = vpack.c.bf16 %v2121, %v2120
    %v2131 = vsel %vm1945, %v2122, 0
    %2133 = vmatprep.subr.bf16.mxu0 0
    %2134 = vmatpush1.bf16.msra.mxu0 %v1528
    %2135 = vmatprep.subr.bf16.mxu0 0
    %2136 = vmatpush1.bf16.msra.mxu0 0
    %2137 = vmatprep.subr.bf16.mxu0 0
    %2138 = vmatpush1.bf16.msra.mxu0 0
    %2139 = vmatprep.subr.bf16.mxu0 0
    %2140 = vmatpush1.bf16.msra.mxu0 0
    %2141 = vmatprep.subr.bf16.mxu0 0
    %2142 = vmatpush1.bf16.msra.mxu0 0
    %2143 = vmatprep.subr.bf16.mxu0 0
    %2144 = vmatpush1.bf16.msra.mxu0 0
    %2145 = vmatprep.subr.bf16.mxu0 0
    %2146 = vmatpush1.bf16.msra.mxu0 0
    %2147 = vmatprep.subr.bf16.mxu0 0
    %2148 = vmatpush1.bf16.msra.mxu0 0
    %2149 = vmatprep.subr.bf16.mxu0 0
    %2150 = vmatpush1.bf16.msra.mxu0 0
    %2151 = vmatprep.subr.bf16.mxu0 0
    %2152 = vmatpush1.bf16.msra.mxu0 0
    %2153 = vmatprep.subr.bf16.mxu0 0
    %2154 = vmatpush1.bf16.msra.mxu0 0
    %2155 = vmatprep.subr.bf16.mxu0 0
    %2156 = vmatpush1.bf16.msra.mxu0 0
    %2157 = vmatprep.subr.bf16.mxu0 0
    %2158 = vmatpush1.bf16.msra.mxu0 0
    %2159 = vmatprep.subr.bf16.mxu0 0
    %2160 = vmatpush1.bf16.msra.mxu0 0
    %2161 = vmatprep.subr.bf16.mxu0 0
    %2162 = vmatpush1.bf16.msra.mxu0 0
    %2163 = vmatprep.subr.bf16.mxu0 0
    %2164 = vmatpush1.bf16.msra.mxu0 0
    %2165 = vmatprep.mubr.bf16.mxu0 0
    %2166 = vmatmul.mubr.bf16.gmra.mrb[0].mxu0 %v2131
    %v2167 = vpop.f32.mrb[0].mxu0
    %v2168 = vadd.f32 0.0, %v2167
    %v2169 = vpop.f32.mrb[0].mxu0
    %v2170 = vpop.f32.mrb[0].mxu0
    %v2171 = vadd.f32 0.0, %v2170
    %v2172 = vpop.f32.mrb[0].mxu0
    %2173 = vdwg.mxu0
    %v2175 = vsel %vm1945, %v2123, 0
    %2177 = vmatprep.subr.bf16.mxu0 0
    %2178 = vmatpush1.bf16.msra.mxu0 %v1529
    %2179 = vmatprep.subr.bf16.mxu0 0
    %2180 = vmatpush1.bf16.msra.mxu0 0
    %2181 = vmatprep.subr.bf16.mxu0 0
    %2182 = vmatpush1.bf16.msra.mxu0 0
    %2183 = vmatprep.subr.bf16.mxu0 0
    %2184 = vmatpush1.bf16.msra.mxu0 0
    %2185 = vmatprep.subr.bf16.mxu0 0
    %2186 = vmatpush1.bf16.msra.mxu0 0
    %2187 = vmatprep.subr.bf16.mxu0 0
    %2188 = vmatpush1.bf16.msra.mxu0 0
    %2189 = vmatprep.subr.bf16.mxu0 0
    %2190 = vmatpush1.bf16.msra.mxu0 0
    %2191 = vmatprep.subr.bf16.mxu0 0
    %2192 = vmatpush1.bf16.msra.mxu0 0
    %2193 = vmatprep.subr.bf16.mxu0 0
    %2194 = vmatpush1.bf16.msra.mxu0 0
    %2195 = vmatprep.subr.bf16.mxu0 0
    %2196 = vmatpush1.bf16.msra.mxu0 0
    %2197 = vmatprep.subr.bf16.mxu0 0
    %2198 = vmatpush1.bf16.msra.mxu0 0
    %2199 = vmatprep.subr.bf16.mxu0 0
    %2200 = vmatpush1.bf16.msra.mxu0 0
    %2201 = vmatprep.subr.bf16.mxu0 0
    %2202 = vmatpush1.bf16.msra.mxu0 0
    %2203 = vmatprep.subr.bf16.mxu0 0
    %2204 = vmatpush1.bf16.msra.mxu0 0
    %2205 = vmatprep.subr.bf16.mxu0 0
    %2206 = vmatpush1.bf16.msra.mxu0 0
    %2207 = vmatprep.subr.bf16.mxu0 0
    %2208 = vmatpush1.bf16.msra.mxu0 0
    %2209 = vmatprep.mubr.bf16.mxu0 0
    %2210 = vmatmul.mubr.bf16.gmra.mrb[0].mxu0 %v2175
    %v2211 = vpop.f32.mrb[0].mxu0
    %v2212 = vadd.f32 0.0, %v2211
    %v2213 = vpop.f32.mrb[0].mxu0
    %v2214 = vpop.f32.mrb[0].mxu0
    %v2215 = vadd.f32 0.0, %v2214
    %v2216 = vpop.f32.mrb[0].mxu0
    %2217 = vdwg.mxu0
    %v2219 = vsel %vm1945, %v2124, 0
    %2221 = vmatprep.subr.bf16.mxu0 0
    %2222 = vmatpush1.bf16.msra.mxu0 %v1530
    %2223 = vmatprep.subr.bf16.mxu0 0
    %2224 = vmatpush1.bf16.msra.mxu0 0
    %2225 = vmatprep.subr.bf16.mxu0 0
    %2226 = vmatpush1.bf16.msra.mxu0 0
    %2227 = vmatprep.subr.bf16.mxu0 0
    %2228 = vmatpush1.bf16.msra.mxu0 0
    %2229 = vmatprep.subr.bf16.mxu0 0
    %2230 = vmatpush1.bf16.msra.mxu0 0
    %2231 = vmatprep.subr.bf16.mxu0 0
    %2232 = vmatpush1.bf16.msra.mxu0 0
    %2233 = vmatprep.subr.bf16.mxu0 0
    %2234 = vmatpush1.bf16.msra.mxu0 0
    %2235 = vmatprep.subr.bf16.mxu0 0
    %2236 = vmatpush1.bf16.msra.mxu0 0
    %2237 = vmatprep.subr.bf16.mxu0 0
    %2238 = vmatpush1.bf16.msra.mxu0 0
    %2239 = vmatprep.subr.bf16.mxu0 0
    %2240 = vmatpush1.bf16.msra.mxu0 0
    %2241 = vmatprep.subr.bf16.mxu0 0
    %2242 = vmatpush1.bf16.msra.mxu0 0
    %2243 = vmatprep.subr.bf16.mxu0 0
    %2244 = vmatpush1.bf16.msra.mxu0 0
    %2245 = vmatprep.subr.bf16.mxu0 0
    %2246 = vmatpush1.bf16.msra.mxu0 0
    %2247 = vmatprep.subr.bf16.mxu0 0
    %2248 = vmatpush1.bf16.msra.mxu0 0
    %2249 = vmatprep.subr.bf16.mxu0 0
    %2250 = vmatpush1.bf16.msra.mxu0 0
    %2251 = vmatprep.subr.bf16.mxu0 0
    %2252 = vmatpush1.bf16.msra.mxu0 0
    %2253 = vmatprep.mubr.bf16.mxu0 0
    %2254 = vmatmul.mubr.bf16.gmra.mrb[0].mxu0 %v2219
    %v2255 = vpop.f32.mrb[0].mxu0
    %v2256 = vadd.f32 0.0, %v2255
    %v2257 = vpop.f32.mrb[0].mxu0
    %v2258 = vpop.f32.mrb[0].mxu0
    %v2259 = vadd.f32 0.0, %v2258
    %v2260 = vpop.f32.mrb[0].mxu0
    %2261 = vdwg.mxu0
    %v2263 = vsel %vm1945, %v2125, 0
    %2265 = vmatprep.subr.bf16.mxu0 0
    %2266 = vmatpush1.bf16.msra.mxu0 %v1531
    %2267 = vmatprep.subr.bf16.mxu0 0
    %2268 = vmatpush1.bf16.msra.mxu0 0
    %2269 = vmatprep.subr.bf16.mxu0 0
    %2270 = vmatpush1.bf16.msra.mxu0 0
    %2271 = vmatprep.subr.bf16.mxu0 0
    %2272 = vmatpush1.bf16.msra.mxu0 0
    %2273 = vmatprep.subr.bf16.mxu0 0
    %2274 = vmatpush1.bf16.msra.mxu0 0
    %2275 = vmatprep.subr.bf16.mxu0 0
    %2276 = vmatpush1.bf16.msra.mxu0 0
    %2277 = vmatprep.subr.bf16.mxu0 0
    %2278 = vmatpush1.bf16.msra.mxu0 0
    %2279 = vmatprep.subr.bf16.mxu0 0
    %2280 = vmatpush1.bf16.msra.mxu0 0
    %2281 = vmatprep.subr.bf16.mxu0 0
    %2282 = vmatpush1.bf16.msra.mxu0 0
    %2283 = vmatprep.subr.bf16.mxu0 0
    %2284 = vmatpush1.bf16.msra.mxu0 0
    %2285 = vmatprep.subr.bf16.mxu0 0
    %2286 = vmatpush1.bf16.msra.mxu0 0
    %2287 = vmatprep.subr.bf16.mxu0 0
    %2288 = vmatpush1.bf16.msra.mxu0 0
    %2289 = vmatprep.subr.bf16.mxu0 0
    %2290 = vmatpush1.bf16.msra.mxu0 0
    %2291 = vmatprep.subr.bf16.mxu0 0
    %2292 = vmatpush1.bf16.msra.mxu0 0
    %2293 = vmatprep.subr.bf16.mxu0 0
    %2294 = vmatpush1.bf16.msra.mxu0 0
    %2295 = vmatprep.subr.bf16.mxu0 0
    %2296 = vmatpush1.bf16.msra.mxu0 0
    %2297 = vmatprep.mubr.bf16.mxu0 0
    %2298 = vmatmul.mubr.bf16.gmra.mrb[0].mxu0 %v2263
    %v2299 = vpop.f32.mrb[0].mxu0
    %v2300 = vadd.f32 0.0, %v2299
    %v2301 = vpop.f32.mrb[0].mxu0
    %v2302 = vpop.f32.mrb[0].mxu0
    %v2303 = vadd.f32 0.0, %v2302
    %v2304 = vpop.f32.mrb[0].mxu0
    %2305 = vdwg.mxu0
    %v2307 = vsel %vm1945, %v2126, 0
    %2309 = vmatprep.subr.bf16.mxu0 0
    %2310 = vmatpush1.bf16.msra.mxu0 %v1532
    %2311 = vmatprep.subr.bf16.mxu0 0
    %2312 = vmatpush1.bf16.msra.mxu0 0
    %2313 = vmatprep.subr.bf16.mxu0 0
    %2314 = vmatpush1.bf16.msra.mxu0 0
    %2315 = vmatprep.subr.bf16.mxu0 0
    %2316 = vmatpush1.bf16.msra.mxu0 0
    %2317 = vmatprep.subr.bf16.mxu0 0
    %2318 = vmatpush1.bf16.msra.mxu0 0
    %2319 = vmatprep.subr.bf16.mxu0 0
    %2320 = vmatpush1.bf16.msra.mxu0 0
    %2321 = vmatprep.subr.bf16.mxu0 0
    %2322 = vmatpush1.bf16.msra.mxu0 0
    %2323 = vmatprep.subr.bf16.mxu0 0
    %2324 = vmatpush1.bf16.msra.mxu0 0
    %2325 = vmatprep.subr.bf16.mxu0 0
    %2326 = vmatpush1.bf16.msra.mxu0 0
    %2327 = vmatprep.subr.bf16.mxu0 0
    %2328 = vmatpush1.bf16.msra.mxu0 0
    %2329 = vmatprep.subr.bf16.mxu0 0
    %2330 = vmatpush1.bf16.msra.mxu0 0
    %2331 = vmatprep.subr.bf16.mxu0 0
    %2332 = vmatpush1.bf16.msra.mxu0 0
    %2333 = vmatprep.subr.bf16.mxu0 0
    %2334 = vmatpush1.bf16.msra.mxu0 0
    %2335 = vmatprep.subr.bf16.mxu0 0
    %2336 = vmatpush1.bf16.msra.mxu0 0
    %2337 = vmatprep.subr.bf16.mxu0 0
    %2338 = vmatpush1.bf16.msra.mxu0 0
    %2339 = vmatprep.subr.bf16.mxu0 0
    %2340 = vmatpush1.bf16.msra.mxu0 0
    %2341 = vmatprep.mubr.bf16.mxu0 0
    %2342 = vmatmul.mubr.bf16.gmra.mrb[0].mxu0 %v2307
    %v2343 = vpop.f32.mrb[0].mxu0
    %v2344 = vadd.f32 0.0, %v2343
    %v2345 = vpop.f32.mrb[0].mxu0
    %v2346 = vpop.f32.mrb[0].mxu0
    %v2347 = vadd.f32 0.0, %v2346
    %v2348 = vpop.f32.mrb[0].mxu0
    %2349 = vdwg.mxu0
    %v2351 = vsel %vm1945, %v2127, 0
    %2353 = vmatprep.subr.bf16.mxu0 0
    %2354 = vmatpush1.bf16.msra.mxu0 %v1533
    %2355 = vmatprep.subr.bf16.mxu0 0
    %2356 = vmatpush1.bf16.msra.mxu0 0
    %2357 = vmatprep.subr.bf16.mxu0 0
    %2358 = vmatpush1.bf16.msra.mxu0 0
    %2359 = vmatprep.subr.bf16.mxu0 0
    %2360 = vmatpush1.bf16.msra.mxu0 0
    %2361 = vmatprep.subr.bf16.mxu0 0
    %2362 = vmatpush1.bf16.msra.mxu0 0
    %2363 = vmatprep.subr.bf16.mxu0 0
    %2364 = vmatpush1.bf16.msra.mxu0 0
    %2365 = vmatprep.subr.bf16.mxu0 0
    %2366 = vmatpush1.bf16.msra.mxu0 0
    %2367 = vmatprep.subr.bf16.mxu0 0
    %2368 = vmatpush1.bf16.msra.mxu0 0
    %2369 = vmatprep.subr.bf16.mxu0 0
    %2370 = vmatpush1.bf16.msra.mxu0 0
    %2371 = vmatprep.subr.bf16.mxu0 0
    %2372 = vmatpush1.bf16.msra.mxu0 0
    %2373 = vmatprep.subr.bf16.mxu0 0
    %2374 = vmatpush1.bf16.msra.mxu0 0
    %2375 = vmatprep.subr.bf16.mxu0 0
    %2376 = vmatpush1.bf16.msra.mxu0 0
    %2377 = vmatprep.subr.bf16.mxu0 0
    %2378 = vmatpush1.bf16.msra.mxu0 0
    %2379 = vmatprep.subr.bf16.mxu0 0
    %2380 = vmatpush1.bf16.msra.mxu0 0
    %2381 = vmatprep.subr.bf16.mxu0 0
    %2382 = vmatpush1.bf16.msra.mxu0 0
    %2383 = vmatprep.subr.bf16.mxu0 0
    %2384 = vmatpush1.bf16.msra.mxu0 0
    %2385 = vmatprep.mubr.bf16.mxu0 0
    %2386 = vmatmul.mubr.bf16.gmra.mrb[0].mxu0 %v2351
    %v2387 = vpop.f32.mrb[0].mxu0
    %v2388 = vadd.f32 0.0, %v2387
    %v2389 = vpop.f32.mrb[0].mxu0
    %v2390 = vpop.f32.mrb[0].mxu0
    %v2391 = vadd.f32 0.0, %v2390
    %v2392 = vpop.f32.mrb[0].mxu0
    %2393 = vdwg.mxu0
    %v2395 = vsel %vm1945, %v2128, 0
    %2397 = vmatprep.subr.bf16.mxu0 0
    %2398 = vmatpush1.bf16.msra.mxu0 %v1534
    %2399 = vmatprep.subr.bf16.mxu0 0
    %2400 = vmatpush1.bf16.msra.mxu0 0
    %2401 = vmatprep.subr.bf16.mxu0 0
    %2402 = vmatpush1.bf16.msra.mxu0 0
    %2403 = vmatprep.subr.bf16.mxu0 0
    %2404 = vmatpush1.bf16.msra.mxu0 0
    %2405 = vmatprep.subr.bf16.mxu0 0
    %2406 = vmatpush1.bf16.msra.mxu0 0
    %2407 = vmatprep.subr.bf16.mxu0 0
    %2408 = vmatpush1.bf16.msra.mxu0 0
    %2409 = vmatprep.subr.bf16.mxu0 0
    %2410 = vmatpush1.bf16.msra.mxu0 0
    %2411 = vmatprep.subr.bf16.mxu0 0
    %2412 = vmatpush1.bf16.msra.mxu0 0
    %2413 = vmatprep.subr.bf16.mxu0 0
    %2414 = vmatpush1.bf16.msra.mxu0 0
    %2415 = vmatprep.subr.bf16.mxu0 0
    %2416 = vmatpush1.bf16.msra.mxu0 0
    %2417 = vmatprep.subr.bf16.mxu0 0
    %2418 = vmatpush1.bf16.msra.mxu0 0
    %2419 = vmatprep.subr.bf16.mxu0 0
    %2420 = vmatpush1.bf16.msra.mxu0 0
    %2421 = vmatprep.subr.bf16.mxu0 0
    %2422 = vmatpush1.bf16.msra.mxu0 0
    %2423 = vmatprep.subr.bf16.mxu0 0
    %2424 = vmatpush1.bf16.msra.mxu0 0
    %2425 = vmatprep.subr.bf16.mxu0 0
    %2426 = vmatpush1.bf16.msra.mxu0 0
    %2427 = vmatprep.subr.bf16.mxu0 0
    %2428 = vmatpush1.bf16.msra.mxu0 0
    %2429 = vmatprep.mubr.bf16.mxu0 0
    %2430 = vmatmul.mubr.bf16.gmra.mrb[0].mxu0 %v2395
    %v2431 = vpop.f32.mrb[0].mxu0
    %v2432 = vadd.f32 0.0, %v2431
    %v2433 = vpop.f32.mrb[0].mxu0
    %v2434 = vpop.f32.mrb[0].mxu0
    %v2435 = vadd.f32 0.0, %v2434
    %v2436 = vpop.f32.mrb[0].mxu0
    %2437 = vdwg.mxu0
    %v2439 = vsel %vm1945, %v2129, 0
    %2441 = vmatprep.subr.bf16.mxu0 0
    %2442 = vmatpush1.bf16.msra.mxu0 %v1535
    %2443 = vmatprep.subr.bf16.mxu0 0
    %2444 = vmatpush1.bf16.msra.mxu0 0
    %2445 = vmatprep.subr.bf16.mxu0 0
    %2446 = vmatpush1.bf16.msra.mxu0 0
    %2447 = vmatprep.subr.bf16.mxu0 0
    %2448 = vmatpush1.bf16.msra.mxu0 0
    %2449 = vmatprep.subr.bf16.mxu0 0
    %2450 = vmatpush1.bf16.msra.mxu0 0
    %2451 = vmatprep.subr.bf16.mxu0 0
    %2452 = vmatpush1.bf16.msra.mxu0 0
    %2453 = vmatprep.subr.bf16.mxu0 0
    %2454 = vmatpush1.bf16.msra.mxu0 0
    %2455 = vmatprep.subr.bf16.mxu0 0
    %2456 = vmatpush1.bf16.msra.mxu0 0
    %2457 = vmatprep.subr.bf16.mxu0 0
    %2458 = vmatpush1.bf16.msra.mxu0 0
    %2459 = vmatprep.subr.bf16.mxu0 0
    %2460 = vmatpush1.bf16.msra.mxu0 0
    %2461 = vmatprep.subr.bf16.mxu0 0
    %2462 = vmatpush1.bf16.msra.mxu0 0
    %2463 = vmatprep.subr.bf16.mxu0 0
    %2464 = vmatpush1.bf16.msra.mxu0 0
    %2465 = vmatprep.subr.bf16.mxu0 0
    %2466 = vmatpush1.bf16.msra.mxu0 0
    %2467 = vmatprep.subr.bf16.mxu0 0
    %2468 = vmatpush1.bf16.msra.mxu0 0
    %2469 = vmatprep.subr.bf16.mxu0 0
    %2470 = vmatpush1.bf16.msra.mxu0 0
    %2471 = vmatprep.subr.bf16.mxu0 0
    %2472 = vmatpush1.bf16.msra.mxu0 0
    %2473 = vmatprep.mubr.bf16.mxu0 0
    %2474 = vmatmul.mubr.bf16.gmra.mrb[0].mxu0 %v2439
    %v2475 = vpop.f32.mrb[0].mxu0
    %v2476 = vadd.f32 0.0, %v2475
    %v2477 = vpop.f32.mrb[0].mxu0
    %v2478 = vpop.f32.mrb[0].mxu0
    %v2479 = vadd.f32 0.0, %v2478
    %v2480 = vpop.f32.mrb[0].mxu0
    %2481 = vdwg.mxu0
    %v2482 = vpack.c.bf16 %v2171, %v2168
    %v2483 = vpack.c.bf16 %v2215, %v2212
    %v2484 = vpack.c.bf16 %v2259, %v2256
    %v2485 = vpack.c.bf16 %v2303, %v2300
    %v2486 = vpack.c.bf16 %v2347, %v2344
    %v2487 = vpack.c.bf16 %v2391, %v2388
    %v2488 = vpack.c.bf16 %v2435, %v2432
    %v2489 = vpack.c.bf16 %v2479, %v2476
    %s2490 = smul.u32 %s69, 16
    %s2491 = smul.addr %s2490, 4
    %s2492 = scalar_lea.vmem %s6, %s2491
    %v2493 = vld [vmem:[%s2492] sm:$0xf]
    %v2494 = vld [vmem:[%s2492 + $0x4] sm:$0xf]
    %v2495 = vld [vmem:[%s2492 + $0x8] sm:$0xf]
    %v2496 = vld [vmem:[%s2492 + $0xc] sm:$0xf]
    %v2497 = vld [vmem:[%s2492 + $0x10] sm:$0xf]
    %v2498 = vld [vmem:[%s2492 + $0x14] sm:$0xf]
    %v2499 = vld [vmem:[%s2492 + $0x18] sm:$0xf]
    %v2500 = vld [vmem:[%s2492 + $0x1c] sm:$0xf]
    %v2501 = vld [vmem:[%s2492 + $0x20] sm:$0xf]
    %v2502 = vld [vmem:[%s2492 + $0x24] sm:$0xf]
    %v2503 = vld [vmem:[%s2492 + $0x28] sm:$0xf]
    %v2504 = vld [vmem:[%s2492 + $0x2c] sm:$0xf]
    %v2505 = vld [vmem:[%s2492 + $0x30] sm:$0xf]
    %v2506 = vld [vmem:[%s2492 + $0x34] sm:$0xf]
    %v2507 = vld [vmem:[%s2492 + $0x38] sm:$0xf]
    %v2508 = vld [vmem:[%s2492 + $0x3c] sm:$0xf]
    %v2513 = vunpack.c.l.b16 %v2493
    %v2514 = vunpack.c.l.b16 %v2494
    %v2515 = vunpack.c.l.b16 %v2495
    %v2516 = vunpack.c.l.b16 %v2496
    %v2517 = vpack.c.b16 %v2514, %v2513
    %v2518 = vpack.c.b16 %v2516, %v2515
    %v2522 = vsel %vm1536, %v2482, 0
    %v2525 = vsel %vm1536, %v2483, 0
    %2527 = vmatprep.subr.bf16.mxu0 0
    %2528 = vmatpush1.bf16.msra.mxu0 %v2517
    %2529 = vmatprep.subr.bf16.mxu0 0
    %2530 = vmatpush1.bf16.msra.mxu0 %v2518
    %2531 = vmatprep.subr.bf16.mxu0 0
    %2532 = vmatpush1.bf16.msra.mxu0 0
    %2533 = vmatprep.subr.bf16.mxu0 0
    %2534 = vmatpush1.bf16.msra.mxu0 0
    %2535 = vmatprep.subr.bf16.mxu0 0
    %2536 = vmatpush1.bf16.msra.mxu0 0
    %2537 = vmatprep.subr.bf16.mxu0 0
    %2538 = vmatpush1.bf16.msra.mxu0 0
    %2539 = vmatprep.subr.bf16.mxu0 0
    %2540 = vmatpush1.bf16.msra.mxu0 0
    %2541 = vmatprep.subr.bf16.mxu0 0
    %2542 = vmatpush1.bf16.msra.mxu0 0
    %2543 = vmatprep.subr.bf16.mxu0 0
    %2544 = vmatpush1.bf16.msra.mxu0 0
    %2545 = vmatprep.subr.bf16.mxu0 0
    %2546 = vmatpush1.bf16.msra.mxu0 0
    %2547 = vmatprep.subr.bf16.mxu0 0
    %2548 = vmatpush1.bf16.msra.mxu0 0
    %2549 = vmatprep.subr.bf16.mxu0 0
    %2550 = vmatpush1.bf16.msra.mxu0 0
    %2551 = vmatprep.subr.bf16.mxu0 0
    %2552 = vmatpush1.bf16.msra.mxu0 0
    %2553 = vmatprep.subr.bf16.mxu0 0
    %2554 = vmatpush1.bf16.msra.mxu0 0
    %2555 = vmatprep.subr.bf16.mxu0 0
    %2556 = vmatpush1.bf16.msra.mxu0 0
    %2557 = vmatprep.subr.bf16.mxu0 0
    %2558 = vmatpush1.bf16.msra.mxu0 0
    %2559 = vmatprep.mubr.bf16.mxu0 0
    %2560 = vmatmul.mubr.bf16.gmra.mrb[0].mxu0 %v2522
    %v2561 = vpop.f32.mrb[0].mxu0
    %v2562 = vadd.f32 0.0, %v2561
    %v2563 = vpop.f32.mrb[0].mxu0
    %v2564 = vpop.f32.mrb[0].mxu0
    %v2565 = vadd.f32 0.0, %v2564
    %v2566 = vpop.f32.mrb[0].mxu0
    %2567 = vmatprep.mubr.bf16.mxu0 0
    %2568 = vmatmul.mubr.bf16.gmra.mrb[0].mxu0 %v2525
    %v2569 = vpop.f32.mrb[0].mxu0
    %v2570 = vadd.f32 0.0, %v2569
    %v2571 = vpop.f32.mrb[0].mxu0
    %v2572 = vpop.f32.mrb[0].mxu0
    %v2573 = vadd.f32 0.0, %v2572
    %v2574 = vpop.f32.mrb[0].mxu0
    %2575 = vdwg.mxu0
    %v2580 = vunpack.c.l.b16 %v2497
    %v2581 = vunpack.c.l.b16 %v2498
    %v2582 = vunpack.c.l.b16 %v2499
    %v2583 = vunpack.c.l.b16 %v2500
    %v2584 = vpack.c.b16 %v2581, %v2580
    %v2585 = vpack.c.b16 %v2583, %v2582
    %v2589 = vsel %vm1536, %v2484, 0
    %v2592 = vsel %vm1536, %v2485, 0
    %2594 = vmatprep.subr.bf16.mxu0 0
    %2595 = vmatpush1.bf16.msra.mxu0 %v2584
    %2596 = vmatprep.subr.bf16.mxu0 0
    %2597 = vmatpush1.bf16.msra.mxu0 %v2585
    %2598 = vmatprep.subr.bf16.mxu0 0
    %2599 = vmatpush1.bf16.msra.mxu0 0
    %2600 = vmatprep.subr.bf16.mxu0 0
    %2601 = vmatpush1.bf16.msra.mxu0 0
    %2602 = vmatprep.subr.bf16.mxu0 0
    %2603 = vmatpush1.bf16.msra.mxu0 0
    %2604 = vmatprep.subr.bf16.mxu0 0
    %2605 = vmatpush1.bf16.msra.mxu0 0
    %2606 = vmatprep.subr.bf16.mxu0 0
    %2607 = vmatpush1.bf16.msra.mxu0 0
    %2608 = vmatprep.subr.bf16.mxu0 0
    %2609 = vmatpush1.bf16.msra.mxu0 0
    %2610 = vmatprep.subr.bf16.mxu0 0
    %2611 = vmatpush1.bf16.msra.mxu0 0
    %2612 = vmatprep.subr.bf16.mxu0 0
    %2613 = vmatpush1.bf16.msra.mxu0 0
    %2614 = vmatprep.subr.bf16.mxu0 0
    %2615 = vmatpush1.bf16.msra.mxu0 0
    %2616 = vmatprep.subr.bf16.mxu0 0
    %2617 = vmatpush1.bf16.msra.mxu0 0
    %2618 = vmatprep.subr.bf16.mxu0 0
    %2619 = vmatpush1.bf16.msra.mxu0 0
    %2620 = vmatprep.subr.bf16.mxu0 0
    %2621 = vmatpush1.bf16.msra.mxu0 0
    %2622 = vmatprep.subr.bf16.mxu0 0
    %2623 = vmatpush1.bf16.msra.mxu0 0
    %2624 = vmatprep.subr.bf16.mxu0 0
    %2625 = vmatpush1.bf16.msra.mxu0 0
    %2626 = vmatprep.mubr.bf16.mxu0 0
    %2627 = vmatmul.mubr.bf16.gmra.mrb[0].mxu0 %v2589
    %v2628 = vpop.f32.mrb[0].mxu0
    %v2629 = vadd.f32 0.0, %v2628
    %v2630 = vpop.f32.mrb[0].mxu0
    %v2631 = vpop.f32.mrb[0].mxu0
    %v2632 = vadd.f32 0.0, %v2631
    %v2633 = vpop.f32.mrb[0].mxu0
    %2634 = vmatprep.mubr.bf16.mxu0 0
    %2635 = vmatmul.mubr.bf16.gmra.mrb[0].mxu0 %v2592
    %v2636 = vpop.f32.mrb[0].mxu0
    %v2637 = vadd.f32 0.0, %v2636
    %v2638 = vpop.f32.mrb[0].mxu0
    %v2639 = vpop.f32.mrb[0].mxu0
    %v2640 = vadd.f32 0.0, %v2639
    %v2641 = vpop.f32.mrb[0].mxu0
    %2642 = vdwg.mxu0
    %v2647 = vunpack.c.l.b16 %v2501
    %v2648 = vunpack.c.l.b16 %v2502
    %v2649 = vunpack.c.l.b16 %v2503
    %v2650 = vunpack.c.l.b16 %v2504
    %v2651 = vpack.c.b16 %v2648, %v2647
    %v2652 = vpack.c.b16 %v2650, %v2649
    %v2656 = vsel %vm1536, %v2486, 0
    %v2659 = vsel %vm1536, %v2487, 0
    %2661 = vmatprep.subr.bf16.mxu0 0
    %2662 = vmatpush1.bf16.msra.mxu0 %v2651
    %2663 = vmatprep.subr.bf16.mxu0 0
    %2664 = vmatpush1.bf16.msra.mxu0 %v2652
    %2665 = vmatprep.subr.bf16.mxu0 0
    %2666 = vmatpush1.bf16.msra.mxu0 0
    %2667 = vmatprep.subr.bf16.mxu0 0
    %2668 = vmatpush1.bf16.msra.mxu0 0
    %2669 = vmatprep.subr.bf16.mxu0 0
    %2670 = vmatpush1.bf16.msra.mxu0 0
    %2671 = vmatprep.subr.bf16.mxu0 0
    %2672 = vmatpush1.bf16.msra.mxu0 0
    %2673 = vmatprep.subr.bf16.mxu0 0
    %2674 = vmatpush1.bf16.msra.mxu0 0
    %2675 = vmatprep.subr.bf16.mxu0 0
    %2676 = vmatpush1.bf16.msra.mxu0 0
    %2677 = vmatprep.subr.bf16.mxu0 0
    %2678 = vmatpush1.bf16.msra.mxu0 0
    %2679 = vmatprep.subr.bf16.mxu0 0
    %2680 = vmatpush1.bf16.msra.mxu0 0
    %2681 = vmatprep.subr.bf16.mxu0 0
    %2682 = vmatpush1.bf16.msra.mxu0 0
    %2683 = vmatprep.subr.bf16.mxu0 0
    %2684 = vmatpush1.bf16.msra.mxu0 0
    %2685 = vmatprep.subr.bf16.mxu0 0
    %2686 = vmatpush1.bf16.msra.mxu0 0
    %2687 = vmatprep.subr.bf16.mxu0 0
    %2688 = vmatpush1.bf16.msra.mxu0 0
    %2689 = vmatprep.subr.bf16.mxu0 0
    %2690 = vmatpush1.bf16.msra.mxu0 0
    %2691 = vmatprep.subr.bf16.mxu0 0
    %2692 = vmatpush1.bf16.msra.mxu0 0
    %2693 = vmatprep.mubr.bf16.mxu0 0
    %2694 = vmatmul.mubr.bf16.gmra.mrb[0].mxu0 %v2656
    %v2695 = vpop.f32.mrb[0].mxu0
    %v2696 = vadd.f32 0.0, %v2695
    %v2697 = vpop.f32.mrb[0].mxu0
    %v2698 = vpop.f32.mrb[0].mxu0
    %v2699 = vadd.f32 0.0, %v2698
    %v2700 = vpop.f32.mrb[0].mxu0
    %2701 = vmatprep.mubr.bf16.mxu0 0
    %2702 = vmatmul.mubr.bf16.gmra.mrb[0].mxu0 %v2659
    %v2703 = vpop.f32.mrb[0].mxu0
    %v2704 = vadd.f32 0.0, %v2703
    %v2705 = vpop.f32.mrb[0].mxu0
    %v2706 = vpop.f32.mrb[0].mxu0
    %v2707 = vadd.f32 0.0, %v2706
    %v2708 = vpop.f32.mrb[0].mxu0
    %2709 = vdwg.mxu0
    %v2714 = vunpack.c.l.b16 %v2505
    %v2715 = vunpack.c.l.b16 %v2506
    %v2716 = vunpack.c.l.b16 %v2507
    %v2717 = vunpack.c.l.b16 %v2508
    %v2718 = vpack.c.b16 %v2715, %v2714
    %v2719 = vpack.c.b16 %v2717, %v2716
    %v2723 = vsel %vm1536, %v2488, 0
    %v2726 = vsel %vm1536, %v2489, 0
    %2728 = vmatprep.subr.bf16.mxu0 0
    %2729 = vmatpush1.bf16.msra.mxu0 %v2718
    %2730 = vmatprep.subr.bf16.mxu0 0
    %2731 = vmatpush1.bf16.msra.mxu0 %v2719
    %2732 = vmatprep.subr.bf16.mxu0 0
    %2733 = vmatpush1.bf16.msra.mxu0 0
    %2734 = vmatprep.subr.bf16.mxu0 0
    %2735 = vmatpush1.bf16.msra.mxu0 0
    %2736 = vmatprep.subr.bf16.mxu0 0
    %2737 = vmatpush1.bf16.msra.mxu0 0
    %2738 = vmatprep.subr.bf16.mxu0 0
    %2739 = vmatpush1.bf16.msra.mxu0 0
    %2740 = vmatprep.subr.bf16.mxu0 0
    %2741 = vmatpush1.bf16.msra.mxu0 0
    %2742 = vmatprep.subr.bf16.mxu0 0
    %2743 = vmatpush1.bf16.msra.mxu0 0
    %2744 = vmatprep.subr.bf16.mxu0 0
    %2745 = vmatpush1.bf16.msra.mxu0 0
    %2746 = vmatprep.subr.bf16.mxu0 0
    %2747 = vmatpush1.bf16.msra.mxu0 0
    %2748 = vmatprep.subr.bf16.mxu0 0
    %2749 = vmatpush1.bf16.msra.mxu0 0
    %2750 = vmatprep.subr.bf16.mxu0 0
    %2751 = vmatpush1.bf16.msra.mxu0 0
    %2752 = vmatprep.subr.bf16.mxu0 0
    %2753 = vmatpush1.bf16.msra.mxu0 0
    %2754 = vmatprep.subr.bf16.mxu0 0
    %2755 = vmatpush1.bf16.msra.mxu0 0
    %2756 = vmatprep.subr.bf16.mxu0 0
    %2757 = vmatpush1.bf16.msra.mxu0 0
    %2758 = vmatprep.subr.bf16.mxu0 0
    %2759 = vmatpush1.bf16.msra.mxu0 0
    %2760 = vmatprep.mubr.bf16.mxu0 0
    %2761 = vmatmul.mubr.bf16.gmra.mrb[0].mxu0 %v2723
    %v2762 = vpop.f32.mrb[0].mxu0
    %v2763 = vadd.f32 0.0, %v2762
    %v2764 = vpop.f32.mrb[0].mxu0
    %v2765 = vpop.f32.mrb[0].mxu0
    %v2766 = vadd.f32 0.0, %v2765
    %v2767 = vpop.f32.mrb[0].mxu0
    %2768 = vmatprep.mubr.bf16.mxu0 0
    %2769 = vmatmul.mubr.bf16.gmra.mrb[0].mxu0 %v2726
    %v2770 = vpop.f32.mrb[0].mxu0
    %v2771 = vadd.f32 0.0, %v2770
    %v2772 = vpop.f32.mrb[0].mxu0
    %v2773 = vpop.f32.mrb[0].mxu0
    %v2774 = vadd.f32 0.0, %v2773
    %v2775 = vpop.f32.mrb[0].mxu0
    %2776 = vdwg.mxu0
    %v2777 = vadd.f32 %v2562, %v2629
    %v2778 = vadd.f32 %v2777, %v2696
    %v2779 = vadd.f32 %v2778, %v2763
    %v2780 = vadd.f32 %v2565, %v2632
    %v2781 = vadd.f32 %v2780, %v2699
    %v2782 = vadd.f32 %v2781, %v2766
    %v2783 = vadd.f32 %v2570, %v2637
    %v2784 = vadd.f32 %v2783, %v2704
    %v2785 = vadd.f32 %v2784, %v2771
    %v2786 = vadd.f32 %v2573, %v2640
    %v2787 = vadd.f32 %v2786, %v2707
    %v2788 = vadd.f32 %v2787, %v2774
    %v2789 = vadd.f32 %v74, %v2779
    %v2790 = vadd.f32 %v75, %v2782
    %v2791 = vadd.f32 %v76, %v2785
    %v2792 = vadd.f32 %v77, %v2788
    %s2793 = scalar_lea.vmem %s7, %s69
    %v2794 = vld [vmem:[%s2793] sm:$0x1]
    %v2796 = vlaneseq
    %v2797 = vshrl.u32 %v2796, 7
    %v2798 = vsub.s32 0, %v2797
    %v2799 = vrot.slane %v2794, %v2798
    %v2801 = vadd.f32 %v2789, %v2799
    %v2802 = vadd.f32 %v2790, %v2799
    %v2803 = vadd.f32 %v2791, %v2799
    %v2804 = vadd.f32 %v2792, %v2799
    %s2805 = scalar_lea.vmem %s8, %s69
    %v2806 = vld [vmem:[%s2805] sm:$0x1]
    %s2807 = scalar_lea.vmem %s9, %s69
    %v2808 = vld [vmem:[%s2807] sm:$0x1]
    %2809 = vadd.xlane.f32.xlu0 %v2801
    %v2810 = vpop.xlane.xlu0 %2809
    %2811 = vadd.xlane.f32.xlu0 %v2802
    %v2812 = vpop.xlane.xlu0 %2811
    %2813 = vadd.xlane.f32.xlu0 %v2803
    %v2814 = vpop.xlane.xlu0 %2813
    %2815 = vadd.xlane.f32.xlu0 %v2804
    %v2816 = vpop.xlane.xlu0 %2815
    %v2817 = vmul.f32 %v2810, %v90
    %v2818 = vmul.f32 %v2812, %v90
    %v2819 = vmul.f32 %v2814, %v90
    %v2820 = vmul.f32 %v2816, %v90
    %v2821 = vsub.f32 %v2801, %v2817
    %v2822 = vsub.f32 %v2802, %v2818
    %v2823 = vsub.f32 %v2803, %v2819
    %v2824 = vsub.f32 %v2804, %v2820
    %v2825 = vmul.f32 %v2821, %v2821
    %v2826 = vmul.f32 %v2822, %v2822
    %v2827 = vmul.f32 %v2823, %v2823
    %v2828 = vmul.f32 %v2824, %v2824
    %2829 = vadd.xlane.f32.xlu0 %v2825
    %v2830 = vpop.xlane.xlu0 %2829
    %2831 = vadd.xlane.f32.xlu0 %v2826
    %v2832 = vpop.xlane.xlu0 %2831
    %2833 = vadd.xlane.f32.xlu0 %v2827
    %v2834 = vpop.xlane.xlu0 %2833
    %2835 = vadd.xlane.f32.xlu0 %v2828
    %v2836 = vpop.xlane.xlu0 %2835
    %v2837 = vmul.f32 %v2830, %v90
    %v2838 = vmul.f32 %v2832, %v90
    %v2839 = vmul.f32 %v2834, %v90
    %v2840 = vmul.f32 %v2836, %v90
    %v2841 = vadd.f32 %v2837, 1e-05
    %v2842 = vadd.f32 %v2838, 1e-05
    %v2843 = vadd.f32 %v2839, 1e-05
    %v2844 = vadd.f32 %v2840, 1e-05
    %v2845 = vrsqrt.pop %v2841
    %v2846 = vrsqrt.pop %v2842
    %v2847 = vrsqrt.pop %v2843
    %v2848 = vrsqrt.pop %v2844
    %v2849 = vmul.f32 %v2821, %v2845
    %v2850 = vmul.f32 %v2822, %v2846
    %v2851 = vmul.f32 %v2823, %v2847
    %v2852 = vmul.f32 %v2824, %v2848
    %v2854 = vlaneseq
    %v2855 = vshrl.u32 %v2854, 7
    %v2856 = vsub.s32 0, %v2855
    %v2857 = vrot.slane %v2806, %v2856
    %v2859 = vmul.f32 %v2849, %v2857
    %v2860 = vmul.f32 %v2850, %v2857
    %v2861 = vmul.f32 %v2851, %v2857
    %v2862 = vmul.f32 %v2852, %v2857
    %v2864 = vlaneseq
    %v2865 = vshrl.u32 %v2864, 7
    %v2866 = vsub.s32 0, %v2865
    %v2867 = vrot.slane %v2808, %v2866
    %v2869 = vadd.f32 %v2859, %v2867
    %v2870 = vadd.f32 %v2860, %v2867
    %v2871 = vadd.f32 %v2861, %v2867
    %v2872 = vadd.f32 %v2862, %v2867
    %v2873 = vpack.c.bf16 %v2870, %v2869
    %v2874 = vpack.c.bf16 %v2872, %v2871
    %s2875 = smul.u32 %s69, 32
    %s2876 = smul.addr %s2875, 4
    %s2877 = scalar_lea.vmem %s10, %s2876
    %v2878 = vld [vmem:[%s2877] sm:$0xff]
    %v2879 = vld [vmem:[%s2877 + $0x8] sm:$0xff]
    %v2880 = vld [vmem:[%s2877 + $0x10] sm:$0xff]
    %v2881 = vld [vmem:[%s2877 + $0x18] sm:$0xff]
    %v2882 = vld [vmem:[%s2877 + $0x20] sm:$0xff]
    %v2883 = vld [vmem:[%s2877 + $0x28] sm:$0xff]
    %v2884 = vld [vmem:[%s2877 + $0x30] sm:$0xff]
    %v2885 = vld [vmem:[%s2877 + $0x38] sm:$0xff]
    %v2886 = vld [vmem:[%s2877 + $0x40] sm:$0xff]
    %v2887 = vld [vmem:[%s2877 + $0x48] sm:$0xff]
    %v2888 = vld [vmem:[%s2877 + $0x50] sm:$0xff]
    %v2889 = vld [vmem:[%s2877 + $0x58] sm:$0xff]
    %v2890 = vld [vmem:[%s2877 + $0x60] sm:$0xff]
    %v2891 = vld [vmem:[%s2877 + $0x68] sm:$0xff]
    %v2892 = vld [vmem:[%s2877 + $0x70] sm:$0xff]
    %v2893 = vld [vmem:[%s2877 + $0x78] sm:$0xff]
    %s2894 = smul.u32 %s69, 2
    %s2895 = scalar_lea.vmem %s11, %s2894
    %v2896 = vld [vmem:[%s2895] sm:$0x3]
    %v2898 = vlaneseq
    %v2899 = vshrl.u32 %v2898, 7
    %v2900 = vsub.s32 0, %v2899
    %v2901 = vrot.slane %v2896, %v2900
    %v2902 = vlaneseq
    %v2903 = vshrl.u32 %v2902, 7
    %v2904 = vsub.s32 1, %v2903
    %v2905 = vrot.slane %v2896, %v2904
    %v2924 = vunpack.c.l.b16 %v2878
    %v2925 = vunpack.c.h.b16 %v2878
    %v2926 = vunpack.c.l.b16 %v2879
    %v2927 = vunpack.c.h.b16 %v2879
    %v2928 = vunpack.c.l.b16 %v2880
    %v2929 = vunpack.c.h.b16 %v2880
    %v2930 = vunpack.c.l.b16 %v2881
    %v2931 = vunpack.c.h.b16 %v2881
    %v2932 = vunpack.c.l.b16 %v2882
    %v2933 = vunpack.c.h.b16 %v2882
    %v2934 = vunpack.c.l.b16 %v2883
    %v2935 = vunpack.c.h.b16 %v2883
    %v2936 = vunpack.c.l.b16 %v2884
    %v2937 = vunpack.c.h.b16 %v2884
    %v2938 = vunpack.c.l.b16 %v2885
    %v2939 = vunpack.c.h.b16 %v2885
    %v2940 = vunpack.c.l.b16 %v2886
    %v2941 = vunpack.c.h.b16 %v2886
    %v2942 = vunpack.c.l.b16 %v2887
    %v2943 = vunpack.c.h.b16 %v2887
    %v2944 = vunpack.c.l.b16 %v2888
    %v2945 = vunpack.c.h.b16 %v2888
    %v2946 = vunpack.c.l.b16 %v2889
    %v2947 = vunpack.c.h.b16 %v2889
    %v2948 = vunpack.c.l.b16 %v2890
    %v2949 = vunpack.c.h.b16 %v2890
    %v2950 = vunpack.c.l.b16 %v2891
    %v2951 = vunpack.c.h.b16 %v2891
    %v2952 = vunpack.c.l.b16 %v2892
    %v2953 = vunpack.c.h.b16 %v2892
    %v2954 = vunpack.c.l.b16 %v2893
    %v2955 = vunpack.c.h.b16 %v2893
    %v2956 = vpack.c.b16 %v2926, %v2924
    %v2957 = vpack.c.b16 %v2927, %v2925
    %v2958 = vpack.c.b16 %v2930, %v2928
    %v2959 = vpack.c.b16 %v2931, %v2929
    %v2960 = vpack.c.b16 %v2934, %v2932
    %v2961 = vpack.c.b16 %v2935, %v2933
    %v2962 = vpack.c.b16 %v2938, %v2936
    %v2963 = vpack.c.b16 %v2939, %v2937
    %v2964 = vpack.c.b16 %v2942, %v2940
    %v2965 = vpack.c.b16 %v2943, %v2941
    %v2966 = vpack.c.b16 %v2946, %v2944
    %v2967 = vpack.c.b16 %v2947, %v2945
    %v2968 = vpack.c.b16 %v2950, %v2948
    %v2969 = vpack.c.b16 %v2951, %v2949
    %v2970 = vpack.c.b16 %v2954, %v2952
    %v2971 = vpack.c.b16 %v2955, %v2953
    %2988 = vmatprep.subr.bf16.mxu0 %v2957
    %2989 = vmatpush1.bf16.msra.mxu0 %v2956
    %2990 = vmatprep.subr.bf16.mxu0 %v2959
    %2991 = vmatpush1.bf16.msra.mxu0 %v2958
    %2992 = vmatprep.subr.bf16.mxu0 %v2961
    %2993 = vmatpush1.bf16.msra.mxu0 %v2960
    %2994 = vmatprep.subr.bf16.mxu0 %v2963
    %2995 = vmatpush1.bf16.msra.mxu0 %v2962
    %2996 = vmatprep.subr.bf16.mxu0 %v2965
    %2997 = vmatpush1.bf16.msra.mxu0 %v2964
    %2998 = vmatprep.subr.bf16.mxu0 %v2967
    %2999 = vmatpush1.bf16.msra.mxu0 %v2966
    %3000 = vmatprep.subr.bf16.mxu0 %v2969
    %3001 = vmatpush1.bf16.msra.mxu0 %v2968
    %3002 = vmatprep.subr.bf16.mxu0 %v2971
    %3003 = vmatpush1.bf16.msra.mxu0 %v2970
    %3004 = vmatprep.subr.bf16.mxu0 0
    %3005 = vmatpush1.bf16.msra.mxu0 0
    %3006 = vmatprep.subr.bf16.mxu0 0
    %3007 = vmatpush1.bf16.msra.mxu0 0
    %3008 = vmatprep.subr.bf16.mxu0 0
    %3009 = vmatpush1.bf16.msra.mxu0 0
    %3010 = vmatprep.subr.bf16.mxu0 0
    %3011 = vmatpush1.bf16.msra.mxu0 0
    %3012 = vmatprep.subr.bf16.mxu0 0
    %3013 = vmatpush1.bf16.msra.mxu0 0
    %3014 = vmatprep.subr.bf16.mxu0 0
    %3015 = vmatpush1.bf16.msra.mxu0 0
    %3016 = vmatprep.subr.bf16.mxu0 0
    %3017 = vmatpush1.bf16.msra.mxu0 0
    %3018 = vmatprep.subr.bf16.mxu0 0
    %3019 = vmatpush1.bf16.msra.mxu0 0
    %3020 = vmatprep.mubr.bf16.mxu0 0
    %3021 = vmatmul.mubr.bf16.gmra.mrb[0].mxu0 %v2873
    %v3022 = vpop.f32.mrb[0].mxu0
    %v3023 = vadd.f32 %v2901, %v3022
    %v3024 = vpop.f32.mrb[0].mxu0
    %v3025 = vadd.f32 %v2905, %v3024
    %v3026 = vpop.f32.mrb[0].mxu0
    %v3027 = vadd.f32 %v2901, %v3026
    %v3028 = vpop.f32.mrb[0].mxu0
    %v3029 = vadd.f32 %v2905, %v3028
    %3030 = vmatprep.mubr.bf16.mxu0 0
    %3031 = vmatmul.mubr.bf16.gmra.mrb[0].mxu0 %v2874
    %v3032 = vpop.f32.mrb[0].mxu0
    %v3033 = vadd.f32 %v2901, %v3032
    %v3034 = vpop.f32.mrb[0].mxu0
    %v3035 = vadd.f32 %v2905, %v3034
    %v3036 = vpop.f32.mrb[0].mxu0
    %v3037 = vadd.f32 %v2901, %v3036
    %v3038 = vpop.f32.mrb[0].mxu0
    %v3039 = vadd.f32 %v2905, %v3038
    %3040 = vdwg.mxu0
    %v3041 = vmul.f32 %v3023, 0.5
    %v3042 = vmul.f32 %v3025, 0.5
    %v3043 = vmul.f32 %v3027, 0.5
    %v3044 = vmul.f32 %v3029, 0.5
    %v3045 = vmul.f32 %v3033, 0.5
    %v3046 = vmul.f32 %v3035, 0.5
    %v3047 = vmul.f32 %v3037, 0.5
    %v3048 = vmul.f32 %v3039, 0.5
    %v3049 = vmul.f32 %v3023, 0.70710677
    %v3050 = vmul.f32 %v3025, 0.70710677
    %v3051 = vmul.f32 %v3027, 0.70710677
    %v3052 = vmul.f32 %v3029, 0.70710677
    %v3053 = vmul.f32 %v3033, 0.70710677
    %v3054 = vmul.f32 %v3035, 0.70710677
    %v3055 = vmul.f32 %v3037, 0.70710677
    %v3056 = vmul.f32 %v3039, 0.70710677
    %v3057 = verf.f32.pop %v3049
    %v3058 = verf.f32.pop %v3050
    %v3059 = verf.f32.pop %v3051
    %v3060 = verf.f32.pop %v3052
    %v3061 = verf.f32.pop %v3053
    %v3062 = verf.f32.pop %v3054
    %v3063 = verf.f32.pop %v3055
    %v3064 = verf.f32.pop %v3056
    %v3065 = vadd.f32 %v3057, 1.0
    %v3066 = vadd.f32 %v3058, 1.0
    %v3067 = vadd.f32 %v3059, 1.0
    %v3068 = vadd.f32 %v3060, 1.0
    %v3069 = vadd.f32 %v3061, 1.0
    %v3070 = vadd.f32 %v3062, 1.0
    %v3071 = vadd.f32 %v3063, 1.0
    %v3072 = vadd.f32 %v3064, 1.0
    %v3073 = vmul.f32 %v3041, %v3065
    %v3074 = vmul.f32 %v3042, %v3066
    %v3075 = vmul.f32 %v3043, %v3067
    %v3076 = vmul.f32 %v3044, %v3068
    %v3077 = vmul.f32 %v3045, %v3069
    %v3078 = vmul.f32 %v3046, %v3070
    %v3079 = vmul.f32 %v3047, %v3071
    %v3080 = vmul.f32 %v3048, %v3072
    %v3081 = vpack.c.bf16 %v3075, %v3073
    %v3082 = vpack.c.bf16 %v3076, %v3074
    %v3083 = vpack.c.bf16 %v3079, %v3077
    %v3084 = vpack.c.bf16 %v3080, %v3078
    %s3085 = smul.addr %s2875, 4
    %s3086 = scalar_lea.vmem %s12, %s3085
    %v3087 = vld [vmem:[%s3086] sm:$0xf]
    %v3088 = vld [vmem:[%s3086 + $0x4] sm:$0xf]
    %v3089 = vld [vmem:[%s3086 + $0x8] sm:$0xf]
    %v3090 = vld [vmem:[%s3086 + $0xc] sm:$0xf]
    %v3091 = vld [vmem:[%s3086 + $0x10] sm:$0xf]
    %v3092 = vld [vmem:[%s3086 + $0x14] sm:$0xf]
    %v3093 = vld [vmem:[%s3086 + $0x18] sm:$0xf]
    %v3094 = vld [vmem:[%s3086 + $0x1c] sm:$0xf]
    %v3095 = vld [vmem:[%s3086 + $0x20] sm:$0xf]
    %v3096 = vld [vmem:[%s3086 + $0x24] sm:$0xf]
    %v3097 = vld [vmem:[%s3086 + $0x28] sm:$0xf]
    %v3098 = vld [vmem:[%s3086 + $0x2c] sm:$0xf]
    %v3099 = vld [vmem:[%s3086 + $0x30] sm:$0xf]
    %v3100 = vld [vmem:[%s3086 + $0x34] sm:$0xf]
    %v3101 = vld [vmem:[%s3086 + $0x38] sm:$0xf]
    %v3102 = vld [vmem:[%s3086 + $0x3c] sm:$0xf]
    %v3103 = vld [vmem:[%s3086 + $0x40] sm:$0xf]
    %v3104 = vld [vmem:[%s3086 + $0x44] sm:$0xf]
    %v3105 = vld [vmem:[%s3086 + $0x48] sm:$0xf]
    %v3106 = vld [vmem:[%s3086 + $0x4c] sm:$0xf]
    %v3107 = vld [vmem:[%s3086 + $0x50] sm:$0xf]
    %v3108 = vld [vmem:[%s3086 + $0x54] sm:$0xf]
    %v3109 = vld [vmem:[%s3086 + $0x58] sm:$0xf]
    %v3110 = vld [vmem:[%s3086 + $0x5c] sm:$0xf]
    %v3111 = vld [vmem:[%s3086 + $0x60] sm:$0xf]
    %v3112 = vld [vmem:[%s3086 + $0x64] sm:$0xf]
    %v3113 = vld [vmem:[%s3086 + $0x68] sm:$0xf]
    %v3114 = vld [vmem:[%s3086 + $0x6c] sm:$0xf]
    %v3115 = vld [vmem:[%s3086 + $0x70] sm:$0xf]
    %v3116 = vld [vmem:[%s3086 + $0x74] sm:$0xf]
    %v3117 = vld [vmem:[%s3086 + $0x78] sm:$0xf]
    %v3118 = vld [vmem:[%s3086 + $0x7c] sm:$0xf]
    %s3119 = scalar_lea.vmem %s13, %s69
    %v3120 = vld [vmem:[%s3119] sm:$0x1]
    %v3122 = vlaneseq
    %v3123 = vshrl.u32 %v3122, 7
    %v3124 = vsub.s32 0, %v3123
    %v3125 = vrot.slane %v3120, %v3124
    %v3159 = vunpack.c.l.b16 %v3087
    %v3160 = vunpack.c.l.b16 %v3088
    %v3161 = vunpack.c.l.b16 %v3089
    %v3162 = vunpack.c.l.b16 %v3090
    %v3163 = vunpack.c.l.b16 %v3091
    %v3164 = vunpack.c.l.b16 %v3092
    %v3165 = vunpack.c.l.b16 %v3093
    %v3166 = vunpack.c.l.b16 %v3094
    %v3167 = vunpack.c.l.b16 %v3095
    %v3168 = vunpack.c.l.b16 %v3096
    %v3169 = vunpack.c.l.b16 %v3097
    %v3170 = vunpack.c.l.b16 %v3098
    %v3171 = vunpack.c.l.b16 %v3099
    %v3172 = vunpack.c.l.b16 %v3100
    %v3173 = vunpack.c.l.b16 %v3101
    %v3174 = vunpack.c.l.b16 %v3102
    %v3175 = vunpack.c.l.b16 %v3103
    %v3176 = vunpack.c.l.b16 %v3104
    %v3177 = vunpack.c.l.b16 %v3105
    %v3178 = vunpack.c.l.b16 %v3106
    %v3179 = vunpack.c.l.b16 %v3107
    %v3180 = vunpack.c.l.b16 %v3108
    %v3181 = vunpack.c.l.b16 %v3109
    %v3182 = vunpack.c.l.b16 %v3110
    %v3183 = vunpack.c.l.b16 %v3111
    %v3184 = vunpack.c.l.b16 %v3112
    %v3185 = vunpack.c.l.b16 %v3113
    %v3186 = vunpack.c.l.b16 %v3114
    %v3187 = vunpack.c.l.b16 %v3115
    %v3188 = vunpack.c.l.b16 %v3116
    %v3189 = vunpack.c.l.b16 %v3117
    %v3190 = vunpack.c.l.b16 %v3118
    %v3191 = vpack.c.b16 %v3160, %v3159
    %v3192 = vpack.c.b16 %v3162, %v3161
    %v3193 = vpack.c.b16 %v3164, %v3163
    %v3194 = vpack.c.b16 %v3166, %v3165
    %v3195 = vpack.c.b16 %v3168, %v3167
    %v3196 = vpack.c.b16 %v3170, %v3169
    %v3197 = vpack.c.b16 %v3172, %v3171
    %v3198 = vpack.c.b16 %v3174, %v3173
    %v3199 = vpack.c.b16 %v3176, %v3175
    %v3200 = vpack.c.b16 %v3178, %v3177
    %v3201 = vpack.c.b16 %v3180, %v3179
    %v3202 = vpack.c.b16 %v3182, %v3181
    %v3203 = vpack.c.b16 %v3184, %v3183
    %v3204 = vpack.c.b16 %v3186, %v3185
    %v3205 = vpack.c.b16 %v3188, %v3187
    %v3206 = vpack.c.b16 %v3190, %v3189
    %3223 = vmatprep.subr.bf16.mxu0 0
    %3224 = vmatpush1.bf16.msra.mxu0 %v3191
    %3225 = vmatprep.subr.bf16.mxu0 0
    %3226 = vmatpush1.bf16.msra.mxu0 %v3192
    %3227 = vmatprep.subr.bf16.mxu0 0
    %3228 = vmatpush1.bf16.msra.mxu0 %v3193
    %3229 = vmatprep.subr.bf16.mxu0 0
    %3230 = vmatpush1.bf16.msra.mxu0 %v3194
    %3231 = vmatprep.subr.bf16.mxu0 0
    %3232 = vmatpush1.bf16.msra.mxu0 %v3195
    %3233 = vmatprep.subr.bf16.mxu0 0
    %3234 = vmatpush1.bf16.msra.mxu0 %v3196
    %3235 = vmatprep.subr.bf16.mxu0 0
    %3236 = vmatpush1.bf16.msra.mxu0 %v3197
    %3237 = vmatprep.subr.bf16.mxu0 0
    %3238 = vmatpush1.bf16.msra.mxu0 %v3198
    %3239 = vmatprep.subr.bf16.mxu0 0
    %3240 = vmatpush1.bf16.msra.mxu0 %v3199
    %3241 = vmatprep.subr.bf16.mxu0 0
    %3242 = vmatpush1.bf16.msra.mxu0 %v3200
    %3243 = vmatprep.subr.bf16.mxu0 0
    %3244 = vmatpush1.bf16.msra.mxu0 %v3201
    %3245 = vmatprep.subr.bf16.mxu0 0
    %3246 = vmatpush1.bf16.msra.mxu0 %v3202
    %3247 = vmatprep.subr.bf16.mxu0 0
    %3248 = vmatpush1.bf16.msra.mxu0 %v3203
    %3249 = vmatprep.subr.bf16.mxu0 0
    %3250 = vmatpush1.bf16.msra.mxu0 %v3204
    %3251 = vmatprep.subr.bf16.mxu0 0
    %3252 = vmatpush1.bf16.msra.mxu0 %v3205
    %3253 = vmatprep.subr.bf16.mxu0 0
    %3254 = vmatpush1.bf16.msra.mxu0 %v3206
    %3255 = vmatprep.mubr.bf16.mxu0 %v3082
    %3256 = vmatmul.mubr.bf16.gmra.mrb[0].mxu0 %v3081
    %v3257 = vpop.f32.mrb[0].mxu0
    %v3258 = vadd.f32 %v3125, %v3257
    %v3259 = vpop.f32.mrb[0].mxu0
    %v3260 = vpop.f32.mrb[0].mxu0
    %v3261 = vadd.f32 %v3125, %v3260
    %v3262 = vpop.f32.mrb[0].mxu0
    %3263 = vmatprep.mubr.bf16.mxu0 %v3084
    %3264 = vmatmul.mubr.bf16.gmra.mrb[0].mxu0 %v3083
    %v3265 = vpop.f32.mrb[0].mxu0
    %v3266 = vadd.f32 %v3125, %v3265
    %v3267 = vpop.f32.mrb[0].mxu0
    %v3268 = vpop.f32.mrb[0].mxu0
    %v3269 = vadd.f32 %v3125, %v3268
    %v3270 = vpop.f32.mrb[0].mxu0
    %3271 = vdwg.mxu0
    %v3272 = vadd.f32 %v2801, %v3258
    %v3273 = vadd.f32 %v2802, %v3261
    %v3274 = vadd.f32 %v2803, %v3266
    %v3275 = vadd.f32 %v2804, %v3269
    %3276 = vst [vmem:[%s14] sm:$0xff] %v3272
    %3277 = vst [vmem:[%s14 + $0x8] sm:$0xff] %v3273
    %3278 = vst [vmem:[%s14 + $0x10] sm:$0xff] %v3274
    %3279 = vst [vmem:[%s14 + $0x18] sm:$0xff] %v3275
  $region66: #{tmss_forward.4} parent=0 // loop_footer
    %s73 = sadd.s32 1, %s69
  $region67: #{tmss_forward.4} parent=0 // loop_footer_branch
    %68 = sbr.rel target = $region63
  $region68: #{tmss_forward.4} parent=0 // loop_exit
    _
  // Predicated region
  $region69: #{tmss_forward.4} parent=0 // pred_check
    _
  $region70: #{tmss_forward.4} parent=0 // pred_check_branch
    %3281 = sbr.rel (0) target = $region72
  $region71: #{tmss_forward.4} parent=0 // pred_region
    _
  $region72: #{tmss_forward.4} parent=0 // pred_fallthru
    _
  // Predicated region
  $region73: #{tmss_forward.4} parent=0 // pred_check
    _
  $region74: #{tmss_forward.4} parent=0 // pred_check_branch
    %3283 = sbr.rel (0) target = $region76
  $region75: #{tmss_forward.4} parent=0 // pred_region
    _
  $region76: #{tmss_forward.4} parent=0 // pred_fallthru
    _

</llo_original>
